<compile_context>
chip_gen: v6e
topology: v6e:2x2x1
jax: 0.10.0
libtpu: 0.0.40
codegen_flags: <defaults>
</compile_context>

<pallas_src>
import math

import jax
import jax.numpy as jnp
import numpy as np
from jax.experimental import pallas as pl
from jax.experimental.pallas import tpu as pltpu


# path i -> (query modality, key/value modality); modality ids: 0=text, 1=audio, 2=visual
_Q_MOD = (0, 0, 1, 1, 2, 2)
_KV_MOD = (1, 2, 0, 2, 0, 1)

PATH_FLOPS = {0: 1.0, 1: 1.1, 2: 1.0, 3: 1.2, 4: 1.1, 5: 1.0}


def compute_flops(mask):
    # Static Python lookup (no tensor compute) — kept host-side.
    if len(mask) != 6:
        raise ValueError('Mask must be a list of 6 binary values.')
    return sum(PATH_FLOPS[i] for i in range(6) if mask[i])


def _layernorm(x, gamma, beta, eps=1e-5):
    mu = jnp.mean(x, axis=-1, keepdims=True)
    var = jnp.mean((x - mu) ** 2, axis=-1, keepdims=True)
    return (x - mu) * jax.lax.rsqrt(var + eps) * gamma + beta


# ------------------ kernel 1: modality projections + shared QKV ------------------

def _proj_qkv_kernel(t_ref, a_ref, v_ref,
                     tw1, tb1, tw2, tb2,
                     aw1, ab1, aw2, ab2,
                     vw1, vb1, vw2, vb2,
                     win_ref, bin_ref,
                     feat_ref, qkv_ref):
    """Three (Linear-ReLU-Linear) projections + one shared QKV projection per modality."""

    def two_layer(x_ref, w1, b1, w2, b2):
        h = jnp.maximum(
            jnp.dot(x_ref[...], w1[...], preferred_element_type=jnp.float32) + b1[...],
            0.0)
        # Dropout between ReLU and the second Linear is identity at inference.
        return jnp.dot(h, w2[...], preferred_element_type=jnp.float32) + b2[...]

    # Stack the three modalities along rows so the QKV projection runs as a single
    # M = 3*B*T matmul (each modality's Q/K/V is computed exactly once).
    f_all = jnp.concatenate(
        [two_layer(t_ref, tw1, tb1, tw2, tb2),
         two_layer(a_ref, aw1, ab1, aw2, ab2),
         two_layer(v_ref, vw1, vb1, vw2, vb2)], axis=0)          # (3*N, D)
    feat_ref[...] = f_all
    qkv_ref[...] = (jnp.dot(f_all, win_ref[...], preferred_element_type=jnp.float32)
                    + bin_ref[...])                               # (3*N, 3D)


def project_and_qkv(params, t2d, a2d, v2d):
    # TODO(synk): tile over rows (grid=(cdiv(3*N, 256),)) once B*T grows enough to
    # threaten the scoped VMEM limit; un-tiled is fine at B*T=16.
    N = t2d.shape[0]
    D = params['block']['wo'].shape[0]
    vmem = pl.BlockSpec(memory_space=pltpu.MemorySpace.VMEM)
    args = (t2d, a2d, v2d,
            params['text_w1'], params['text_b1'], params['text_w2'], params['text_b2'],
            params['audio_w1'], params['audio_b1'], params['audio_w2'], params['audio_b2'],
            params['vis_w1'], params['vis_b1'], params['vis_w2'], params['vis_b2'],
            params['block']['w_in'], params['block']['b_in'])
    feat, qkv = pl.pallas_call(
        _proj_qkv_kernel,
        out_shape=(jax.ShapeDtypeStruct((3 * N, D), jnp.float32),
                   jax.ShapeDtypeStruct((3 * N, 3 * D), jnp.float32)),
        in_specs=[vmem] * len(args),
        out_specs=(vmem, vmem),
    )(*args)
    return feat, qkv


# ------------- kernel 2: all cross-modal paths of the shared block, fused -------------

def _xmodal_block_kernel(qi_ref, ki_ref, featq_ref, qh_ref, kh_ref, vh_ref,
                         woh_ref, bo_ref, g1_ref, be1_ref,
                         wf1_ref, bf1_ref, wf2_ref, bf2_ref,
                         g2_ref, be2_ref, o_ref):
    """SharedCrossModalTransformerBlock(q, kv) + mean over the query axis.

    Grid = (path, batch).  QKV projections are precomputed and arrive head-major
    (nh, T, dh), so attention is purely head-batched matmuls (no per-head loop,
    no lane slicing, no concatenate in the hot kernel).
    """
    del qi_ref, ki_ref  # only used by the index_maps

    q = featq_ref[0, 0]        # (Tq, D)  residual input (post-projection features)
    qh = qh_ref[0, 0]          # (nh, Tq, dh)
    kh = kh_ref[0, 0]          # (nh, Tk, dh)
    vh = vh_ref[0, 0]          # (nh, Tk, dh)
    dh = qh.shape[-1]
    scale = 1.0 / math.sqrt(dh)

    # scaled dot-product attention, batched over heads
    s = jax.lax.dot_general(qh, kh, (((2,), (2,)), ((0,), (0,))),
                            preferred_element_type=jnp.float32) * scale   # (nh, Tq, Tk)
    s = s - jnp.max(s, axis=-1, keepdims=True)
    p = jnp.exp(s)
    p = p * pl.reciprocal(jnp.sum(p, axis=-1, keepdims=True), approx=True)
    ctx = jax.lax.dot_general(p, vh, (((2,), (1,)), ((0,), (0,))),
                              preferred_element_type=jnp.float32)          # (nh, Tq, dh)

    # Output projection with per-head row blocks of Wo, summed over heads.
    # Equivalent to concat(ctx_heads) @ Wo, without the lane concatenate.
    attn = jax.lax.dot_general(ctx, woh_ref[...], (((2,), (1,)), ((0,), (0,))),
                               preferred_element_type=jnp.float32)         # (nh, Tq, D)
    attn_out = jnp.sum(attn, axis=0) + bo_ref[...]                         # (Tq, D)

    x = _layernorm(q + attn_out, g1_ref[...], be1_ref[...])
    hid = jnp.maximum(
        jnp.dot(x, wf1_ref[...], preferred_element_type=jnp.float32) + bf1_ref[...], 0.0)
    ffn = jnp.dot(hid, wf2_ref[...], preferred_element_type=jnp.float32) + bf2_ref[...]
    y = _layernorm(x + ffn, g2_ref[...], be2_ref[...])

    # .mean(1) of the PyTorch forward, fused into the kernel.
    o_ref[0, 0] = jnp.mean(y, axis=0, keepdims=True)                       # (1, D)


def fused_block_paths(feat4, qh_all, kh_all, vh_all, woh, blk, q_idx, kv_idx):
    """Run every active (q-modality, kv-modality) path in one pallas_call.

    feat4:   (3, B, T, D)       projected modality features
    *_all:   (3, B, nh, T, dh)  head-major Q/K/V projections per modality
    woh:     (nh, dh, D)        per-head row blocks of the attention out-projection
    Returns (P, B, D) per-path means.
    """
    _, B, T, D = feat4.shape
    nh, dh = qh_all.shape[2], qh_all.shape[4]
    P = q_idx.shape[0]

    weights = (woh, blk['bo'], blk['g1'], blk['be1'],
               blk['wf1'], blk['bf1'], blk['wf2'], blk['bf2'],
               blk['g2'], blk['be2'])
    # Constant index_maps keep the block weights VMEM-resident across the whole grid
    # (loaded once, not re-DMA'd per path like the previous 6-call version).
    w_specs = [pl.BlockSpec(w.shape, lambda p, b, qi, ki, _nd=w.ndim: (0,) * _nd)
               for w in weights]
    head_block = (1, 1, nh, T, dh)

    grid_spec = pltpu.PrefetchScalarGridSpec(
        num_scalar_prefetch=2,                 # q_idx, kv_idx live in SMEM
        grid=(P, B),
        in_specs=[pl.BlockSpec((1, 1, T, D), lambda p, b, qi, ki: (qi[p], b, 0, 0)),
                  pl.BlockSpec(head_block, lambda p, b, qi, ki: (qi[p], b, 0, 0, 0)),
                  pl.BlockSpec(head_block, lambda p, b, qi, ki: (ki[p], b, 0, 0, 0)),
                  pl.BlockSpec(head_block, lambda p, b, qi, ki: (ki[p], b, 0, 0, 0))]
                 + w_specs,
        out_specs=pl.BlockSpec((1, 1, 1, D), lambda p, b, qi, ki: (p, b, 0, 0)),
    )
    out = pl.pallas_call(
        _xmodal_block_kernel,
        out_shape=jax.ShapeDtypeStruct((P, B, 1, D), jnp.float32),
        grid_spec=grid_spec,
        compiler_params=pltpu.CompilerParams(
            dimension_semantics=("parallel", "parallel")),   # lets v7x split across its 2 TCs
    )(q_idx, kv_idx, feat4, qh_all, kh_all, vh_all, *weights)
    return out[:, :, 0, :]


# ------------------ kernel 3: mean over paths + classifier ------------------

def _mean_classifier_kernel(paths_ref, w1_ref, b1_ref, w2_ref, b2_ref,
                            fused_ref, logits_ref):
    fused = jnp.mean(paths_ref[...], axis=0)                  # mean over active paths -> (B, D)
    fused_ref[...] = fused
    h = jnp.maximum(
        jnp.dot(fused, w1_ref[...], preferred_element_type=jnp.float32) + b1_ref[...], 0.0)
    # Dropout before the last Linear is identity at inference.
    logits_ref[...] = (jnp.dot(h, w2_ref[...], preferred_element_type=jnp.float32)
                       + b2_ref[...])


def classify(path_means, w1, b1, w2, b2):
    _, B, D = path_means.shape
    n_cls = w2.shape[1]
    vmem = pl.BlockSpec(memory_space=pltpu.MemorySpace.VMEM)
    fused, logits = pl.pallas_call(
        _mean_classifier_kernel,
        out_shape=(jax.ShapeDtypeStruct((B, D), jnp.float32),
                   jax.ShapeDtypeStruct((B, n_cls), jnp.float32)),
        in_specs=[vmem] * 5,
        out_specs=(vmem, vmem),
    )(path_means, w1, b1, w2, b2)
    return logits, fused


# --------------------------- parameters & forward ---------------------------

def init_linear(key, din, dout):
    kw, kb = jax.random.split(key)
    bound = 1.0 / math.sqrt(din)
    w = jax.random.uniform(kw, (din, dout), jnp.float32, -bound, bound)
    b = jax.random.uniform(kb, (1, dout), jnp.float32, -bound, bound)
    return w, b


def init_params(key, dim_text, dim_audio, dim_visual, dim_model):
    keys = jax.random.split(key, 12)
    p = {}
    # Projections (hidden widths 512 / 128 / 1024 are hard-coded in the PyTorch module).
    p['text_w1'], p['text_b1'] = init_linear(keys[0], dim_text, 512)
    p['text_w2'], p['text_b2'] = init_linear(keys[1], 512, dim_model)
    p['audio_w1'], p['audio_b1'] = init_linear(keys[2], dim_audio, 128)
    p['audio_w2'], p['audio_b2'] = init_linear(keys[3], 128, dim_model)
    p['vis_w1'], p['vis_b1'] = init_linear(keys[4], dim_visual, 1024)
    p['vis_w2'], p['vis_b2'] = init_linear(keys[5], 1024, dim_model)
    # Shared transformer block (MHA in_proj packed as [Wq|Wk|Wv], stored [in, out]).
    blk = {}
    blk['w_in'], blk['b_in'] = init_linear(keys[6], dim_model, 3 * dim_model)
    blk['wo'], blk['bo'] = init_linear(keys[7], dim_model, dim_model)
    blk['g1'] = jnp.ones((1, dim_model), jnp.float32)
    blk['be1'] = jnp.zeros((1, dim_model), jnp.float32)
    blk['wf1'], blk['bf1'] = init_linear(keys[8], dim_model, 4 * dim_model)
    blk['wf2'], blk['bf2'] = init_linear(keys[9], 4 * dim_model, dim_model)
    blk['g2'] = jnp.ones((1, dim_model), jnp.float32)
    blk['be2'] = jnp.zeros((1, dim_model), jnp.float32)
    p['block'] = blk
    # Classifier.
    p['cls_w1'], p['cls_b1'] = init_linear(keys[10], dim_model, 256)
    p['cls_w2'], p['cls_b2'] = init_linear(keys[11], 256, 7)
    return p


def cross_modal_supernet(params, text, audio, visual, mask=None,
                         return_flops=False, n_heads=4):
    if mask is None:
        mask = [1] * 6
    if len(mask) != 6:
        raise ValueError('Mask must be a list of 6 binary values.')
    active = [i for i in range(6) if mask[i]]
    if not active:
        raise ValueError('At least one cross-modal path must be active in the mask.')

    B, T, _ = text.shape
    # The fused (path, batch) grid stacks the three modalities, so they must share B and T
    # (true for MELD-style aligned inputs and for the reference usage here).
    assert audio.shape[:2] == (B, T) and visual.shape[:2] == (B, T)

    D = params['block']['wo'].shape[0]
    dh = D // n_heads

    # 1) modality projections + shared QKV projection, one pallas_call, each modality once.
    feat, qkv = project_and_qkv(params,
                                text.reshape(B * T, -1),
                                audio.reshape(B * T, -1),
                                visual.reshape(B * T, -1))
    feat4 = feat.reshape(3, B, T, D)
    # Head-major split done with cheap host-side XLA reshapes/transposes (~100 KB total),
    # so the hot attention kernel sees ready-to-use (nh, T, dh) blocks.
    qkvh = qkv.reshape(3, B, T, 3, n_heads, dh)
    qh_all = jnp.transpose(qkvh[:, :, :, 0], (0, 1, 3, 2, 4))   # (3, B, nh, T, dh)
    kh_all = jnp.transpose(qkvh[:, :, :, 1], (0, 1, 3, 2, 4))
    vh_all = jnp.transpose(qkvh[:, :, :, 2], (0, 1, 3, 2, 4))
    woh = params['block']['wo'].reshape(n_heads, dh, D)         # per-head rows of out-proj
    # TODO(synk): at larger dim_model/T, cast matmul operands to bf16 (f32 accumulation) for
    # v6e/v7x MXU throughput; kept f32 here to preserve the tight numerical check.

    # 2) every active cross-modal path in ONE pallas_call over a (path, batch) grid.
    q_idx = jnp.asarray([_Q_MOD[i] for i in active], dtype=jnp.int32)
    kv_idx = jnp.asarray([_KV_MOD[i] for i in active], dtype=jnp.int32)
    path_means = fused_block_paths(feat4, qh_all, kh_all, vh_all, woh,
                                   params['block'], q_idx, kv_idx)          # (P, B, D)

    # 3) mean over paths + classifier, one pallas_call.
    logits, fused = classify(path_means, params['cls_w1'], params['cls_b1'],
                             params['cls_w2'], params['cls_b2'])

    if return_flops:
        return logits, fused, compute_flops(mask)
    return logits, fused


# ------------------------------ pure-JAX reference ------------------------------

def ref_forward(params, text, audio, visual, mask, n_heads):
    def ln(x, g, b, eps=1e-5):
        mu = x.mean(-1, keepdims=True)
        var = ((x - mu) ** 2).mean(-1, keepdims=True)
        return (x - mu) / jnp.sqrt(var + eps) * g + b

    def proj(x, w1, b1, w2, b2):
        return jax.nn.relu(x @ w1 + b1[0]) @ w2 + b2[0]

    blk = params['block']
    D = params['cls_w1'].shape[0]
    dh = D // n_heads

    def block(q, kv):
        B, Tq, _ = q.shape
        Tk = kv.shape[1]
        qp = q @ blk['w_in'][:, :D] + blk['b_in'][0, :D]
        kp = kv @ blk['w_in'][:, D:2 * D] + blk['b_in'][0, D:2 * D]
        vp = kv @ blk['w_in'][:, 2 * D:] + blk['b_in'][0, 2 * D:]
        qh = qp.reshape(B, Tq, n_heads, dh)
        kh = kp.reshape(B, Tk, n_heads, dh)
        vh = vp.reshape(B, Tk, n_heads, dh)
        s = jnp.einsum('bqhd,bkhd->bhqk', qh, kh) / math.sqrt(dh)
        p = jax.nn.softmax(s, axis=-1)
        ctx = jnp.einsum('bhqk,bkhd->bqhd', p, vh).reshape(B, Tq, D)
        attn_out = ctx @ blk['wo'] + blk['bo'][0]
        x = ln(q + attn_out, blk['g1'][0], blk['be1'][0])
        hid = jax.nn.relu(x @ blk['wf1'] + blk['bf1'][0])
        ffn = hid @ blk['wf2'] + blk['bf2'][0]
        y = ln(x + ffn, blk['g2'][0], blk['be2'][0])
        return y.mean(axis=1)

    t = proj(text, params['text_w1'], params['text_b1'], params['text_w2'], params['text_b2'])
    a = proj(audio, params['audio_w1'], params['audio_b1'], params['audio_w2'], params['audio_b2'])
    v = proj(visual, params['vis_w1'], params['vis_b1'], params['vis_w2'], params['vis_b2'])
    pairs = [(t, a), (t, v), (a, t), (a, v), (v, t), (v, a)]
    fused_outputs = [block(qx, kvx) for m, (qx, kvx) in zip(mask, pairs) if m]
    fused = jnp.mean(jnp.stack(fused_outputs, axis=0), axis=0)
    logits = proj(fused, params['cls_w1'], params['cls_b1'], params['cls_w2'], params['cls_b2'])
    return logits, fused


# ----------------------------------- main -----------------------------------

if __name__ == "__main__":
    B, T = 2, 8
    dim_text, dim_audio, dim_visual = 64, 32, 128   # small, TPU-friendly feature dims
    dim_model, n_heads = 128, 4

    key = jax.random.PRNGKey(0)
    kp_, kt, ka, kvv = jax.random.split(key, 4)
    params = init_params(kp_, dim_text, dim_audio, dim_visual, dim_model)

    text = jax.random.normal(kt, (B, T, dim_text), jnp.float32)
    audio = jax.random.normal(ka, (B, T, dim_audio), jnp.float32)
    visual = jax.random.normal(kvv, (B, T, dim_visual), jnp.float32)

    mask = [1, 1, 1, 1, 1, 1]

    @jax.jit
    def fwd_full(p, t, a, v):
        return cross_modal_supernet(p, t, a, v, mask=mask, n_heads=n_heads)

    logits, fused = fwd_full(params, text, audio, visual)
    jax.block_until_ready((logits, fused))
    flops = compute_flops(mask)

    # Sanity-check against a pure-JAX reference.
    with jax.default_matmul_precision("highest"):
        ref_logits, ref_fused = ref_forward(params, text, audio, visual, mask, n_heads)
    np.testing.assert_allclose(np.asarray(logits), np.asarray(ref_logits), rtol=1e-2, atol=1e-2)
    np.testing.assert_allclose(np.asarray(fused), np.asarray(ref_fused), rtol=1e-2, atol=1e-2)
    assert logits.shape == (B, 7) and fused.shape == (B, dim_model)
    assert abs(flops - 6.4) < 1e-6

    # Exercise path masking (P < 6 paths) through the same fused (path, batch) grid.
    mask2 = [1, 0, 1, 0, 0, 1]

    @jax.jit
    def fwd_masked(p, t, a, v):
        return cross_modal_supernet(p, t, a, v, mask=mask2, n_heads=n_heads)

    logits2, fused2 = fwd_masked(params, text, audio, visual)
    jax.block_until_ready((logits2, fused2))
    with jax.default_matmul_precision("highest"):
        ref_logits2, ref_fused2 = ref_forward(params, text, audio, visual, mask2, n_heads)
    np.testing.assert_allclose(np.asarray(logits2), np.asarray(ref_logits2), rtol=1e-2, atol=1e-2)
    np.testing.assert_allclose(np.asarray(fused2), np.asarray(ref_fused2), rtol=1e-2, atol=1e-2)

    print("KERNEL_OK")
</pallas_src>

<mosaic_0001>
module attributes {stable_mosaic.version = 11 : i64} {
  func.func @_proj_qkv_kernel(%arg0: memref<16x64xf32, #tpu.memory_space<vmem>>, %arg1: memref<16x32xf32, #tpu.memory_space<vmem>>, %arg2: memref<16x128xf32, #tpu.memory_space<vmem>>, %arg3: memref<64x512xf32, #tpu.memory_space<vmem>>, %arg4: memref<1x512xf32, #tpu.memory_space<vmem>>, %arg5: memref<512x128xf32, #tpu.memory_space<vmem>>, %arg6: memref<1x128xf32, #tpu.memory_space<vmem>>, %arg7: memref<32x128xf32, #tpu.memory_space<vmem>>, %arg8: memref<1x128xf32, #tpu.memory_space<vmem>>, %arg9: memref<128x128xf32, #tpu.memory_space<vmem>>, %arg10: memref<1x128xf32, #tpu.memory_space<vmem>>, %arg11: memref<128x1024xf32, #tpu.memory_space<vmem>>, %arg12: memref<1x1024xf32, #tpu.memory_space<vmem>>, %arg13: memref<1024x128xf32, #tpu.memory_space<vmem>>, %arg14: memref<1x128xf32, #tpu.memory_space<vmem>>, %arg15: memref<128x384xf32, #tpu.memory_space<vmem>>, %arg16: memref<1x384xf32, #tpu.memory_space<vmem>>, %arg17: memref<48x128xf32, #tpu.memory_space<vmem>>, %arg18: memref<48x384xf32, #tpu.memory_space<vmem>>) attributes {dimension_semantics = [], scalar_prefetch = 0 : i64, scratch_operands = 0 : i64, tpu.core_type = #tpu.core_type<tc>} {
    %c0 = arith.constant 0 : index
    %c0_0 = arith.constant 0 : index
    %0 = vector.load %arg0[%c0, %c0_0] : memref<16x64xf32, #tpu.memory_space<vmem>>, vector<16x64xf32>
    %c0_1 = arith.constant 0 : index
    %c0_2 = arith.constant 0 : index
    %1 = vector.load %arg3[%c0_1, %c0_2] : memref<64x512xf32, #tpu.memory_space<vmem>>, vector<64x512xf32>
    %cst = arith.constant dense<0.000000e+00> : vector<16x512xf32>
    %2 = tpu.matmul %0, %1, %cst {dimension_numbers = #tpu.dot_dimension_numbers<[1], [0], [0], [1], [0, 0, 1, 1], [], []>} : vector<16x64xf32>, vector<64x512xf32>, vector<16x512xf32> -> vector<16x512xf32>
    %c0_3 = arith.constant 0 : index
    %c0_4 = arith.constant 0 : index
    %3 = vector.load %arg4[%c0_3, %c0_4] : memref<1x512xf32, #tpu.memory_space<vmem>>, vector<1x512xf32>
    %4 = vector.broadcast %3 : vector<1x512xf32> to vector<16x512xf32>
    %5 = arith.addf %2, %4 : vector<16x512xf32>
    %cst_5 = arith.constant 0.000000e+00 : f32
    %6 = vector.broadcast %cst_5 : f32 to vector<16x512xf32>
    %7 = arith.maximumf %5, %6 : vector<16x512xf32>
    %c0_6 = arith.constant 0 : index
    %c0_7 = arith.constant 0 : index
    %8 = vector.load %arg5[%c0_6, %c0_7] : memref<512x128xf32, #tpu.memory_space<vmem>>, vector<512x128xf32>
    %cst_8 = arith.constant dense<0.000000e+00> : vector<16x128xf32>
    %9 = tpu.matmul %7, %8, %cst_8 {dimension_numbers = #tpu.dot_dimension_numbers<[1], [0], [0], [1], [0, 0, 1, 1], [], []>} : vector<16x512xf32>, vector<512x128xf32>, vector<16x128xf32> -> vector<16x128xf32>
    %c0_9 = arith.constant 0 : index
    %c0_10 = arith.constant 0 : index
    %10 = vector.load %arg6[%c0_9, %c0_10] : memref<1x128xf32, #tpu.memory_space<vmem>>, vector<1x128xf32>
    %11 = vector.broadcast %10 : vector<1x128xf32> to vector<16x128xf32>
    %12 = arith.addf %9, %11 : vector<16x128xf32>
    %c0_11 = arith.constant 0 : index
    %c0_12 = arith.constant 0 : index
    %13 = vector.load %arg1[%c0_11, %c0_12] : memref<16x32xf32, #tpu.memory_space<vmem>>, vector<16x32xf32>
    %c0_13 = arith.constant 0 : index
    %c0_14 = arith.constant 0 : index
    %14 = vector.load %arg7[%c0_13, %c0_14] : memref<32x128xf32, #tpu.memory_space<vmem>>, vector<32x128xf32>
    %cst_15 = arith.constant dense<0.000000e+00> : vector<16x128xf32>
    %15 = tpu.matmul %13, %14, %cst_15 {dimension_numbers = #tpu.dot_dimension_numbers<[1], [0], [0], [1], [0, 0, 1, 1], [], []>} : vector<16x32xf32>, vector<32x128xf32>, vector<16x128xf32> -> vector<16x128xf32>
    %c0_16 = arith.constant 0 : index
    %c0_17 = arith.constant 0 : index
    %16 = vector.load %arg8[%c0_16, %c0_17] : memref<1x128xf32, #tpu.memory_space<vmem>>, vector<1x128xf32>
    %17 = vector.broadcast %16 : vector<1x128xf32> to vector<16x128xf32>
    %18 = arith.addf %15, %17 : vector<16x128xf32>
    %cst_18 = arith.constant 0.000000e+00 : f32
    %19 = vector.broadcast %cst_18 : f32 to vector<16x128xf32>
    %20 = arith.maximumf %18, %19 : vector<16x128xf32>
    %c0_19 = arith.constant 0 : index
    %c0_20 = arith.constant 0 : index
    %21 = vector.load %arg9[%c0_19, %c0_20] : memref<128x128xf32, #tpu.memory_space<vmem>>, vector<128x128xf32>
    %cst_21 = arith.constant dense<0.000000e+00> : vector<16x128xf32>
    %22 = tpu.matmul %20, %21, %cst_21 {dimension_numbers = #tpu.dot_dimension_numbers<[1], [0], [0], [1], [0, 0, 1, 1], [], []>} : vector<16x128xf32>, vector<128x128xf32>, vector<16x128xf32> -> vector<16x128xf32>
    %c0_22 = arith.constant 0 : index
    %c0_23 = arith.constant 0 : index
    %23 = vector.load %arg10[%c0_22, %c0_23] : memref<1x128xf32, #tpu.memory_space<vmem>>, vector<1x128xf32>
    %24 = vector.broadcast %23 : vector<1x128xf32> to vector<16x128xf32>
    %25 = arith.addf %22, %24 : vector<16x128xf32>
    %c0_24 = arith.constant 0 : index
    %c0_25 = arith.constant 0 : index
    %26 = vector.load %arg2[%c0_24, %c0_25] : memref<16x128xf32, #tpu.memory_space<vmem>>, vector<16x128xf32>
    %c0_26 = arith.constant 0 : index
    %c0_27 = arith.constant 0 : index
    %27 = vector.load %arg11[%c0_26, %c0_27] : memref<128x1024xf32, #tpu.memory_space<vmem>>, vector<128x1024xf32>
    %cst_28 = arith.constant dense<0.000000e+00> : vector<16x1024xf32>
    %28 = tpu.matmul %26, %27, %cst_28 {dimension_numbers = #tpu.dot_dimension_numbers<[1], [0], [0], [1], [0, 0, 1, 1], [], []>} : vector<16x128xf32>, vector<128x1024xf32>, vector<16x1024xf32> -> vector<16x1024xf32>
    %c0_29 = arith.constant 0 : index
    %c0_30 = arith.constant 0 : index
    %29 = vector.load %arg12[%c0_29, %c0_30] : memref<1x1024xf32, #tpu.memory_space<vmem>>, vector<1x1024xf32>
    %30 = vector.broadcast %29 : vector<1x1024xf32> to vector<16x1024xf32>
    %31 = arith.addf %28, %30 : vector<16x1024xf32>
    %cst_31 = arith.constant 0.000000e+00 : f32
    %32 = vector.broadcast %cst_31 : f32 to vector<16x1024xf32>
    %33 = arith.maximumf %31, %32 : vector<16x1024xf32>
    %c0_32 = arith.constant 0 : index
    %c0_33 = arith.constant 0 : index
    %34 = vector.load %arg13[%c0_32, %c0_33] : memref<1024x128xf32, #tpu.memory_space<vmem>>, vector<1024x128xf32>
    %cst_34 = arith.constant dense<0.000000e+00> : vector<16x128xf32>
    %35 = tpu.matmul %33, %34, %cst_34 {dimension_numbers = #tpu.dot_dimension_numbers<[1], [0], [0], [1], [0, 0, 1, 1], [], []>} : vector<16x1024xf32>, vector<1024x128xf32>, vector<16x128xf32> -> vector<16x128xf32>
    %c0_35 = arith.constant 0 : index
    %c0_36 = arith.constant 0 : index
    %36 = vector.load %arg14[%c0_35, %c0_36] : memref<1x128xf32, #tpu.memory_space<vmem>>, vector<1x128xf32>
    %37 = vector.broadcast %36 : vector<1x128xf32> to vector<16x128xf32>
    %38 = arith.addf %35, %37 : vector<16x128xf32>
    %39 = tpu.concatenate %12, %25, %38 in 0 : vector<16x128xf32>, vector<16x128xf32>, vector<16x128xf32> -> vector<48x128xf32>
    %c0_37 = arith.constant 0 : index
    %c0_38 = arith.constant 0 : index
    %40 = vector.load %arg17[%c0_37, %c0_38] : memref<48x128xf32, #tpu.memory_space<vmem>>, vector<48x128xf32>
    tpu.vector_store %arg17[%c0_37, %c0_38], %39 {strides = array<i32>} : memref<48x128xf32, #tpu.memory_space<vmem>>, vector<48x128xf32>,
    %c0_39 = arith.constant 0 : index
    %c0_40 = arith.constant 0 : index
    %41 = vector.load %arg15[%c0_39, %c0_40] : memref<128x384xf32, #tpu.memory_space<vmem>>, vector<128x384xf32>
    %cst_41 = arith.constant dense<0.000000e+00> : vector<48x384xf32>
    %42 = tpu.matmul %39, %41, %cst_41 {dimension_numbers = #tpu.dot_dimension_numbers<[1], [0], [0], [1], [0, 0, 1, 1], [], []>} : vector<48x128xf32>, vector<128x384xf32>, vector<48x384xf32> -> vector<48x384xf32>
    %c0_42 = arith.constant 0 : index
    %c0_43 = arith.constant 0 : index
    %43 = vector.load %arg16[%c0_42, %c0_43] : memref<1x384xf32, #tpu.memory_space<vmem>>, vector<1x384xf32>
    %44 = vector.broadcast %43 : vector<1x384xf32> to vector<48x384xf32>
    %45 = arith.addf %42, %44 : vector<48x384xf32>
    %c0_44 = arith.constant 0 : index
    %c0_45 = arith.constant 0 : index
    %46 = vector.load %arg18[%c0_44, %c0_45] : memref<48x384xf32, #tpu.memory_space<vmem>>, vector<48x384xf32>
    tpu.vector_store %arg18[%c0_44, %c0_45], %45 {strides = array<i32>} : memref<48x384xf32, #tpu.memory_space<vmem>>, vector<48x384xf32>,
    return
  }
}

module attributes {stable_mosaic.version = 11 : i64} {
  func.func @_xmodal_block_kernel(%arg0: i32, %arg1: i32, %arg2: memref<6xi32, #tpu.memory_space<smem>>, %arg3: memref<6xi32, #tpu.memory_space<smem>>, %arg4: memref<1x1x8x128xf32, #tpu.memory_space<vmem>>, %arg5: memref<1x1x4x8x32xf32, #tpu.memory_space<vmem>>, %arg6: memref<1x1x4x8x32xf32, #tpu.memory_space<vmem>>, %arg7: memref<1x1x4x8x32xf32, #tpu.memory_space<vmem>>, %arg8: memref<4x32x128xf32, #tpu.memory_space<vmem>>, %arg9: memref<1x128xf32, #tpu.memory_space<vmem>>, %arg10: memref<1x128xf32, #tpu.memory_space<vmem>>, %arg11: memref<1x128xf32, #tpu.memory_space<vmem>>, %arg12: memref<128x512xf32, #tpu.memory_space<vmem>>, %arg13: memref<1x512xf32, #tpu.memory_space<vmem>>, %arg14: memref<512x128xf32, #tpu.memory_space<vmem>>, %arg15: memref<1x128xf32, #tpu.memory_space<vmem>>, %arg16: memref<1x128xf32, #tpu.memory_space<vmem>>, %arg17: memref<1x128xf32, #tpu.memory_space<vmem>>, %arg18: memref<1x1x1x128xf32, #tpu.memory_space<vmem>>) attributes {dimension_semantics = [#tpu.dimension_semantics<parallel>, #tpu.dimension_semantics<parallel>], iteration_bounds = array<i64: 6, 2>, scalar_prefetch = 2 : i64, scratch_operands = 0 : i64, tpu.core_type = #tpu.core_type<tc>, window_params = [{transform_indices = @transform_0, window_bounds = array<i64: 1, 1, 8, 128>}, {transform_indices = @transform_1, window_bounds = array<i64: 1, 1, 4, 8, 32>}, {transform_indices = @transform_2, window_bounds = array<i64: 1, 1, 4, 8, 32>}, {transform_indices = @transform_3, window_bounds = array<i64: 1, 1, 4, 8, 32>}, {pipeline_mode = #tpu.pipeline_mode<synchronous>, transform_indices = @transform_4, window_bounds = array<i64: 4, 32, 128>}, {pipeline_mode = #tpu.pipeline_mode<synchronous>, transform_indices = @transform_5, window_bounds = array<i64: 1, 128>}, {pipeline_mode = #tpu.pipeline_mode<synchronous>, transform_indices = @transform_6, window_bounds = array<i64: 1, 128>}, {pipeline_mode = #tpu.pipeline_mode<synchronous>, transform_indices = @transform_7, window_bounds = array<i64: 1, 128>}, {pipeline_mode = #tpu.pipeline_mode<synchronous>, transform_indices = @transform_8, window_bounds = array<i64: 128, 512>}, {pipeline_mode = #tpu.pipeline_mode<synchronous>, transform_indices = @transform_9, window_bounds = array<i64: 1, 512>}, {pipeline_mode = #tpu.pipeline_mode<synchronous>, transform_indices = @transform_10, window_bounds = array<i64: 512, 128>}, {pipeline_mode = #tpu.pipeline_mode<synchronous>, transform_indices = @transform_11, window_bounds = array<i64: 1, 128>}, {pipeline_mode = #tpu.pipeline_mode<synchronous>, transform_indices = @transform_12, window_bounds = array<i64: 1, 128>}, {pipeline_mode = #tpu.pipeline_mode<synchronous>, transform_indices = @transform_13, window_bounds = array<i64: 1, 128>}, {transform_indices = @transform_14, window_bounds = array<i64: 1, 1, 1, 128>}]} {
    %c0 = arith.constant 0 : index
    %c0_0 = arith.constant 0 : index
    %c0_1 = arith.constant 0 : index
    %c0_2 = arith.constant 0 : index
    %0 = vector.load %arg4[%c0, %c0_0, %c0_1, %c0_2] : memref<1x1x8x128xf32, #tpu.memory_space<vmem>>, vector<1x1x8x128xf32>
    %1 = vector.shape_cast %0 : vector<1x1x8x128xf32> to vector<8x128xf32>
    %c0_3 = arith.constant 0 : index
    %c0_4 = arith.constant 0 : index
    %c0_5 = arith.constant 0 : index
    %c0_6 = arith.constant 0 : index
    %c0_7 = arith.constant 0 : index
    %2 = vector.load %arg5[%c0_3, %c0_4, %c0_5, %c0_6, %c0_7] : memref<1x1x4x8x32xf32, #tpu.memory_space<vmem>>, vector<1x1x4x8x32xf32>
    %3 = vector.shape_cast %2 : vector<1x1x4x8x32xf32> to vector<4x8x32xf32>
    %c0_8 = arith.constant 0 : index
    %c0_9 = arith.constant 0 : index
    %c0_10 = arith.constant 0 : index
    %c0_11 = arith.constant 0 : index
    %c0_12 = arith.constant 0 : index
    %4 = vector.load %arg6[%c0_8, %c0_9, %c0_10, %c0_11, %c0_12] : memref<1x1x4x8x32xf32, #tpu.memory_space<vmem>>, vector<1x1x4x8x32xf32>
    %5 = vector.shape_cast %4 : vector<1x1x4x8x32xf32> to vector<4x8x32xf32>
    %c0_13 = arith.constant 0 : index
    %c0_14 = arith.constant 0 : index
    %c0_15 = arith.constant 0 : index
    %c0_16 = arith.constant 0 : index
    %c0_17 = arith.constant 0 : index
    %6 = vector.load %arg7[%c0_13, %c0_14, %c0_15, %c0_16, %c0_17] : memref<1x1x4x8x32xf32, #tpu.memory_space<vmem>>, vector<1x1x4x8x32xf32>
    %7 = vector.shape_cast %6 : vector<1x1x4x8x32xf32> to vector<4x8x32xf32>
    %cst = arith.constant dense<0.000000e+00> : vector<4x8x8xf32>
    %8 = tpu.matmul %3, %5, %cst {dimension_numbers = #tpu.dot_dimension_numbers<[2], [2], [1], [1], [0, 0, 0, 1, 1, 1], [0], [0]>} : vector<4x8x32xf32>, vector<4x8x32xf32>, vector<4x8x8xf32> -> vector<4x8x8xf32>
    %cst_18 = arith.constant 0.176776692 : f32
    %9 = vector.broadcast %cst_18 : f32 to vector<4x8x8xf32>
    %10 = arith.mulf %8, %9 : vector<4x8x8xf32>
    %cst_19 = arith.constant dense<0xFF800000> : vector<4x8xf32>
    %11 = vector.multi_reduction <maximumf>, %10, %cst_19 [2] : vector<4x8x8xf32> to vector<4x8xf32>
    %12 = vector.shape_cast %11 : vector<4x8xf32> to vector<4x8x1xf32>
    %13 = vector.broadcast %12 : vector<4x8x1xf32> to vector<4x8x8xf32>
    %14 = arith.subf %10, %13 : vector<4x8x8xf32>
    %15 = math.exp %14 : vector<4x8x8xf32>
    %cst_20 = arith.constant dense<0.000000e+00> : vector<4x8xf32>
    %16 = vector.multi_reduction <add>, %15, %cst_20 [2] : vector<4x8x8xf32> to vector<4x8xf32>
    %17 = vector.shape_cast %16 : vector<4x8xf32> to vector<4x8x1xf32>
    %18 = tpu.reciprocal %17 {approx = true} : vector<4x8x1xf32> -> vector<4x8x1xf32>
    %19 = vector.broadcast %18 : vector<4x8x1xf32> to vector<4x8x8xf32>
    %20 = arith.mulf %15, %19 : vector<4x8x8xf32>
    %cst_21 = arith.constant dense<0.000000e+00> : vector<4x8x32xf32>
    %21 = tpu.matmul %20, %7, %cst_21 {dimension_numbers = #tpu.dot_dimension_numbers<[2], [1], [1], [2], [0, 0, 0, 1, 1, 2], [0], [0]>} : vector<4x8x8xf32>, vector<4x8x32xf32>, vector<4x8x32xf32> -> vector<4x8x32xf32>
    %c0_22 = arith.constant 0 : index
    %c0_23 = arith.constant 0 : index
    %c0_24 = arith.constant 0 : index
    %22 = vector.load %arg8[%c0_22, %c0_23, %c0_24] : memref<4x32x128xf32, #tpu.memory_space<vmem>>, vector<4x32x128xf32>
    %cst_25 = arith.constant dense<0.000000e+00> : vector<4x8x128xf32>
    %23 = tpu.matmul %21, %22, %cst_25 {dimension_numbers = #tpu.dot_dimension_numbers<[2], [1], [1], [2], [0, 0, 0, 1, 1, 2], [0], [0]>} : vector<4x8x32xf32>, vector<4x32x128xf32>, vector<4x8x128xf32> -> vector<4x8x128xf32>
    %cst_26 = arith.constant dense<0.000000e+00> : vector<8x128xf32>
    %24 = vector.multi_reduction <add>, %23, %cst_26 [0] : vector<4x8x128xf32> to vector<8x128xf32>
    %c0_27 = arith.constant 0 : index
    %c0_28 = arith.constant 0 : index
    %25 = vector.load %arg9[%c0_27, %c0_28] : memref<1x128xf32, #tpu.memory_space<vmem>>, vector<1x128xf32>
    %26 = vector.broadcast %25 : vector<1x128xf32> to vector<8x128xf32>
    %27 = arith.addf %24, %26 : vector<8x128xf32>
    %28 = arith.addf %1, %27 : vector<8x128xf32>
    %c0_29 = arith.constant 0 : index
    %c0_30 = arith.constant 0 : index
    %29 = vector.load %arg10[%c0_29, %c0_30] : memref<1x128xf32, #tpu.memory_space<vmem>>, vector<1x128xf32>
    %c0_31 = arith.constant 0 : index
    %c0_32 = arith.constant 0 : index
    %30 = vector.load %arg11[%c0_31, %c0_32] : memref<1x128xf32, #tpu.memory_space<vmem>>, vector<1x128xf32>
    %cst_33 = arith.constant dense<0.000000e+00> : vector<8xf32>
    %31 = vector.multi_reduction <add>, %28, %cst_33 [1] : vector<8x128xf32> to vector<8xf32>
    %32 = vector.shape_cast %31 : vector<8xf32> to vector<8x1xf32>
    %cst_34 = arith.constant 1.280000e+02 : f32
    %33 = vector.broadcast %cst_34 : f32 to vector<8x1xf32>
    %34 = arith.divf %32, %33 : vector<8x1xf32>
    %35 = vector.broadcast %34 : vector<8x1xf32> to vector<8x128xf32>
    %36 = arith.subf %28, %35 : vector<8x128xf32>
    %37 = arith.mulf %36, %36 : vector<8x128xf32>
    %cst_35 = arith.constant dense<0.000000e+00> : vector<8xf32>
    %38 = vector.multi_reduction <add>, %37, %cst_35 [1] : vector<8x128xf32> to vector<8xf32>
    %39 = vector.shape_cast %38 : vector<8xf32> to vector<8x1xf32>
    %cst_36 = arith.constant 1.280000e+02 : f32
    %40 = vector.broadcast %cst_36 : f32 to vector<8x1xf32>
    %41 = arith.divf %39, %40 : vector<8x1xf32>
    %42 = vector.broadcast %34 : vector<8x1xf32> to vector<8x128xf32>
    %43 = arith.subf %28, %42 : vector<8x128xf32>
    %cst_37 = arith.constant 9.99999974E-6 : f32
    %44 = vector.broadcast %cst_37 : f32 to vector<8x1xf32>
    %45 = arith.addf %41, %44 : vector<8x1xf32>
    %46 = math.rsqrt %45 : vector<8x1xf32>
    %47 = vector.broadcast %46 : vector<8x1xf32> to vector<8x128xf32>
    %48 = arith.mulf %43, %47 : vector<8x128xf32>
    %49 = vector.broadcast %29 : vector<1x128xf32> to vector<8x128xf32>
    %50 = arith.mulf %48, %49 : vector<8x128xf32>
    %51 = vector.broadcast %30 : vector<1x128xf32> to vector<8x128xf32>
    %52 = arith.addf %50, %51 : vector<8x128xf32>
    %c0_38 = arith.constant 0 : index
    %c0_39 = arith.constant 0 : index
    %53 = vector.load %arg12[%c0_38, %c0_39] : memref<128x512xf32, #tpu.memory_space<vmem>>, vector<128x512xf32>
    %cst_40 = arith.constant dense<0.000000e+00> : vector<8x512xf32>
    %54 = tpu.matmul %52, %53, %cst_40 {dimension_numbers = #tpu.dot_dimension_numbers<[1], [0], [0], [1], [0, 0, 1, 1], [], []>} : vector<8x128xf32>, vector<128x512xf32>, vector<8x512xf32> -> vector<8x512xf32>
    %c0_41 = arith.constant 0 : index
    %c0_42 = arith.constant 0 : index
    %55 = vector.load %arg13[%c0_41, %c0_42] : memref<1x512xf32, #tpu.memory_space<vmem>>, vector<1x512xf32>
    %56 = vector.broadcast %55 : vector<1x512xf32> to vector<8x512xf32>
    %57 = arith.addf %54, %56 : vector<8x512xf32>
    %cst_43 = arith.constant 0.000000e+00 : f32
    %58 = vector.broadcast %cst_43 : f32 to vector<8x512xf32>
    %59 = arith.maximumf %57, %58 : vector<8x512xf32>
    %c0_44 = arith.constant 0 : index
    %c0_45 = arith.constant 0 : index
    %60 = vector.load %arg14[%c0_44, %c0_45] : memref<512x128xf32, #tpu.memory_space<vmem>>, vector<512x128xf32>
    %cst_46 = arith.constant dense<0.000000e+00> : vector<8x128xf32>
    %61 = tpu.matmul %59, %60, %cst_46 {dimension_numbers = #tpu.dot_dimension_numbers<[1], [0], [0], [1], [0, 0, 1, 1], [], []>} : vector<8x512xf32>, vector<512x128xf32>, vector<8x128xf32> -> vector<8x128xf32>
    %c0_47 = arith.constant 0 : index
    %c0_48 = arith.constant 0 : index
    %62 = vector.load %arg15[%c0_47, %c0_48] : memref<1x128xf32, #tpu.memory_space<vmem>>, vector<1x128xf32>
    %63 = vector.broadcast %62 : vector<1x128xf32> to vector<8x128xf32>
    %64 = arith.addf %61, %63 : vector<8x128xf32>
    %65 = arith.addf %52, %64 : vector<8x128xf32>
    %c0_49 = arith.constant 0 : index
    %c0_50 = arith.constant 0 : index
    %66 = vector.load %arg16[%c0_49, %c0_50] : memref<1x128xf32, #tpu.memory_space<vmem>>, vector<1x128xf32>
    %c0_51 = arith.constant 0 : index
    %c0_52 = arith.constant 0 : index
    %67 = vector.load %arg17[%c0_51, %c0_52] : memref<1x128xf32, #tpu.memory_space<vmem>>, vector<1x128xf32>
    %cst_53 = arith.constant dense<0.000000e+00> : vector<8xf32>
    %68 = vector.multi_reduction <add>, %65, %cst_53 [1] : vector<8x128xf32> to vector<8xf32>
    %69 = vector.shape_cast %68 : vector<8xf32> to vector<8x1xf32>
    %cst_54 = arith.constant 1.280000e+02 : f32
    %70 = vector.broadcast %cst_54 : f32 to vector<8x1xf32>
    %71 = arith.divf %69, %70 : vector<8x1xf32>
    %72 = vector.broadcast %71 : vector<8x1xf32> to vector<8x128xf32>
    %73 = arith.subf %65, %72 : vector<8x128xf32>
    %74 = arith.mulf %73, %73 : vector<8x128xf32>
    %cst_55 = arith.constant dense<0.000000e+00> : vector<8xf32>
    %75 = vector.multi_reduction <add>, %74, %cst_55 [1] : vector<8x128xf32> to vector<8xf32>
    %76 = vector.shape_cast %75 : vector<8xf32> to vector<8x1xf32>
    %cst_56 = arith.constant 1.280000e+02 : f32
    %77 = vector.broadcast %cst_56 : f32 to vector<8x1xf32>
    %78 = arith.divf %76, %77 : vector<8x1xf32>
    %79 = vector.broadcast %71 : vector<8x1xf32> to vector<8x128xf32>
    %80 = arith.subf %65, %79 : vector<8x128xf32>
    %cst_57 = arith.constant 9.99999974E-6 : f32
    %81 = vector.broadcast %cst_57 : f32 to vector<8x1xf32>
    %82 = arith.addf %78, %81 : vector<8x1xf32>
    %83 = math.rsqrt %82 : vector<8x1xf32>
    %84 = vector.broadcast %83 : vector<8x1xf32> to vector<8x128xf32>
    %85 = arith.mulf %80, %84 : vector<8x128xf32>
    %86 = vector.broadcast %66 : vector<1x128xf32> to vector<8x128xf32>
    %87 = arith.mulf %85, %86 : vector<8x128xf32>
    %88 = vector.broadcast %67 : vector<1x128xf32> to vector<8x128xf32>
    %89 = arith.addf %87, %88 : vector<8x128xf32>
    %cst_58 = arith.constant dense<0.000000e+00> : vector<128xf32>
    %90 = vector.multi_reduction <add>, %89, %cst_58 [0] : vector<8x128xf32> to vector<128xf32>
    %91 = vector.shape_cast %90 : vector<128xf32> to vector<1x128xf32>
    %cst_59 = arith.constant 8.000000e+00 : f32
    %92 = vector.broadcast %cst_59 : f32 to vector<1x128xf32>
    %93 = arith.divf %91, %92 : vector<1x128xf32>
    %c0_60 = arith.constant 0 : index
    %c0_61 = arith.constant 0 : index
    %c0_62 = arith.constant 0 : index
    %c0_63 = arith.constant 0 : index
    %94 = vector.load %arg18[%c0_60, %c0_61, %c0_62, %c0_63] : memref<1x1x1x128xf32, #tpu.memory_space<vmem>>, vector<1x1x1x128xf32>
    %95 = vector.shape_cast %94 : vector<1x1x1x128xf32> to vector<1x128xf32>
    %96 = vector.shape_cast %93 : vector<1x128xf32> to vector<1x1x1x128xf32>
    tpu.vector_store %arg18[%c0_60, %c0_61, %c0_62, %c0_63], %96 {strides = array<i32>} : memref<1x1x1x128xf32, #tpu.memory_space<vmem>>, vector<1x1x1x128xf32>,
    return
  }
  func.func @transform_0(%arg0: i32, %arg1: i32, %arg2: memref<6xi32, #tpu.memory_space<smem>>, %arg3: memref<6xi32, #tpu.memory_space<smem>>) -> (i32, i32, i32, i32) {
    %0 = arith.index_cast %arg0 : i32 to index
    %1 = memref.load %arg2[%0] : memref<6xi32, #tpu.memory_space<smem>>
    %c0_i32 = arith.constant 0 : i32
    %c0_i32_0 = arith.constant 0 : i32
    %c0_i32_1 = arith.constant 0 : i32
    return %1, %arg1, %c0_i32, %c0_i32_0 : i32, i32, i32, i32
  }
  func.func @transform_1(%arg0: i32, %arg1: i32, %arg2: memref<6xi32, #tpu.memory_space<smem>>, %arg3: memref<6xi32, #tpu.memory_space<smem>>) -> (i32, i32, i32, i32, i32) {
    %0 = arith.index_cast %arg0 : i32 to index
    %1 = memref.load %arg2[%0] : memref<6xi32, #tpu.memory_space<smem>>
    %c0_i32 = arith.constant 0 : i32
    %c0_i32_0 = arith.constant 0 : i32
    %c0_i32_1 = arith.constant 0 : i32
    %c0_i32_2 = arith.constant 0 : i32
    return %1, %arg1, %c0_i32, %c0_i32_0, %c0_i32_1 : i32, i32, i32, i32, i32
  }
  func.func @transform_2(%arg0: i32, %arg1: i32, %arg2: memref<6xi32, #tpu.memory_space<smem>>, %arg3: memref<6xi32, #tpu.memory_space<smem>>) -> (i32, i32, i32, i32, i32) {
    %0 = arith.index_cast %arg0 : i32 to index
    %1 = memref.load %arg3[%0] : memref<6xi32, #tpu.memory_space<smem>>
    %c0_i32 = arith.constant 0 : i32
    %c0_i32_0 = arith.constant 0 : i32
    %c0_i32_1 = arith.constant 0 : i32
    %c0_i32_2 = arith.constant 0 : i32
    return %1, %arg1, %c0_i32, %c0_i32_0, %c0_i32_1 : i32, i32, i32, i32, i32
  }
  func.func @transform_3(%arg0: i32, %arg1: i32, %arg2: memref<6xi32, #tpu.memory_space<smem>>, %arg3: memref<6xi32, #tpu.memory_space<smem>>) -> (i32, i32, i32, i32, i32) {
    %0 = arith.index_cast %arg0 : i32 to index
    %1 = memref.load %arg3[%0] : memref<6xi32, #tpu.memory_space<smem>>
    %c0_i32 = arith.constant 0 : i32
    %c0_i32_0 = arith.constant 0 : i32
    %c0_i32_1 = arith.constant 0 : i32
    %c0_i32_2 = arith.constant 0 : i32
    return %1, %arg1, %c0_i32, %c0_i32_0, %c0_i32_1 : i32, i32, i32, i32, i32
  }
  func.func @transform_4(%arg0: i32, %arg1: i32, %arg2: memref<6xi32, #tpu.memory_space<smem>>, %arg3: memref<6xi32, #tpu.memory_space<smem>>) -> (i32, i32, i32) {
    %c0_i32 = arith.constant 0 : i32
    %c0_i32_0 = arith.constant 0 : i32
    %c0_i32_1 = arith.constant 0 : i32
    %c0_i32_2 = arith.constant 0 : i32
    return %c0_i32, %c0_i32_0, %c0_i32_1 : i32, i32, i32
  }
  func.func @transform_5(%arg0: i32, %arg1: i32, %arg2: memref<6xi32, #tpu.memory_space<smem>>, %arg3: memref<6xi32, #tpu.memory_space<smem>>) -> (i32, i32) {
    %c0_i32 = arith.constant 0 : i32
    %c0_i32_0 = arith.constant 0 : i32
    %c0_i32_1 = arith.constant 0 : i32
    return %c0_i32, %c0_i32_0 : i32, i32
  }
  func.func @transform_6(%arg0: i32, %arg1: i32, %arg2: memref<6xi32, #tpu.memory_space<smem>>, %arg3: memref<6xi32, #tpu.memory_space<smem>>) -> (i32, i32) {
    %c0_i32 = arith.constant 0 : i32
    %c0_i32_0 = arith.constant 0 : i32
    %c0_i32_1 = arith.constant 0 : i32
    return %c0_i32, %c0_i32_0 : i32, i32
  }
  func.func @transform_7(%arg0: i32, %arg1: i32, %arg2: memref<6xi32, #tpu.memory_space<smem>>, %arg3: memref<6xi32, #tpu.memory_space<smem>>) -> (i32, i32) {
    %c0_i32 = arith.constant 0 : i32
    %c0_i32_0 = arith.constant 0 : i32
    %c0_i32_1 = arith.constant 0 : i32
    return %c0_i32, %c0_i32_0 : i32, i32
  }
  func.func @transform_8(%arg0: i32, %arg1: i32, %arg2: memref<6xi32, #tpu.memory_space<smem>>, %arg3: memref<6xi32, #tpu.memory_space<smem>>) -> (i32, i32) {
    %c0_i32 = arith.constant 0 : i32
    %c0_i32_0 = arith.constant 0 : i32
    %c0_i32_1 = arith.constant 0 : i32
    return %c0_i32, %c0_i32_0 : i32, i32
  }
  func.func @transform_9(%arg0: i32, %arg1: i32, %arg2: memref<6xi32, #tpu.memory_space<smem>>, %arg3: memref<6xi32, #tpu.memory_space<smem>>) -> (i32, i32) {
    %c0_i32 = arith.constant 0 : i32
    %c0_i32_0 = arith.constant 0 : i32
    %c0_i32_1 = arith.constant 0 : i32
    return %c0_i32, %c0_i32_0 : i32, i32
  }
  func.func @transform_10(%arg0: i32, %arg1: i32, %arg2: memref<6xi32, #tpu.memory_space<smem>>, %arg3: memref<6xi32, #tpu.memory_space<smem>>) -> (i32, i32) {
    %c0_i32 = arith.constant 0 : i32
    %c0_i32_0 = arith.constant 0 : i32
    %c0_i32_1 = arith.constant 0 : i32
    return %c0_i32, %c0_i32_0 : i32, i32
  }
  func.func @transform_11(%arg0: i32, %arg1: i32, %arg2: memref<6xi32, #tpu.memory_space<smem>>, %arg3: memref<6xi32, #tpu.memory_space<smem>>) -> (i32, i32) {
    %c0_i32 = arith.constant 0 : i32
    %c0_i32_0 = arith.constant 0 : i32
    %c0_i32_1 = arith.constant 0 : i32
    return %c0_i32, %c0_i32_0 : i32, i32
  }
  func.func @transform_12(%arg0: i32, %arg1: i32, %arg2: memref<6xi32, #tpu.memory_space<smem>>, %arg3: memref<6xi32, #tpu.memory_space<smem>>) -> (i32, i32) {
    %c0_i32 = arith.constant 0 : i32
    %c0_i32_0 = arith.constant 0 : i32
    %c0_i32_1 = arith.constant 0 : i32
    return %c0_i32, %c0_i32_0 : i32, i32
  }
  func.func @transform_13(%arg0: i32, %arg1: i32, %arg2: memref<6xi32, #tpu.memory_space<smem>>, %arg3: memref<6xi32, #tpu.memory_space<smem>>) -> (i32, i32) {
    %c0_i32 = arith.constant 0 : i32
    %c0_i32_0 = arith.constant 0 : i32
    %c0_i32_1 = arith.constant 0 : i32
    return %c0_i32, %c0_i32_0 : i32, i32
  }
  func.func @transform_14(%arg0: i32, %arg1: i32, %arg2: memref<6xi32, #tpu.memory_space<smem>>, %arg3: memref<6xi32, #tpu.memory_space<smem>>) -> (i32, i32, i32, i32) {
    %c0_i32 = arith.constant 0 : i32
    %c0_i32_0 = arith.constant 0 : i32
    %c0_i32_1 = arith.constant 0 : i32
    return %arg0, %arg1, %c0_i32, %c0_i32_0 : i32, i32, i32, i32
  }
}

module attributes {stable_mosaic.version = 11 : i64} {
  func.func @_mean_classifier_kernel(%arg0: memref<6x2x128xf32, #tpu.memory_space<vmem>>, %arg1: memref<128x256xf32, #tpu.memory_space<vmem>>, %arg2: memref<1x256xf32, #tpu.memory_space<vmem>>, %arg3: memref<256x7xf32, #tpu.memory_space<vmem>>, %arg4: memref<1x7xf32, #tpu.memory_space<vmem>>, %arg5: memref<2x128xf32, #tpu.memory_space<vmem>>, %arg6: memref<2x7xf32, #tpu.memory_space<vmem>>) attributes {dimension_semantics = [], scalar_prefetch = 0 : i64, scratch_operands = 0 : i64, tpu.core_type = #tpu.core_type<tc>} {
    %c0 = arith.constant 0 : index
    %c0_0 = arith.constant 0 : index
    %c0_1 = arith.constant 0 : index
    %0 = vector.load %arg0[%c0, %c0_0, %c0_1] : memref<6x2x128xf32, #tpu.memory_space<vmem>>, vector<6x2x128xf32>
    %cst = arith.constant dense<0.000000e+00> : vector<2x128xf32>
    %1 = vector.multi_reduction <add>, %0, %cst [0] : vector<6x2x128xf32> to vector<2x128xf32>
    %cst_2 = arith.constant 6.000000e+00 : f32
    %2 = vector.broadcast %cst_2 : f32 to vector<2x128xf32>
    %3 = arith.divf %1, %2 : vector<2x128xf32>
    %c0_3 = arith.constant 0 : index
    %c0_4 = arith.constant 0 : index
    %4 = vector.load %arg5[%c0_3, %c0_4] : memref<2x128xf32, #tpu.memory_space<vmem>>, vector<2x128xf32>
    tpu.vector_store %arg5[%c0_3, %c0_4], %3 {strides = array<i32>} : memref<2x128xf32, #tpu.memory_space<vmem>>, vector<2x128xf32>,
    %c0_5 = arith.constant 0 : index
    %c0_6 = arith.constant 0 : index
    %5 = vector.load %arg1[%c0_5, %c0_6] : memref<128x256xf32, #tpu.memory_space<vmem>>, vector<128x256xf32>
    %cst_7 = arith.constant dense<0.000000e+00> : vector<2x256xf32>
    %6 = tpu.matmul %3, %5, %cst_7 {dimension_numbers = #tpu.dot_dimension_numbers<[1], [0], [0], [1], [0, 0, 1, 1], [], []>} : vector<2x128xf32>, vector<128x256xf32>, vector<2x256xf32> -> vector<2x256xf32>
    %c0_8 = arith.constant 0 : index
    %c0_9 = arith.constant 0 : index
    %7 = vector.load %arg2[%c0_8, %c0_9] : memref<1x256xf32, #tpu.memory_space<vmem>>, vector<1x256xf32>
    %8 = vector.broadcast %7 : vector<1x256xf32> to vector<2x256xf32>
    %9 = arith.addf %6, %8 : vector<2x256xf32>
    %cst_10 = arith.constant 0.000000e+00 : f32
    %10 = vector.broadcast %cst_10 : f32 to vector<2x256xf32>
    %11 = arith.maximumf %9, %10 : vector<2x256xf32>
    %c0_11 = arith.constant 0 : index
    %c0_12 = arith.constant 0 : index
    %12 = vector.load %arg3[%c0_11, %c0_12] : memref<256x7xf32, #tpu.memory_space<vmem>>, vector<256x7xf32>
    %cst_13 = arith.constant dense<0.000000e+00> : vector<2x7xf32>
    %13 = tpu.matmul %11, %12, %cst_13 {dimension_numbers = #tpu.dot_dimension_numbers<[1], [0], [0], [1], [0, 0, 1, 1], [], []>} : vector<2x256xf32>, vector<256x7xf32>, vector<2x7xf32> -> vector<2x7xf32>
    %c0_14 = arith.constant 0 : index
    %c0_15 = arith.constant 0 : index
    %14 = vector.load %arg4[%c0_14, %c0_15] : memref<1x7xf32, #tpu.memory_space<vmem>>, vector<1x7xf32>
    %15 = vector.broadcast %14 : vector<1x7xf32> to vector<2x7xf32>
    %16 = arith.addf %13, %15 : vector<2x7xf32>
    %c0_16 = arith.constant 0 : index
    %c0_17 = arith.constant 0 : index
    %17 = vector.load %arg6[%c0_16, %c0_17] : memref<2x7xf32, #tpu.memory_space<vmem>>, vector<2x7xf32>
    tpu.vector_store %arg6[%c0_16, %c0_17], %16 {strides = array<i32>} : memref<2x7xf32, #tpu.memory_space<vmem>>, vector<2x7xf32>,
    return
  }
}

</mosaic_0001>

<llo_original>
// kernel: fwd_full.5
$region0: #{fwd_full.5}
  #allocation0 [shape = 'u32[]', space=smem, size = 0x4, offset = 0x4, fixed_abs, tag = 'smem constant byte address 0x4 - core index']
  #allocation1 [shape = 'u32[144,128]{1,0:T(1,128)}', space=vmem, size = 0x12000, scoped, tag = 'internal scratch']
  %s0 = inlined_call_operand.vmem [shape: f32[6,2,128], index: 0, kind: input, shape index: {}]
  %s1 = inlined_call_operand.vmem [shape: f32[128,256], index: 1, kind: input, shape index: {}]
  %s2 = inlined_call_operand.vmem [shape: f32[1,256], index: 2, kind: input, shape index: {}]
  %s3 = inlined_call_operand.vmem [shape: f32[256,7], index: 3, kind: input, shape index: {}]
  %s4 = inlined_call_operand.vmem [shape: f32[1,7], index: 4, kind: input, shape index: {}]
  %s5 = inlined_call_operand.hbm [shape: f32[2,128], index: 5, kind: output, shape index: {0}]
  %s6 = inlined_call_operand.hbm [shape: f32[2,7], index: 6, kind: output, shape index: {1}]
  %7 = xla_tuple %s5, %s6
  %s8 = sld [smem:[#allocation0]]
  $region38: #{fwd_full.5} parent=0
    _
  %s10 = ssub.s32 1, %s8
  %s11 = scalar_select 0, %s10, %s8
  $region1: #{fwd_full.5} parent=0
    #allocation2 [shape = 'u8[1024]{0}', space=vmem, size = 0x400, scoped, tag = 'output window, operand 0, single buffered']
    #allocation3 [shape = 's32[1]{0}', space=sflag, size = 0x4, scoped, tag = 'scoped memory for fwd_full.5']
    #allocation4 [shape = 'u8[1024]{0}', space=vmem, size = 0x400, scoped, tag = 'output window, operand 1, single buffered']
    #allocation5 [shape = 's32[1]{0}', space=sflag, size = 0x4, scoped, tag = 'scoped memory for fwd_full.5']
    %12 = vsyncpa [#allocation3], 0
    %13 = vsyncpa [#allocation5], 0
    // Predicated region
    $region2: #{fwd_full.5} parent=1 // pred_check
      _
    $region3: #{fwd_full.5} parent=1 // pred_check_branch
      %15 = sbr.rel (0) target = $region5
    $region4: #{fwd_full.5} parent=1 // pred_region
      _
    $region5: #{fwd_full.5} parent=1 // pred_fallthru
      _
    // Predicated region
    $region6: #{fwd_full.5} parent=1 // pred_check
      _
    $region7: #{fwd_full.5} parent=1 // pred_check_branch
      %17 = sbr.rel (0) target = $region9
    $region8: #{fwd_full.5} parent=1 // pred_region
      _
    $region9: #{fwd_full.5} parent=1 // pred_fallthru
      _
    // Predicated region
    $region10: #{fwd_full.5} parent=1 // pred_check
      _
    $region11: #{fwd_full.5} parent=1 // pred_check_branch
      %19 = sbr.rel (0) target = $region13
    $region12: #{fwd_full.5} parent=1 // pred_region
      _
    $region13: #{fwd_full.5} parent=1 // pred_fallthru
      _
    // Predicated region
    $region14: #{fwd_full.5} parent=1 // pred_check
      _
    $region15: #{fwd_full.5} parent=1 // pred_check_branch
      %21 = sbr.rel (0) target = $region17
    $region16: #{fwd_full.5} parent=1 // pred_region
      _
    $region17: #{fwd_full.5} parent=1 // pred_fallthru
      _
    // Predicated region
    $region18: #{fwd_full.5} parent=1 // pred_check
      _
    $region19: #{fwd_full.5} parent=1 // pred_check_branch
      %23 = sbr.rel (0) target = $region21
    $region20: #{fwd_full.5} parent=1 // pred_region
      _
    $region21: #{fwd_full.5} parent=1 // pred_fallthru
      _
    %v24 = vld [vmem:[%s0] sm:$0x3]
    %v25 = vld [vmem:[%s0 + $0x2] sm:$0x3]
    %v26 = vld [vmem:[%s0 + $0x4] sm:$0x3]
    %v27 = vld [vmem:[%s0 + $0x6] sm:$0x3]
    %v28 = vld [vmem:[%s0 + $0x8] sm:$0x3]
    %v29 = vld [vmem:[%s0 + $0xa] sm:$0x3]
    %vm30 = vcmask 1041408
    %v31 = vsel %vm30, %v24, 0.0
    %v32 = vsel %vm30, %v25, 0.0
    %v33 = vadd.f32 %v31, %v32
    %v34 = vsel %vm30, %v26, 0.0
    %v35 = vadd.f32 %v33, %v34
    %v36 = vsel %vm30, %v27, 0.0
    %v37 = vadd.f32 %v35, %v36
    %v38 = vsel %vm30, %v28, 0.0
    %v39 = vadd.f32 %v37, %v38
    %v40 = vsel %vm30, %v29, 0.0
    %v41 = vadd.f32 %v39, %v40
    %v42 = vrcp.pop 6.0
    %v43 = vmul.f32 %v41, %v42
    %44 = vst [vmem:[#allocation2] sm:$0x3] %v43
    %v45 = vld [vmem:[%s1] sm:$0xff]
    %v46 = vld [vmem:[%s1 + $0x8] sm:$0xff]
    %v47 = vld [vmem:[%s1 + $0x10] sm:$0xff]
    %v48 = vld [vmem:[%s1 + $0x18] sm:$0xff]
    %v49 = vld [vmem:[%s1 + $0x20] sm:$0xff]
    %v50 = vld [vmem:[%s1 + $0x28] sm:$0xff]
    %v51 = vld [vmem:[%s1 + $0x30] sm:$0xff]
    %v52 = vld [vmem:[%s1 + $0x38] sm:$0xff]
    %v53 = vld [vmem:[%s1 + $0x40] sm:$0xff]
    %v54 = vld [vmem:[%s1 + $0x48] sm:$0xff]
    %v55 = vld [vmem:[%s1 + $0x50] sm:$0xff]
    %v56 = vld [vmem:[%s1 + $0x58] sm:$0xff]
    %v57 = vld [vmem:[%s1 + $0x60] sm:$0xff]
    %v58 = vld [vmem:[%s1 + $0x68] sm:$0xff]
    %v59 = vld [vmem:[%s1 + $0x70] sm:$0xff]
    %v60 = vld [vmem:[%s1 + $0x78] sm:$0xff]
    %v61 = vld [vmem:[%s1 + $0x80] sm:$0xff]
    %v62 = vld [vmem:[%s1 + $0x88] sm:$0xff]
    %v63 = vld [vmem:[%s1 + $0x90] sm:$0xff]
    %v64 = vld [vmem:[%s1 + $0x98] sm:$0xff]
    %v65 = vld [vmem:[%s1 + $0xa0] sm:$0xff]
    %v66 = vld [vmem:[%s1 + $0xa8] sm:$0xff]
    %v67 = vld [vmem:[%s1 + $0xb0] sm:$0xff]
    %v68 = vld [vmem:[%s1 + $0xb8] sm:$0xff]
    %v69 = vld [vmem:[%s1 + $0xc0] sm:$0xff]
    %v70 = vld [vmem:[%s1 + $0xc8] sm:$0xff]
    %v71 = vld [vmem:[%s1 + $0xd0] sm:$0xff]
    %v72 = vld [vmem:[%s1 + $0xd8] sm:$0xff]
    %v73 = vld [vmem:[%s1 + $0xe0] sm:$0xff]
    %v74 = vld [vmem:[%s1 + $0xe8] sm:$0xff]
    %v75 = vld [vmem:[%s1 + $0xf0] sm:$0xff]
    %v76 = vld [vmem:[%s1 + $0xf8] sm:$0xff]
    %v77 = vld [vmem:[%s2] sm:$0x3]
    %v79 = vlaneseq
    %v80 = vshrl.u32 %v79, 7
    %v81 = vsub.s32 0, %v80
    %v82 = vrot.slane %v77, %v81
    %v83 = vlaneseq
    %v84 = vshrl.u32 %v83, 7
    %v85 = vsub.s32 1, %v84
    %v86 = vrot.slane %v77, %v85
    %89 = vmatprep.subr.mxu0 %v76
    %90 = vmatpush1.msra.mxu0 %v75
    %91 = vmatprep.subr.mxu0 %v74
    %92 = vmatpush1.msra.mxu0 %v73
    %93 = vmatprep.subr.mxu0 %v72
    %94 = vmatpush1.msra.mxu0 %v71
    %95 = vmatprep.subr.mxu0 %v70
    %96 = vmatpush1.msra.mxu0 %v69
    %97 = vmatprep.subr.mxu0 %v68
    %98 = vmatpush1.msra.mxu0 %v67
    %99 = vmatprep.subr.mxu0 %v66
    %100 = vmatpush1.msra.mxu0 %v65
    %101 = vmatprep.subr.mxu0 %v64
    %102 = vmatpush1.msra.mxu0 %v63
    %103 = vmatprep.subr.mxu0 %v62
    %104 = vmatpush1.msra.mxu0 %v61
    %105 = vmatprep.subr.mxu0 %v60
    %106 = vmatpush1.msra.mxu0 %v59
    %107 = vmatprep.subr.mxu0 %v58
    %108 = vmatpush1.msra.mxu0 %v57
    %109 = vmatprep.subr.mxu0 %v56
    %110 = vmatpush1.msra.mxu0 %v55
    %111 = vmatprep.subr.mxu0 %v54
    %112 = vmatpush1.msra.mxu0 %v53
    %113 = vmatprep.subr.mxu0 %v52
    %114 = vmatpush1.msra.mxu0 %v51
    %115 = vmatprep.subr.mxu0 %v50
    %116 = vmatpush1.msra.mxu0 %v49
    %117 = vmatprep.subr.mxu0 %v48
    %118 = vmatpush1.msra.mxu0 %v47
    %119 = vmatprep.subr.mxu0 %v46
    %120 = vmatpush1.msra.mxu0 %v45
    %121 = vmatprep.subr.mxu0 0.0
    %122 = vmatpush2.msra.mxu0 0.0
    %123 = vmatprep.subr.mxu0 0.0
    %124 = vmatpush2.msra.mxu0 0.0
    %125 = vmatprep.subr.mxu0 0.0
    %126 = vmatpush2.msra.mxu0 0.0
    %127 = vmatprep.subr.mxu0 0.0
    %128 = vmatpush2.msra.mxu0 0.0
    %129 = vmatprep.subr.mxu0 0.0
    %130 = vmatpush2.msra.mxu0 0.0
    %131 = vmatprep.subr.mxu0 0.0
    %132 = vmatpush2.msra.mxu0 0.0
    %133 = vmatprep.subr.mxu0 0.0
    %134 = vmatpush2.msra.mxu0 0.0
    %135 = vmatprep.subr.mxu0 0.0
    %136 = vmatpush2.msra.mxu0 0.0
    %137 = vmatprep.subr.mxu0 0.0
    %138 = vmatpush2.msra.mxu0 0.0
    %139 = vmatprep.subr.mxu0 0.0
    %140 = vmatpush2.msra.mxu0 0.0
    %141 = vmatprep.subr.mxu0 0.0
    %142 = vmatpush2.msra.mxu0 0.0
    %143 = vmatprep.subr.mxu0 0.0
    %144 = vmatpush2.msra.mxu0 0.0
    %145 = vmatprep.subr.mxu0 0.0
    %146 = vmatpush2.msra.mxu0 0.0
    %147 = vmatprep.subr.mxu0 0.0
    %148 = vmatpush2.msra.mxu0 0.0
    %149 = vmatprep.subr.mxu0 0.0
    %150 = vmatpush2.msra.mxu0 0.0
    %151 = vmatprep.subr.mxu0 0.0
    %152 = vmatpush2.msra.mxu0 0.0
    %153 = vmatprep.mubr.f32.mxu0 0.0
    %154 = vmatmul.mubr.f32.gmra.mxu0 %v43
    %v155 = vpop.f32.mrf.mxu0
    %v156 = vadd.f32 %v82, %v155
    %v157 = vpop.f32.mrf.mxu0
    %v158 = vadd.f32 %v86, %v157
    %159 = vdwg.mxu0
    %v160 = vmax.f32 %v156, 0.0
    %v161 = vmax.f32 %v158, 0.0
    %v162 = vld [vmem:[%s3] sm:$0xff]
    %v163 = vld [vmem:[%s3 + $0x8] sm:$0xff]
    %v164 = vld [vmem:[%s3 + $0x10] sm:$0xff]
    %v165 = vld [vmem:[%s3 + $0x18] sm:$0xff]
    %v166 = vld [vmem:[%s3 + $0x20] sm:$0xff]
    %v167 = vld [vmem:[%s3 + $0x28] sm:$0xff]
    %v168 = vld [vmem:[%s3 + $0x30] sm:$0xff]
    %v169 = vld [vmem:[%s3 + $0x38] sm:$0xff]
    %v170 = vld [vmem:[%s3 + $0x40] sm:$0xff]
    %v171 = vld [vmem:[%s3 + $0x48] sm:$0xff]
    %v172 = vld [vmem:[%s3 + $0x50] sm:$0xff]
    %v173 = vld [vmem:[%s3 + $0x58] sm:$0xff]
    %v174 = vld [vmem:[%s3 + $0x60] sm:$0xff]
    %v175 = vld [vmem:[%s3 + $0x68] sm:$0xff]
    %v176 = vld [vmem:[%s3 + $0x70] sm:$0xff]
    %v177 = vld [vmem:[%s3 + $0x78] sm:$0xff]
    %v178 = vld [vmem:[%s3 + $0x80] sm:$0xff]
    %v179 = vld [vmem:[%s3 + $0x88] sm:$0xff]
    %v180 = vld [vmem:[%s3 + $0x90] sm:$0xff]
    %v181 = vld [vmem:[%s3 + $0x98] sm:$0xff]
    %v182 = vld [vmem:[%s3 + $0xa0] sm:$0xff]
    %v183 = vld [vmem:[%s3 + $0xa8] sm:$0xff]
    %v184 = vld [vmem:[%s3 + $0xb0] sm:$0xff]
    %v185 = vld [vmem:[%s3 + $0xb8] sm:$0xff]
    %v186 = vld [vmem:[%s3 + $0xc0] sm:$0xff]
    %v187 = vld [vmem:[%s3 + $0xc8] sm:$0xff]
    %v188 = vld [vmem:[%s3 + $0xd0] sm:$0xff]
    %v189 = vld [vmem:[%s3 + $0xd8] sm:$0xff]
    %v190 = vld [vmem:[%s3 + $0xe0] sm:$0xff]
    %v191 = vld [vmem:[%s3 + $0xe8] sm:$0xff]
    %v192 = vld [vmem:[%s3 + $0xf0] sm:$0xff]
    %v193 = vld [vmem:[%s3 + $0xf8] sm:$0xff]
    %v194 = vld [vmem:[%s4] sm:$0x1]
    %v196 = vlaneseq
    %v197 = vshrl.u32 %v196, 7
    %v198 = vsub.s32 0, %v197
    %v199 = vrot.slane %v194, %v198
    %201 = vmatprep.subr.mxu0 0.0
    %202 = vmatpush1.msra.mxu0 %v177
    %203 = vmatprep.subr.mxu0 0.0
    %204 = vmatpush1.msra.mxu0 %v176
    %205 = vmatprep.subr.mxu0 0.0
    %206 = vmatpush1.msra.mxu0 %v175
    %207 = vmatprep.subr.mxu0 0.0
    %208 = vmatpush1.msra.mxu0 %v174
    %209 = vmatprep.subr.mxu0 0.0
    %210 = vmatpush1.msra.mxu0 %v173
    %211 = vmatprep.subr.mxu0 0.0
    %212 = vmatpush1.msra.mxu0 %v172
    %213 = vmatprep.subr.mxu0 0.0
    %214 = vmatpush1.msra.mxu0 %v171
    %215 = vmatprep.subr.mxu0 0.0
    %216 = vmatpush1.msra.mxu0 %v170
    %217 = vmatprep.subr.mxu0 0.0
    %218 = vmatpush1.msra.mxu0 %v169
    %219 = vmatprep.subr.mxu0 0.0
    %220 = vmatpush1.msra.mxu0 %v168
    %221 = vmatprep.subr.mxu0 0.0
    %222 = vmatpush1.msra.mxu0 %v167
    %223 = vmatprep.subr.mxu0 0.0
    %224 = vmatpush1.msra.mxu0 %v166
    %225 = vmatprep.subr.mxu0 0.0
    %226 = vmatpush1.msra.mxu0 %v165
    %227 = vmatprep.subr.mxu0 0.0
    %228 = vmatpush1.msra.mxu0 %v164
    %229 = vmatprep.subr.mxu0 0.0
    %230 = vmatpush1.msra.mxu0 %v163
    %231 = vmatprep.subr.mxu0 0.0
    %232 = vmatpush1.msra.mxu0 %v162
    %233 = vmatprep.subr.mxu0 0.0
    %234 = vmatpush2.msra.mxu0 %v193
    %235 = vmatprep.subr.mxu0 0.0
    %236 = vmatpush2.msra.mxu0 %v192
    %237 = vmatprep.subr.mxu0 0.0
    %238 = vmatpush2.msra.mxu0 %v191
    %239 = vmatprep.subr.mxu0 0.0
    %240 = vmatpush2.msra.mxu0 %v190
    %241 = vmatprep.subr.mxu0 0.0
    %242 = vmatpush2.msra.mxu0 %v189
    %243 = vmatprep.subr.mxu0 0.0
    %244 = vmatpush2.msra.mxu0 %v188
    %245 = vmatprep.subr.mxu0 0.0
    %246 = vmatpush2.msra.mxu0 %v187
    %247 = vmatprep.subr.mxu0 0.0
    %248 = vmatpush2.msra.mxu0 %v186
    %249 = vmatprep.subr.mxu0 0.0
    %250 = vmatpush2.msra.mxu0 %v185
    %251 = vmatprep.subr.mxu0 0.0
    %252 = vmatpush2.msra.mxu0 %v184
    %253 = vmatprep.subr.mxu0 0.0
    %254 = vmatpush2.msra.mxu0 %v183
    %255 = vmatprep.subr.mxu0 0.0
    %256 = vmatpush2.msra.mxu0 %v182
    %257 = vmatprep.subr.mxu0 0.0
    %258 = vmatpush2.msra.mxu0 %v181
    %259 = vmatprep.subr.mxu0 0.0
    %260 = vmatpush2.msra.mxu0 %v180
    %261 = vmatprep.subr.mxu0 0.0
    %262 = vmatpush2.msra.mxu0 %v179
    %263 = vmatprep.subr.mxu0 0.0
    %264 = vmatpush2.msra.mxu0 %v178
    %265 = vmatprep.mubr.f32.mxu0 %v161
    %266 = vmatmul.mubr.f32.gmra.mxu0 %v160
    %v267 = vpop.f32.mrf.mxu0
    %v268 = vadd.f32 %v199, %v267
    %v269 = vpop.f32.mrf.mxu0
    %270 = vdwg.mxu0
    %vm271 = vcmask 50176
    %272 = vst.msk [vmem:[#allocation4] sm:$0x3] %vm271, %v268
    // Predicated region
    $region22: #{fwd_full.5} parent=1 // pred_check
      _
    $region23: #{fwd_full.5} parent=1 // pred_check_branch
      %274 = sbr.rel (0) target = $region25
    $region24: #{fwd_full.5} parent=1 // pred_region
      %s276 = ssub.s32 32, 32
      %277 = vsyncadd [#allocation3], %s276
      %s279 = sshll.u32 [#allocation2], 4
      %s280 = int_to_ptr.vmem [resolvable:$true] %s279
      %282 = dma.vmem_to_hbm [thread:$0]  %s280, 32, %s5, [#allocation3]
    $region25: #{fwd_full.5} parent=1 // pred_fallthru
      _
    // Predicated region
    $region26: #{fwd_full.5} parent=1 // pred_check
      _
    $region27: #{fwd_full.5} parent=1 // pred_check_branch
      %284 = sbr.rel (0) target = $region29
    $region28: #{fwd_full.5} parent=1 // pred_region
      %s286 = ssub.s32 32, 32
      %287 = vsyncadd [#allocation5], %s286
      %s289 = sshll.u32 [#allocation4], 4
      %s290 = int_to_ptr.vmem [resolvable:$true] %s289
      %292 = dma.vmem_to_hbm [thread:$0]  %s290, 32, %s6, [#allocation5]
    $region29: #{fwd_full.5} parent=1 // pred_fallthru
      _
    // Predicated region
    $region30: #{fwd_full.5} parent=1 // pred_check
      _
    $region31: #{fwd_full.5} parent=1 // pred_check_branch
      %294 = sbr.rel (0) target = $region33
    $region32: #{fwd_full.5} parent=1 // pred_region
      %295 = dma.done [#allocation3], 32
    $region33: #{fwd_full.5} parent=1 // pred_fallthru
      _
    // Predicated region
    $region34: #{fwd_full.5} parent=1 // pred_check
      _
    $region35: #{fwd_full.5} parent=1 // pred_check_branch
      %297 = sbr.rel (0) target = $region37
    $region36: #{fwd_full.5} parent=1 // pred_region
      %298 = dma.done [#allocation5], 32
    $region37: #{fwd_full.5} parent=1 // pred_fallthru
      _
    %299 = vsyncpa [#allocation3], 1
    %300 = vsyncpa [#allocation5], 1

// kernel: fwd_full.3
$region0: #{fwd_full.3}
  #allocation0 [shape = 'u32[]', space=smem, size = 0x4, offset = 0x4, fixed_abs, tag = 'smem constant byte address 0x4 - core index']
  #allocation1 [shape = 'u32[144,128]{1,0:T(1,128)}', space=vmem, size = 0x12000, scoped, tag = 'internal scratch']
  %s0 = inlined_call_operand.vmem [shape: f32[16,64], index: 0, kind: input, shape index: {}]
  %s1 = inlined_call_operand.hbm [shape: f32[16,32], index: 1, kind: input, shape index: {}]
  %s2 = inlined_call_operand.hbm [shape: f32[16,128], index: 2, kind: input, shape index: {}]
  %s3 = inlined_call_operand.hbm [shape: f32[64,512], index: 3, kind: input, shape index: {}]
  %s4 = inlined_call_operand.vmem [shape: f32[1,512], index: 4, kind: input, shape index: {}]
  %s5 = inlined_call_operand.hbm [shape: f32[512,128], index: 5, kind: input, shape index: {}]
  %s6 = inlined_call_operand.vmem [shape: f32[1,128], index: 6, kind: input, shape index: {}]
  %s7 = inlined_call_operand.vmem [shape: f32[32,128], index: 7, kind: input, shape index: {}]
  %s8 = inlined_call_operand.hbm [shape: f32[1,128], index: 8, kind: input, shape index: {}]
  %s9 = inlined_call_operand.hbm [shape: f32[128,128], index: 9, kind: input, shape index: {}]
  %s10 = inlined_call_operand.hbm [shape: f32[1,128], index: 10, kind: input, shape index: {}]
  %s11 = inlined_call_operand.hbm [shape: f32[128,1024], index: 11, kind: input, shape index: {}]
  %s12 = inlined_call_operand.hbm [shape: f32[1,1024], index: 12, kind: input, shape index: {}]
  %s13 = inlined_call_operand.hbm [shape: f32[1024,128], index: 13, kind: input, shape index: {}]
  %s14 = inlined_call_operand.hbm [shape: f32[1,128], index: 14, kind: input, shape index: {}]
  %s15 = inlined_call_operand.hbm [shape: f32[128,384], index: 15, kind: input, shape index: {}]
  %s16 = inlined_call_operand.hbm [shape: f32[1,384], index: 16, kind: input, shape index: {}]
  %s17 = inlined_call_operand.vmem [shape: f32[48,128], index: 17, kind: output, shape index: {0}]
  %s18 = inlined_call_operand.vmem [shape: f32[48,384], index: 18, kind: output, shape index: {1}]
  %19 = xla_tuple %s17, %s18
  %s20 = sld [smem:[#allocation0]]
  $region138: #{fwd_full.3} parent=0
    _
  %s22 = ssub.s32 1, %s20
  %s23 = scalar_select 0, %s22, %s20
  $region1: #{fwd_full.3} parent=0
    #allocation2 [shape = 'u8[8192]{0}', space=vmem, size = 0x2000, scoped, tag = 'input window, operand 1, single buffered']
    #allocation3 [shape = 's32[1]{0}', space=sflag, size = 0x4, scoped, tag = 'scoped memory for fwd_full.3']
    #allocation4 [shape = 'u8[8192]{0}', space=vmem, size = 0x2000, scoped, tag = 'input window, operand 2, single buffered']
    #allocation5 [shape = 's32[1]{0}', space=sflag, size = 0x4, scoped, tag = 'scoped memory for fwd_full.3']
    #allocation6 [shape = 'u8[131072]{0}', space=vmem, size = 0x20000, scoped, tag = 'input window, operand 3, single buffered']
    #allocation7 [shape = 'u8[262144]{0}', space=vmem, size = 0x40000, scoped, tag = 'input window, operand 5, single buffered']
    #allocation8 [shape = 's32[1]{0}', space=sflag, size = 0x4, scoped, tag = 'scoped memory for fwd_full.3']
    #allocation9 [shape = 'u8[512]{0}', space=vmem, size = 0x400, scoped, tag = 'input window, operand 8, single buffered']
    #allocation10 [shape = 'u8[65536]{0}', space=vmem, size = 0x10000, scoped, tag = 'input window, operand 9, single buffered']
    #allocation11 [shape = 's32[1]{0}', space=sflag, size = 0x4, scoped, tag = 'scoped memory for fwd_full.3']
    #allocation12 [shape = 'u8[512]{0}', space=vmem, size = 0x400, scoped, tag = 'input window, operand 10, single buffered']
    #allocation13 [shape = 'u8[524288]{0}', space=vmem, size = 0x80000, scoped, tag = 'input window, operand 11, single buffered']
    #allocation14 [shape = 's32[1]{0}', space=sflag, size = 0x4, scoped, tag = 'scoped memory for fwd_full.3']
    #allocation15 [shape = 'u8[4096]{0}', space=vmem, size = 0x1000, scoped, tag = 'input window, operand 12, single buffered']
    #allocation16 [shape = 'u8[524288]{0}', space=vmem, size = 0x80000, scoped, tag = 'input window, operand 13, single buffered']
    #allocation17 [shape = 's32[1]{0}', space=sflag, size = 0x4, scoped, tag = 'scoped memory for fwd_full.3']
    #allocation18 [shape = 'u8[512]{0}', space=vmem, size = 0x400, scoped, tag = 'input window, operand 14, single buffered']
    #allocation19 [shape = 'u8[196608]{0}', space=vmem, size = 0x30000, scoped, tag = 'input window, operand 15, single buffered']
    #allocation20 [shape = 's32[1]{0}', space=sflag, size = 0x4, scoped, tag = 'scoped memory for fwd_full.3']
    #allocation21 [shape = 'u8[1536]{0}', space=vmem, size = 0x800, scoped, tag = 'input window, operand 16, single buffered']
    %24 = vsyncpa [#allocation3], 0
    %25 = vsyncpa [#allocation5], 0
    %26 = vsyncpa [#allocation8], 0
    %27 = vsyncpa [#allocation11], 0
    %28 = vsyncpa [#allocation14], 0
    %29 = vsyncpa [#allocation17], 0
    %30 = vsyncpa [#allocation20], 0
    // Predicated region
    $region2: #{fwd_full.3} parent=1 // pred_check
      _
    $region3: #{fwd_full.3} parent=1 // pred_check_branch
      %32 = sbr.rel (0) target = $region5
    $region4: #{fwd_full.3} parent=1 // pred_region
      _
    $region5: #{fwd_full.3} parent=1 // pred_fallthru
      _
    // Predicated region
    $region6: #{fwd_full.3} parent=1 // pred_check
      _
    $region7: #{fwd_full.3} parent=1 // pred_check_branch
      %34 = sbr.rel (0) target = $region9
    $region8: #{fwd_full.3} parent=1 // pred_region
      %s36 = ssub.s32 256, 256
      %37 = vsyncadd [#allocation3], %s36
      %s38 = sshll.u32 [#allocation2], 4
      %s39 = int_to_ptr.vmem [resolvable:$true] %s38
      %44 = dma.hbm_to_vmem [thread:$0]  %s1, 256, %s39, [#allocation3], 128, 128, 8
    $region9: #{fwd_full.3} parent=1 // pred_fallthru
      _
    // Predicated region
    $region10: #{fwd_full.3} parent=1 // pred_check
      _
    $region11: #{fwd_full.3} parent=1 // pred_check_branch
      %46 = sbr.rel (0) target = $region13
    $region12: #{fwd_full.3} parent=1 // pred_region
      %s48 = ssub.s32 256, 256
      %49 = vsyncadd [#allocation5], %s48
      %s50 = sshll.u32 [#allocation4], 4
      %s51 = int_to_ptr.vmem [resolvable:$true] %s50
      %56 = dma.hbm_to_vmem [thread:$0]  %s2, 256, %s51, [#allocation5], 128, 128, 8
    $region13: #{fwd_full.3} parent=1 // pred_fallthru
      _
    // Predicated region
    $region14: #{fwd_full.3} parent=1 // pred_check
      _
    $region15: #{fwd_full.3} parent=1 // pred_check_branch
      %58 = sbr.rel (0) target = $region17
    $region16: #{fwd_full.3} parent=1 // pred_region
      %s60 = ssub.s32 4096, 4096
      %61 = vsyncadd [#allocation5], %s60
      %s62 = sshll.u32 [#allocation6], 4
      %s63 = int_to_ptr.vmem [resolvable:$true] %s62
      %68 = dma.hbm_to_vmem [thread:$0]  %s3, 4096, %s63, [#allocation5], 512, 512, 32
    $region17: #{fwd_full.3} parent=1 // pred_fallthru
      _
    // Predicated region
    $region18: #{fwd_full.3} parent=1 // pred_check
      _
    $region19: #{fwd_full.3} parent=1 // pred_check_branch
      %70 = sbr.rel (0) target = $region21
    $region20: #{fwd_full.3} parent=1 // pred_region
      _
    $region21: #{fwd_full.3} parent=1 // pred_fallthru
      _
    // Predicated region
    $region22: #{fwd_full.3} parent=1 // pred_check
      _
    $region23: #{fwd_full.3} parent=1 // pred_check_branch
      %72 = sbr.rel (0) target = $region25
    $region24: #{fwd_full.3} parent=1 // pred_region
      %s74 = ssub.s32 8192, 8192
      %75 = vsyncadd [#allocation8], %s74
      %s76 = sshll.u32 [#allocation7], 4
      %s77 = int_to_ptr.vmem [resolvable:$true] %s76
      %82 = dma.hbm_to_vmem [thread:$0]  %s5, 8192, %s77, [#allocation8], 128, 128, 8
    $region25: #{fwd_full.3} parent=1 // pred_fallthru
      _
    // Predicated region
    $region26: #{fwd_full.3} parent=1 // pred_check
      _
    $region27: #{fwd_full.3} parent=1 // pred_check_branch
      %84 = sbr.rel (0) target = $region29
    $region28: #{fwd_full.3} parent=1 // pred_region
      _
    $region29: #{fwd_full.3} parent=1 // pred_fallthru
      _
    // Predicated region
    $region30: #{fwd_full.3} parent=1 // pred_check
      _
    $region31: #{fwd_full.3} parent=1 // pred_check_branch
      %86 = sbr.rel (0) target = $region33
    $region32: #{fwd_full.3} parent=1 // pred_region
      _
    $region33: #{fwd_full.3} parent=1 // pred_fallthru
      _
    // Predicated region
    $region34: #{fwd_full.3} parent=1 // pred_check
      _
    $region35: #{fwd_full.3} parent=1 // pred_check_branch
      %88 = sbr.rel (0) target = $region37
    $region36: #{fwd_full.3} parent=1 // pred_region
      %s90 = ssub.s32 16, 16
      %91 = vsyncadd [#allocation8], %s90
      %s93 = sshll.u32 [#allocation9], 4
      %s94 = int_to_ptr.vmem [resolvable:$true] %s93
      %96 = dma.hbm_to_vmem [thread:$0]  %s8, 16, %s94, [#allocation8]
    $region37: #{fwd_full.3} parent=1 // pred_fallthru
      _
    // Predicated region
    $region38: #{fwd_full.3} parent=1 // pred_check
      _
    $region39: #{fwd_full.3} parent=1 // pred_check_branch
      %98 = sbr.rel (0) target = $region41
    $region40: #{fwd_full.3} parent=1 // pred_region
      %s100 = ssub.s32 2048, 2048
      %101 = vsyncadd [#allocation11], %s100
      %s102 = sshll.u32 [#allocation10], 4
      %s103 = int_to_ptr.vmem [resolvable:$true] %s102
      %108 = dma.hbm_to_vmem [thread:$0]  %s9, 2048, %s103, [#allocation11], 128, 128, 8
    $region41: #{fwd_full.3} parent=1 // pred_fallthru
      _
    // Predicated region
    $region42: #{fwd_full.3} parent=1 // pred_check
      _
    $region43: #{fwd_full.3} parent=1 // pred_check_branch
      %110 = sbr.rel (0) target = $region45
    $region44: #{fwd_full.3} parent=1 // pred_region
      %s112 = ssub.s32 16, 16
      %113 = vsyncadd [#allocation11], %s112
      %s115 = sshll.u32 [#allocation12], 4
      %s116 = int_to_ptr.vmem [resolvable:$true] %s115
      %118 = dma.hbm_to_vmem [thread:$0]  %s10, 16, %s116, [#allocation11]
    $region45: #{fwd_full.3} parent=1 // pred_fallthru
      _
    // Predicated region
    $region46: #{fwd_full.3} parent=1 // pred_check
      _
    $region47: #{fwd_full.3} parent=1 // pred_check_branch
      %120 = sbr.rel (0) target = $region49
    $region48: #{fwd_full.3} parent=1 // pred_region
      %s122 = ssub.s32 16384, 16384
      %123 = vsyncadd [#allocation14], %s122
      %s124 = sshll.u32 [#allocation13], 4
      %s125 = int_to_ptr.vmem [resolvable:$true] %s124
      %130 = dma.hbm_to_vmem [thread:$0]  %s11, 16384, %s125, [#allocation14], 1024, 1024, 64
    $region49: #{fwd_full.3} parent=1 // pred_fallthru
      _
    // Predicated region
    $region50: #{fwd_full.3} parent=1 // pred_check
      _
    $region51: #{fwd_full.3} parent=1 // pred_check_branch
      %132 = sbr.rel (0) target = $region53
    $region52: #{fwd_full.3} parent=1 // pred_region
      %s134 = ssub.s32 128, 128
      %135 = vsyncadd [#allocation14], %s134
      %s137 = sshll.u32 [#allocation15], 4
      %s138 = int_to_ptr.vmem [resolvable:$true] %s137
      %140 = dma.hbm_to_vmem [thread:$0]  %s12, 128, %s138, [#allocation14]
    $region53: #{fwd_full.3} parent=1 // pred_fallthru
      _
    // Predicated region
    $region54: #{fwd_full.3} parent=1 // pred_check
      _
    $region55: #{fwd_full.3} parent=1 // pred_check_branch
      %142 = sbr.rel (0) target = $region57
    $region56: #{fwd_full.3} parent=1 // pred_region
      %s144 = ssub.s32 16384, 16384
      %145 = vsyncadd [#allocation17], %s144
      %s146 = sshll.u32 [#allocation16], 4
      %s147 = int_to_ptr.vmem [resolvable:$true] %s146
      %152 = dma.hbm_to_vmem [thread:$0]  %s13, 16384, %s147, [#allocation17], 128, 128, 8
    $region57: #{fwd_full.3} parent=1 // pred_fallthru
      _
    // Predicated region
    $region58: #{fwd_full.3} parent=1 // pred_check
      _
    $region59: #{fwd_full.3} parent=1 // pred_check_branch
      %154 = sbr.rel (0) target = $region61
    $region60: #{fwd_full.3} parent=1 // pred_region
      %s156 = ssub.s32 16, 16
      %157 = vsyncadd [#allocation17], %s156
      %s159 = sshll.u32 [#allocation18], 4
      %s160 = int_to_ptr.vmem [resolvable:$true] %s159
      %162 = dma.hbm_to_vmem [thread:$0]  %s14, 16, %s160, [#allocation17]
    $region61: #{fwd_full.3} parent=1 // pred_fallthru
      _
    // Predicated region
    $region62: #{fwd_full.3} parent=1 // pred_check
      _
    $region63: #{fwd_full.3} parent=1 // pred_check_branch
      %164 = sbr.rel (0) target = $region65
    $region64: #{fwd_full.3} parent=1 // pred_region
      %s166 = ssub.s32 6144, 6144
      %167 = vsyncadd [#allocation20], %s166
      %s168 = sshll.u32 [#allocation19], 4
      %s169 = int_to_ptr.vmem [resolvable:$true] %s168
      %174 = dma.hbm_to_vmem [thread:$0]  %s15, 6144, %s169, [#allocation20], 384, 384, 24
    $region65: #{fwd_full.3} parent=1 // pred_fallthru
      _
    // Predicated region
    $region66: #{fwd_full.3} parent=1 // pred_check
      _
    $region67: #{fwd_full.3} parent=1 // pred_check_branch
      %176 = sbr.rel (0) target = $region69
    $region68: #{fwd_full.3} parent=1 // pred_region
      %s178 = ssub.s32 48, 48
      %179 = vsyncadd [#allocation20], %s178
      %s181 = sshll.u32 [#allocation21], 4
      %s182 = int_to_ptr.vmem [resolvable:$true] %s181
      %184 = dma.hbm_to_vmem [thread:$0]  %s16, 48, %s182, [#allocation20]
    $region69: #{fwd_full.3} parent=1 // pred_fallthru
      _
    // Predicated region
    $region70: #{fwd_full.3} parent=1 // pred_check
      _
    $region71: #{fwd_full.3} parent=1 // pred_check_branch
      %186 = sbr.rel (0) target = $region73
    $region72: #{fwd_full.3} parent=1 // pred_region
      %187 = dma.done [#allocation3], 256
    $region73: #{fwd_full.3} parent=1 // pred_fallthru
      _
    // Predicated region
    $region74: #{fwd_full.3} parent=1 // pred_check
      _
    $region75: #{fwd_full.3} parent=1 // pred_check_branch
      %189 = sbr.rel (0) target = $region77
    $region76: #{fwd_full.3} parent=1 // pred_region
      %190 = dma.done [#allocation5], 256
    $region77: #{fwd_full.3} parent=1 // pred_fallthru
      _
    // Predicated region
    $region78: #{fwd_full.3} parent=1 // pred_check
      _
    $region79: #{fwd_full.3} parent=1 // pred_check_branch
      %192 = sbr.rel (0) target = $region81
    $region80: #{fwd_full.3} parent=1 // pred_region
      %193 = dma.done [#allocation5], 4096
    $region81: #{fwd_full.3} parent=1 // pred_fallthru
      _
    // Predicated region
    $region82: #{fwd_full.3} parent=1 // pred_check
      _
    $region83: #{fwd_full.3} parent=1 // pred_check_branch
      %195 = sbr.rel (0) target = $region85
    $region84: #{fwd_full.3} parent=1 // pred_region
      %196 = dma.done [#allocation8], 8192
    $region85: #{fwd_full.3} parent=1 // pred_fallthru
      _
    // Predicated region
    $region86: #{fwd_full.3} parent=1 // pred_check
      _
    $region87: #{fwd_full.3} parent=1 // pred_check_branch
      %198 = sbr.rel (0) target = $region89
    $region88: #{fwd_full.3} parent=1 // pred_region
      %199 = dma.done [#allocation8], 16
    $region89: #{fwd_full.3} parent=1 // pred_fallthru
      _
    // Predicated region
    $region90: #{fwd_full.3} parent=1 // pred_check
      _
    $region91: #{fwd_full.3} parent=1 // pred_check_branch
      %201 = sbr.rel (0) target = $region93
    $region92: #{fwd_full.3} parent=1 // pred_region
      %202 = dma.done [#allocation11], 2048
    $region93: #{fwd_full.3} parent=1 // pred_fallthru
      _
    // Predicated region
    $region94: #{fwd_full.3} parent=1 // pred_check
      _
    $region95: #{fwd_full.3} parent=1 // pred_check_branch
      %204 = sbr.rel (0) target = $region97
    $region96: #{fwd_full.3} parent=1 // pred_region
      %205 = dma.done [#allocation11], 16
    $region97: #{fwd_full.3} parent=1 // pred_fallthru
      _
    // Predicated region
    $region98: #{fwd_full.3} parent=1 // pred_check
      _
    $region99: #{fwd_full.3} parent=1 // pred_check_branch
      %207 = sbr.rel (0) target = $region101
    $region100: #{fwd_full.3} parent=1 // pred_region
      %208 = dma.done [#allocation14], 16384
    $region101: #{fwd_full.3} parent=1 // pred_fallthru
      _
    // Predicated region
    $region102: #{fwd_full.3} parent=1 // pred_check
      _
    $region103: #{fwd_full.3} parent=1 // pred_check_branch
      %210 = sbr.rel (0) target = $region105
    $region104: #{fwd_full.3} parent=1 // pred_region
      %211 = dma.done [#allocation14], 128
    $region105: #{fwd_full.3} parent=1 // pred_fallthru
      _
    // Predicated region
    $region106: #{fwd_full.3} parent=1 // pred_check
      _
    $region107: #{fwd_full.3} parent=1 // pred_check_branch
      %213 = sbr.rel (0) target = $region109
    $region108: #{fwd_full.3} parent=1 // pred_region
      %214 = dma.done [#allocation17], 16384
    $region109: #{fwd_full.3} parent=1 // pred_fallthru
      _
    // Predicated region
    $region110: #{fwd_full.3} parent=1 // pred_check
      _
    $region111: #{fwd_full.3} parent=1 // pred_check_branch
      %216 = sbr.rel (0) target = $region113
    $region112: #{fwd_full.3} parent=1 // pred_region
      %217 = dma.done [#allocation17], 16
    $region113: #{fwd_full.3} parent=1 // pred_fallthru
      _
    // Predicated region
    $region114: #{fwd_full.3} parent=1 // pred_check
      _
    $region115: #{fwd_full.3} parent=1 // pred_check_branch
      %219 = sbr.rel (0) target = $region117
    $region116: #{fwd_full.3} parent=1 // pred_region
      %220 = dma.done [#allocation20], 6144
    $region117: #{fwd_full.3} parent=1 // pred_fallthru
      _
    // Predicated region
    $region118: #{fwd_full.3} parent=1 // pred_check
      _
    $region119: #{fwd_full.3} parent=1 // pred_check_branch
      %222 = sbr.rel (0) target = $region121
    $region120: #{fwd_full.3} parent=1 // pred_region
      %223 = dma.done [#allocation20], 48
    $region121: #{fwd_full.3} parent=1 // pred_fallthru
      _
    %v224 = vld [vmem:[%s0] sm:$0xff]
    %v225 = vld [vmem:[%s0 + $0x8] sm:$0xff]
    %v226 = vld [vmem:[#allocation6] sm:$0xff]
    %v227 = vld [vmem:[#allocation6 + $0x8] sm:$0xff]
    %v228 = vld [vmem:[#allocation6 + $0x10] sm:$0xff]
    %v229 = vld [vmem:[#allocation6 + $0x18] sm:$0xff]
    %v230 = vld [vmem:[#allocation6 + $0x20] sm:$0xff]
    %v231 = vld [vmem:[#allocation6 + $0x28] sm:$0xff]
    %v232 = vld [vmem:[#allocation6 + $0x30] sm:$0xff]
    %v233 = vld [vmem:[#allocation6 + $0x38] sm:$0xff]
    %v234 = vld [vmem:[#allocation6 + $0x40] sm:$0xff]
    %v235 = vld [vmem:[#allocation6 + $0x48] sm:$0xff]
    %v236 = vld [vmem:[#allocation6 + $0x50] sm:$0xff]
    %v237 = vld [vmem:[#allocation6 + $0x58] sm:$0xff]
    %v238 = vld [vmem:[#allocation6 + $0x60] sm:$0xff]
    %v239 = vld [vmem:[#allocation6 + $0x68] sm:$0xff]
    %v240 = vld [vmem:[#allocation6 + $0x70] sm:$0xff]
    %v241 = vld [vmem:[#allocation6 + $0x78] sm:$0xff]
    %v242 = vld [vmem:[#allocation6 + $0x80] sm:$0xff]
    %v243 = vld [vmem:[#allocation6 + $0x88] sm:$0xff]
    %v244 = vld [vmem:[#allocation6 + $0x90] sm:$0xff]
    %v245 = vld [vmem:[#allocation6 + $0x98] sm:$0xff]
    %v246 = vld [vmem:[#allocation6 + $0xa0] sm:$0xff]
    %v247 = vld [vmem:[#allocation6 + $0xa8] sm:$0xff]
    %v248 = vld [vmem:[#allocation6 + $0xb0] sm:$0xff]
    %v249 = vld [vmem:[#allocation6 + $0xb8] sm:$0xff]
    %v250 = vld [vmem:[#allocation6 + $0xc0] sm:$0xff]
    %v251 = vld [vmem:[#allocation6 + $0xc8] sm:$0xff]
    %v252 = vld [vmem:[#allocation6 + $0xd0] sm:$0xff]
    %v253 = vld [vmem:[#allocation6 + $0xd8] sm:$0xff]
    %v254 = vld [vmem:[#allocation6 + $0xe0] sm:$0xff]
    %v255 = vld [vmem:[#allocation6 + $0xe8] sm:$0xff]
    %v256 = vld [vmem:[#allocation6 + $0xf0] sm:$0xff]
    %v257 = vld [vmem:[#allocation6 + $0xf8] sm:$0xff]
    %v258 = vld [vmem:[%s4] sm:$0xf]
    %v260 = vlaneseq
    %v261 = vshrl.u32 %v260, 7
    %v262 = vsub.s32 0, %v261
    %v263 = vrot.slane %v258, %v262
    %v264 = vlaneseq
    %v265 = vshrl.u32 %v264, 7
    %v266 = vsub.s32 1, %v265
    %v267 = vrot.slane %v258, %v266
    %v268 = vlaneseq
    %v269 = vshrl.u32 %v268, 7
    %v270 = vsub.s32 2, %v269
    %v271 = vrot.slane %v258, %v270
    %v272 = vlaneseq
    %v273 = vshrl.u32 %v272, 7
    %v274 = vsub.s32 3, %v273
    %v275 = vrot.slane %v258, %v274
    %vm280 = vcmask 523264
    %v282 = vsel %vm280, %v224, 0
    %v285 = vsel %vm280, %v225, 0
    %287 = vmatprep.subr.mxu0 0.0
    %288 = vmatpush1.msra.mxu0 0.0
    %289 = vmatprep.subr.mxu0 0.0
    %290 = vmatpush1.msra.mxu0 0.0
    %291 = vmatprep.subr.mxu0 0.0
    %292 = vmatpush1.msra.mxu0 0.0
    %293 = vmatprep.subr.mxu0 0.0
    %294 = vmatpush1.msra.mxu0 0.0
    %295 = vmatprep.subr.mxu0 0.0
    %296 = vmatpush1.msra.mxu0 0.0
    %297 = vmatprep.subr.mxu0 0.0
    %298 = vmatpush1.msra.mxu0 0.0
    %299 = vmatprep.subr.mxu0 0.0
    %300 = vmatpush1.msra.mxu0 0.0
    %301 = vmatprep.subr.mxu0 0.0
    %302 = vmatpush1.msra.mxu0 0.0
    %303 = vmatprep.subr.mxu0 %v255
    %304 = vmatpush1.msra.mxu0 %v254
    %305 = vmatprep.subr.mxu0 %v251
    %306 = vmatpush1.msra.mxu0 %v250
    %307 = vmatprep.subr.mxu0 %v247
    %308 = vmatpush1.msra.mxu0 %v246
    %309 = vmatprep.subr.mxu0 %v243
    %310 = vmatpush1.msra.mxu0 %v242
    %311 = vmatprep.subr.mxu0 %v239
    %312 = vmatpush1.msra.mxu0 %v238
    %313 = vmatprep.subr.mxu0 %v235
    %314 = vmatpush1.msra.mxu0 %v234
    %315 = vmatprep.subr.mxu0 %v231
    %316 = vmatpush1.msra.mxu0 %v230
    %317 = vmatprep.subr.mxu0 %v227
    %318 = vmatpush1.msra.mxu0 %v226
    %319 = vmatprep.subr.mxu0 0.0
    %320 = vmatpush2.msra.mxu0 0.0
    %321 = vmatprep.subr.mxu0 0.0
    %322 = vmatpush2.msra.mxu0 0.0
    %323 = vmatprep.subr.mxu0 0.0
    %324 = vmatpush2.msra.mxu0 0.0
    %325 = vmatprep.subr.mxu0 0.0
    %326 = vmatpush2.msra.mxu0 0.0
    %327 = vmatprep.subr.mxu0 0.0
    %328 = vmatpush2.msra.mxu0 0.0
    %329 = vmatprep.subr.mxu0 0.0
    %330 = vmatpush2.msra.mxu0 0.0
    %331 = vmatprep.subr.mxu0 0.0
    %332 = vmatpush2.msra.mxu0 0.0
    %333 = vmatprep.subr.mxu0 0.0
    %334 = vmatpush2.msra.mxu0 0.0
    %335 = vmatprep.subr.mxu0 0.0
    %336 = vmatpush2.msra.mxu0 0.0
    %337 = vmatprep.subr.mxu0 0.0
    %338 = vmatpush2.msra.mxu0 0.0
    %339 = vmatprep.subr.mxu0 0.0
    %340 = vmatpush2.msra.mxu0 0.0
    %341 = vmatprep.subr.mxu0 0.0
    %342 = vmatpush2.msra.mxu0 0.0
    %343 = vmatprep.subr.mxu0 0.0
    %344 = vmatpush2.msra.mxu0 0.0
    %345 = vmatprep.subr.mxu0 0.0
    %346 = vmatpush2.msra.mxu0 0.0
    %347 = vmatprep.subr.mxu0 0.0
    %348 = vmatpush2.msra.mxu0 0.0
    %349 = vmatprep.subr.mxu0 0.0
    %350 = vmatpush2.msra.mxu0 0.0
    %351 = vmatprep.mubr.f32.mxu0 0.0
    %352 = vmatmul.mubr.f32.gmra.mxu0 %v282
    %v353 = vpop.f32.mrf.mxu0
    %v354 = vadd.f32 %v263, %v353
    %v355 = vpop.f32.mrf.mxu0
    %v356 = vadd.f32 %v267, %v355
    %357 = vmatprep.mubr.f32.mxu0 0.0
    %358 = vmatmul.mubr.f32.gmra.mxu0 %v285
    %v359 = vpop.f32.mrf.mxu0
    %v360 = vadd.f32 %v263, %v359
    %v361 = vpop.f32.mrf.mxu0
    %v362 = vadd.f32 %v267, %v361
    %363 = vdwg.mxu0
    %364 = vmatprep.subr.mxu0 0.0
    %365 = vmatpush1.msra.mxu0 0.0
    %366 = vmatprep.subr.mxu0 0.0
    %367 = vmatpush1.msra.mxu0 0.0
    %368 = vmatprep.subr.mxu0 0.0
    %369 = vmatpush1.msra.mxu0 0.0
    %370 = vmatprep.subr.mxu0 0.0
    %371 = vmatpush1.msra.mxu0 0.0
    %372 = vmatprep.subr.mxu0 0.0
    %373 = vmatpush1.msra.mxu0 0.0
    %374 = vmatprep.subr.mxu0 0.0
    %375 = vmatpush1.msra.mxu0 0.0
    %376 = vmatprep.subr.mxu0 0.0
    %377 = vmatpush1.msra.mxu0 0.0
    %378 = vmatprep.subr.mxu0 0.0
    %379 = vmatpush1.msra.mxu0 0.0
    %380 = vmatprep.subr.mxu0 %v257
    %381 = vmatpush1.msra.mxu0 %v256
    %382 = vmatprep.subr.mxu0 %v253
    %383 = vmatpush1.msra.mxu0 %v252
    %384 = vmatprep.subr.mxu0 %v249
    %385 = vmatpush1.msra.mxu0 %v248
    %386 = vmatprep.subr.mxu0 %v245
    %387 = vmatpush1.msra.mxu0 %v244
    %388 = vmatprep.subr.mxu0 %v241
    %389 = vmatpush1.msra.mxu0 %v240
    %390 = vmatprep.subr.mxu0 %v237
    %391 = vmatpush1.msra.mxu0 %v236
    %392 = vmatprep.subr.mxu0 %v233
    %393 = vmatpush1.msra.mxu0 %v232
    %394 = vmatprep.subr.mxu0 %v229
    %395 = vmatpush1.msra.mxu0 %v228
    %396 = vmatprep.subr.mxu0 0.0
    %397 = vmatpush2.msra.mxu0 0.0
    %398 = vmatprep.subr.mxu0 0.0
    %399 = vmatpush2.msra.mxu0 0.0
    %400 = vmatprep.subr.mxu0 0.0
    %401 = vmatpush2.msra.mxu0 0.0
    %402 = vmatprep.subr.mxu0 0.0
    %403 = vmatpush2.msra.mxu0 0.0
    %404 = vmatprep.subr.mxu0 0.0
    %405 = vmatpush2.msra.mxu0 0.0
    %406 = vmatprep.subr.mxu0 0.0
    %407 = vmatpush2.msra.mxu0 0.0
    %408 = vmatprep.subr.mxu0 0.0
    %409 = vmatpush2.msra.mxu0 0.0
    %410 = vmatprep.subr.mxu0 0.0
    %411 = vmatpush2.msra.mxu0 0.0
    %412 = vmatprep.subr.mxu0 0.0
    %413 = vmatpush2.msra.mxu0 0.0
    %414 = vmatprep.subr.mxu0 0.0
    %415 = vmatpush2.msra.mxu0 0.0
    %416 = vmatprep.subr.mxu0 0.0
    %417 = vmatpush2.msra.mxu0 0.0
    %418 = vmatprep.subr.mxu0 0.0
    %419 = vmatpush2.msra.mxu0 0.0
    %420 = vmatprep.subr.mxu0 0.0
    %421 = vmatpush2.msra.mxu0 0.0
    %422 = vmatprep.subr.mxu0 0.0
    %423 = vmatpush2.msra.mxu0 0.0
    %424 = vmatprep.subr.mxu0 0.0
    %425 = vmatpush2.msra.mxu0 0.0
    %426 = vmatprep.subr.mxu0 0.0
    %427 = vmatpush2.msra.mxu0 0.0
    %428 = vmatprep.mubr.f32.mxu0 0.0
    %429 = vmatmul.mubr.f32.gmra.mxu0 %v282
    %v430 = vpop.f32.mrf.mxu0
    %v431 = vadd.f32 %v271, %v430
    %v432 = vpop.f32.mrf.mxu0
    %v433 = vadd.f32 %v275, %v432
    %434 = vmatprep.mubr.f32.mxu0 0.0
    %435 = vmatmul.mubr.f32.gmra.mxu0 %v285
    %v436 = vpop.f32.mrf.mxu0
    %v437 = vadd.f32 %v271, %v436
    %v438 = vpop.f32.mrf.mxu0
    %v439 = vadd.f32 %v275, %v438
    %440 = vdwg.mxu0
    %v441 = vmax.f32 %v354, 0.0
    %v442 = vmax.f32 %v356, 0.0
    %v443 = vmax.f32 %v431, 0.0
    %v444 = vmax.f32 %v433, 0.0
    %v445 = vmax.f32 %v360, 0.0
    %v446 = vmax.f32 %v362, 0.0
    %v447 = vmax.f32 %v437, 0.0
    %v448 = vmax.f32 %v439, 0.0
    %v449 = vld [vmem:[#allocation7] sm:$0xff]
    %v450 = vld [vmem:[#allocation7 + $0x8] sm:$0xff]
    %v451 = vld [vmem:[#allocation7 + $0x10] sm:$0xff]
    %v452 = vld [vmem:[#allocation7 + $0x18] sm:$0xff]
    %v453 = vld [vmem:[#allocation7 + $0x20] sm:$0xff]
    %v454 = vld [vmem:[#allocation7 + $0x28] sm:$0xff]
    %v455 = vld [vmem:[#allocation7 + $0x30] sm:$0xff]
    %v456 = vld [vmem:[#allocation7 + $0x38] sm:$0xff]
    %v457 = vld [vmem:[#allocation7 + $0x40] sm:$0xff]
    %v458 = vld [vmem:[#allocation7 + $0x48] sm:$0xff]
    %v459 = vld [vmem:[#allocation7 + $0x50] sm:$0xff]
    %v460 = vld [vmem:[#allocation7 + $0x58] sm:$0xff]
    %v461 = vld [vmem:[#allocation7 + $0x60] sm:$0xff]
    %v462 = vld [vmem:[#allocation7 + $0x68] sm:$0xff]
    %v463 = vld [vmem:[#allocation7 + $0x70] sm:$0xff]
    %v464 = vld [vmem:[#allocation7 + $0x78] sm:$0xff]
    %v465 = vld [vmem:[#allocation7 + $0x80] sm:$0xff]
    %v466 = vld [vmem:[#allocation7 + $0x88] sm:$0xff]
    %v467 = vld [vmem:[#allocation7 + $0x90] sm:$0xff]
    %v468 = vld [vmem:[#allocation7 + $0x98] sm:$0xff]
    %v469 = vld [vmem:[#allocation7 + $0xa0] sm:$0xff]
    %v470 = vld [vmem:[#allocation7 + $0xa8] sm:$0xff]
    %v471 = vld [vmem:[#allocation7 + $0xb0] sm:$0xff]
    %v472 = vld [vmem:[#allocation7 + $0xb8] sm:$0xff]
    %v473 = vld [vmem:[#allocation7 + $0xc0] sm:$0xff]
    %v474 = vld [vmem:[#allocation7 + $0xc8] sm:$0xff]
    %v475 = vld [vmem:[#allocation7 + $0xd0] sm:$0xff]
    %v476 = vld [vmem:[#allocation7 + $0xd8] sm:$0xff]
    %v477 = vld [vmem:[#allocation7 + $0xe0] sm:$0xff]
    %v478 = vld [vmem:[#allocation7 + $0xe8] sm:$0xff]
    %v479 = vld [vmem:[#allocation7 + $0xf0] sm:$0xff]
    %v480 = vld [vmem:[#allocation7 + $0xf8] sm:$0xff]
    %v481 = vld [vmem:[#allocation7 + $0x100] sm:$0xff]
    %v482 = vld [vmem:[#allocation7 + $0x108] sm:$0xff]
    %v483 = vld [vmem:[#allocation7 + $0x110] sm:$0xff]
    %v484 = vld [vmem:[#allocation7 + $0x118] sm:$0xff]
    %v485 = vld [vmem:[#allocation7 + $0x120] sm:$0xff]
    %v486 = vld [vmem:[#allocation7 + $0x128] sm:$0xff]
    %v487 = vld [vmem:[#allocation7 + $0x130] sm:$0xff]
    %v488 = vld [vmem:[#allocation7 + $0x138] sm:$0xff]
    %v489 = vld [vmem:[#allocation7 + $0x140] sm:$0xff]
    %v490 = vld [vmem:[#allocation7 + $0x148] sm:$0xff]
    %v491 = vld [vmem:[#allocation7 + $0x150] sm:$0xff]
    %v492 = vld [vmem:[#allocation7 + $0x158] sm:$0xff]
    %v493 = vld [vmem:[#allocation7 + $0x160] sm:$0xff]
    %v494 = vld [vmem:[#allocation7 + $0x168] sm:$0xff]
    %v495 = vld [vmem:[#allocation7 + $0x170] sm:$0xff]
    %v496 = vld [vmem:[#allocation7 + $0x178] sm:$0xff]
    %v497 = vld [vmem:[#allocation7 + $0x180] sm:$0xff]
    %v498 = vld [vmem:[#allocation7 + $0x188] sm:$0xff]
    %v499 = vld [vmem:[#allocation7 + $0x190] sm:$0xff]
    %v500 = vld [vmem:[#allocation7 + $0x198] sm:$0xff]
    %v501 = vld [vmem:[#allocation7 + $0x1a0] sm:$0xff]
    %v502 = vld [vmem:[#allocation7 + $0x1a8] sm:$0xff]
    %v503 = vld [vmem:[#allocation7 + $0x1b0] sm:$0xff]
    %v504 = vld [vmem:[#allocation7 + $0x1b8] sm:$0xff]
    %v505 = vld [vmem:[#allocation7 + $0x1c0] sm:$0xff]
    %v506 = vld [vmem:[#allocation7 + $0x1c8] sm:$0xff]
    %v507 = vld [vmem:[#allocation7 + $0x1d0] sm:$0xff]
    %v508 = vld [vmem:[#allocation7 + $0x1d8] sm:$0xff]
    %v509 = vld [vmem:[#allocation7 + $0x1e0] sm:$0xff]
    %v510 = vld [vmem:[#allocation7 + $0x1e8] sm:$0xff]
    %v511 = vld [vmem:[#allocation7 + $0x1f0] sm:$0xff]
    %v512 = vld [vmem:[#allocation7 + $0x1f8] sm:$0xff]
    %v513 = vld [vmem:[%s6] sm:$0x1]
    %v515 = vlaneseq
    %v516 = vshrl.u32 %v515, 7
    %v517 = vsub.s32 0, %v516
    %v518 = vrot.slane %v513, %v517
    %520 = vmatprep.subr.mxu0 0.0
    %521 = vmatpush1.msra.mxu0 %v464
    %522 = vmatprep.subr.mxu0 0.0
    %523 = vmatpush1.msra.mxu0 %v463
    %524 = vmatprep.subr.mxu0 0.0
    %525 = vmatpush1.msra.mxu0 %v462
    %526 = vmatprep.subr.mxu0 0.0
    %527 = vmatpush1.msra.mxu0 %v461
    %528 = vmatprep.subr.mxu0 0.0
    %529 = vmatpush1.msra.mxu0 %v460
    %530 = vmatprep.subr.mxu0 0.0
    %531 = vmatpush1.msra.mxu0 %v459
    %532 = vmatprep.subr.mxu0 0.0
    %533 = vmatpush1.msra.mxu0 %v458
    %534 = vmatprep.subr.mxu0 0.0
    %535 = vmatpush1.msra.mxu0 %v457
    %536 = vmatprep.subr.mxu0 0.0
    %537 = vmatpush1.msra.mxu0 %v456
    %538 = vmatprep.subr.mxu0 0.0
    %539 = vmatpush1.msra.mxu0 %v455
    %540 = vmatprep.subr.mxu0 0.0
    %541 = vmatpush1.msra.mxu0 %v454
    %542 = vmatprep.subr.mxu0 0.0
    %543 = vmatpush1.msra.mxu0 %v453
    %544 = vmatprep.subr.mxu0 0.0
    %545 = vmatpush1.msra.mxu0 %v452
    %546 = vmatprep.subr.mxu0 0.0
    %547 = vmatpush1.msra.mxu0 %v451
    %548 = vmatprep.subr.mxu0 0.0
    %549 = vmatpush1.msra.mxu0 %v450
    %550 = vmatprep.subr.mxu0 0.0
    %551 = vmatpush1.msra.mxu0 %v449
    %552 = vmatprep.subr.mxu0 0.0
    %553 = vmatpush2.msra.mxu0 %v480
    %554 = vmatprep.subr.mxu0 0.0
    %555 = vmatpush2.msra.mxu0 %v479
    %556 = vmatprep.subr.mxu0 0.0
    %557 = vmatpush2.msra.mxu0 %v478
    %558 = vmatprep.subr.mxu0 0.0
    %559 = vmatpush2.msra.mxu0 %v477
    %560 = vmatprep.subr.mxu0 0.0
    %561 = vmatpush2.msra.mxu0 %v476
    %562 = vmatprep.subr.mxu0 0.0
    %563 = vmatpush2.msra.mxu0 %v475
    %564 = vmatprep.subr.mxu0 0.0
    %565 = vmatpush2.msra.mxu0 %v474
    %566 = vmatprep.subr.mxu0 0.0
    %567 = vmatpush2.msra.mxu0 %v473
    %568 = vmatprep.subr.mxu0 0.0
    %569 = vmatpush2.msra.mxu0 %v472
    %570 = vmatprep.subr.mxu0 0.0
    %571 = vmatpush2.msra.mxu0 %v471
    %572 = vmatprep.subr.mxu0 0.0
    %573 = vmatpush2.msra.mxu0 %v470
    %574 = vmatprep.subr.mxu0 0.0
    %575 = vmatpush2.msra.mxu0 %v469
    %576 = vmatprep.subr.mxu0 0.0
    %577 = vmatpush2.msra.mxu0 %v468
    %578 = vmatprep.subr.mxu0 0.0
    %579 = vmatpush2.msra.mxu0 %v467
    %580 = vmatprep.subr.mxu0 0.0
    %581 = vmatpush2.msra.mxu0 %v466
    %582 = vmatprep.subr.mxu0 0.0
    %583 = vmatpush2.msra.mxu0 %v465
    %584 = vmatprep.mubr.f32.mxu0 %v442
    %585 = vmatmul.mubr.f32.gmra.mxu0 %v441
    %v586 = vpop.f32.mrf.mxu0
    %v587 = vadd.f32 %v518, %v586
    %v588 = vpop.f32.mrf.mxu0
    %589 = vmatprep.mubr.f32.mxu0 %v446
    %590 = vmatmul.mubr.f32.gmra.mxu0 %v445
    %v591 = vpop.f32.mrf.mxu0
    %v592 = vadd.f32 %v518, %v591
    %v593 = vpop.f32.mrf.mxu0
    %594 = vdwg.mxu0
    %595 = vmatprep.subr.mxu0 0.0
    %596 = vmatpush1.msra.mxu0 %v496
    %597 = vmatprep.subr.mxu0 0.0
    %598 = vmatpush1.msra.mxu0 %v495
    %599 = vmatprep.subr.mxu0 0.0
    %600 = vmatpush1.msra.mxu0 %v494
    %601 = vmatprep.subr.mxu0 0.0
    %602 = vmatpush1.msra.mxu0 %v493
    %603 = vmatprep.subr.mxu0 0.0
    %604 = vmatpush1.msra.mxu0 %v492
    %605 = vmatprep.subr.mxu0 0.0
    %606 = vmatpush1.msra.mxu0 %v491
    %607 = vmatprep.subr.mxu0 0.0
    %608 = vmatpush1.msra.mxu0 %v490
    %609 = vmatprep.subr.mxu0 0.0
    %610 = vmatpush1.msra.mxu0 %v489
    %611 = vmatprep.subr.mxu0 0.0
    %612 = vmatpush1.msra.mxu0 %v488
    %613 = vmatprep.subr.mxu0 0.0
    %614 = vmatpush1.msra.mxu0 %v487
    %615 = vmatprep.subr.mxu0 0.0
    %616 = vmatpush1.msra.mxu0 %v486
    %617 = vmatprep.subr.mxu0 0.0
    %618 = vmatpush1.msra.mxu0 %v485
    %619 = vmatprep.subr.mxu0 0.0
    %620 = vmatpush1.msra.mxu0 %v484
    %621 = vmatprep.subr.mxu0 0.0
    %622 = vmatpush1.msra.mxu0 %v483
    %623 = vmatprep.subr.mxu0 0.0
    %624 = vmatpush1.msra.mxu0 %v482
    %625 = vmatprep.subr.mxu0 0.0
    %626 = vmatpush1.msra.mxu0 %v481
    %627 = vmatprep.subr.mxu0 0.0
    %628 = vmatpush2.msra.mxu0 %v512
    %629 = vmatprep.subr.mxu0 0.0
    %630 = vmatpush2.msra.mxu0 %v511
    %631 = vmatprep.subr.mxu0 0.0
    %632 = vmatpush2.msra.mxu0 %v510
    %633 = vmatprep.subr.mxu0 0.0
    %634 = vmatpush2.msra.mxu0 %v509
    %635 = vmatprep.subr.mxu0 0.0
    %636 = vmatpush2.msra.mxu0 %v508
    %637 = vmatprep.subr.mxu0 0.0
    %638 = vmatpush2.msra.mxu0 %v507
    %639 = vmatprep.subr.mxu0 0.0
    %640 = vmatpush2.msra.mxu0 %v506
    %641 = vmatprep.subr.mxu0 0.0
    %642 = vmatpush2.msra.mxu0 %v505
    %643 = vmatprep.subr.mxu0 0.0
    %644 = vmatpush2.msra.mxu0 %v504
    %645 = vmatprep.subr.mxu0 0.0
    %646 = vmatpush2.msra.mxu0 %v503
    %647 = vmatprep.subr.mxu0 0.0
    %648 = vmatpush2.msra.mxu0 %v502
    %649 = vmatprep.subr.mxu0 0.0
    %650 = vmatpush2.msra.mxu0 %v501
    %651 = vmatprep.subr.mxu0 0.0
    %652 = vmatpush2.msra.mxu0 %v500
    %653 = vmatprep.subr.mxu0 0.0
    %654 = vmatpush2.msra.mxu0 %v499
    %655 = vmatprep.subr.mxu0 0.0
    %656 = vmatpush2.msra.mxu0 %v498
    %657 = vmatprep.subr.mxu0 0.0
    %658 = vmatpush2.msra.mxu0 %v497
    %659 = vmatprep.mubr.f32.mxu0 %v444
    %660 = vmatmul.mubr.f32.gmra.mxu0 %v443
    %v661 = vpop.f32.mrf.mxu0
    %v662 = vadd.f32 %v587, %v661
    %v663 = vpop.f32.mrf.mxu0
    %664 = vmatprep.mubr.f32.mxu0 %v448
    %665 = vmatmul.mubr.f32.gmra.mxu0 %v447
    %v666 = vpop.f32.mrf.mxu0
    %v667 = vadd.f32 %v592, %v666
    %v668 = vpop.f32.mrf.mxu0
    %669 = vdwg.mxu0
    %v670 = vld [vmem:[#allocation2] sm:$0xff]
    %v671 = vld [vmem:[#allocation2 + $0x8] sm:$0xff]
    %v672 = vld [vmem:[%s7] sm:$0xff]
    %v673 = vld [vmem:[%s7 + $0x8] sm:$0xff]
    %v674 = vld [vmem:[%s7 + $0x10] sm:$0xff]
    %v675 = vld [vmem:[%s7 + $0x18] sm:$0xff]
    %v676 = vld [vmem:[#allocation9] sm:$0x1]
    %v678 = vlaneseq
    %v679 = vshrl.u32 %v678, 7
    %v680 = vsub.s32 0, %v679
    %v681 = vrot.slane %v676, %v680
    %vm683 = vcmask 261120
    %v685 = vsel %vm683, %v670, 0
    %v688 = vsel %vm683, %v671, 0
    %690 = vmatprep.subr.mxu0 0.0
    %691 = vmatpush1.msra.mxu0 0.0
    %692 = vmatprep.subr.mxu0 0.0
    %693 = vmatpush1.msra.mxu0 0.0
    %694 = vmatprep.subr.mxu0 0.0
    %695 = vmatpush1.msra.mxu0 0.0
    %696 = vmatprep.subr.mxu0 0.0
    %697 = vmatpush1.msra.mxu0 0.0
    %698 = vmatprep.subr.mxu0 0.0
    %699 = vmatpush1.msra.mxu0 0.0
    %700 = vmatprep.subr.mxu0 0.0
    %701 = vmatpush1.msra.mxu0 0.0
    %702 = vmatprep.subr.mxu0 0.0
    %703 = vmatpush1.msra.mxu0 0.0
    %704 = vmatprep.subr.mxu0 0.0
    %705 = vmatpush1.msra.mxu0 0.0
    %706 = vmatprep.subr.mxu0 0.0
    %707 = vmatpush1.msra.mxu0 0.0
    %708 = vmatprep.subr.mxu0 0.0
    %709 = vmatpush1.msra.mxu0 0.0
    %710 = vmatprep.subr.mxu0 0.0
    %711 = vmatpush1.msra.mxu0 0.0
    %712 = vmatprep.subr.mxu0 0.0
    %713 = vmatpush1.msra.mxu0 0.0
    %714 = vmatprep.subr.mxu0 0.0
    %715 = vmatpush1.msra.mxu0 %v675
    %716 = vmatprep.subr.mxu0 0.0
    %717 = vmatpush1.msra.mxu0 %v674
    %718 = vmatprep.subr.mxu0 0.0
    %719 = vmatpush1.msra.mxu0 %v673
    %720 = vmatprep.subr.mxu0 0.0
    %721 = vmatpush1.msra.mxu0 %v672
    %722 = vmatprep.subr.mxu0 0.0
    %723 = vmatpush2.msra.mxu0 0.0
    %724 = vmatprep.subr.mxu0 0.0
    %725 = vmatpush2.msra.mxu0 0.0
    %726 = vmatprep.subr.mxu0 0.0
    %727 = vmatpush2.msra.mxu0 0.0
    %728 = vmatprep.subr.mxu0 0.0
    %729 = vmatpush2.msra.mxu0 0.0
    %730 = vmatprep.subr.mxu0 0.0
    %731 = vmatpush2.msra.mxu0 0.0
    %732 = vmatprep.subr.mxu0 0.0
    %733 = vmatpush2.msra.mxu0 0.0
    %734 = vmatprep.subr.mxu0 0.0
    %735 = vmatpush2.msra.mxu0 0.0
    %736 = vmatprep.subr.mxu0 0.0
    %737 = vmatpush2.msra.mxu0 0.0
    %738 = vmatprep.subr.mxu0 0.0
    %739 = vmatpush2.msra.mxu0 0.0
    %740 = vmatprep.subr.mxu0 0.0
    %741 = vmatpush2.msra.mxu0 0.0
    %742 = vmatprep.subr.mxu0 0.0
    %743 = vmatpush2.msra.mxu0 0.0
    %744 = vmatprep.subr.mxu0 0.0
    %745 = vmatpush2.msra.mxu0 0.0
    %746 = vmatprep.subr.mxu0 0.0
    %747 = vmatpush2.msra.mxu0 0.0
    %748 = vmatprep.subr.mxu0 0.0
    %749 = vmatpush2.msra.mxu0 0.0
    %750 = vmatprep.subr.mxu0 0.0
    %751 = vmatpush2.msra.mxu0 0.0
    %752 = vmatprep.subr.mxu0 0.0
    %753 = vmatpush2.msra.mxu0 0.0
    %754 = vmatprep.mubr.f32.mxu0 0.0
    %755 = vmatmul.mubr.f32.gmra.mxu0 %v685
    %v756 = vpop.f32.mrf.mxu0
    %v757 = vadd.f32 %v681, %v756
    %v758 = vpop.f32.mrf.mxu0
    %759 = vmatprep.mubr.f32.mxu0 0.0
    %760 = vmatmul.mubr.f32.gmra.mxu0 %v688
    %v761 = vpop.f32.mrf.mxu0
    %v762 = vadd.f32 %v681, %v761
    %v763 = vpop.f32.mrf.mxu0
    %764 = vdwg.mxu0
    %v765 = vmax.f32 %v757, 0.0
    %v766 = vmax.f32 %v762, 0.0
    %v767 = vld [vmem:[#allocation10] sm:$0xff]
    %v768 = vld [vmem:[#allocation10 + $0x8] sm:$0xff]
    %v769 = vld [vmem:[#allocation10 + $0x10] sm:$0xff]
    %v770 = vld [vmem:[#allocation10 + $0x18] sm:$0xff]
    %v771 = vld [vmem:[#allocation10 + $0x20] sm:$0xff]
    %v772 = vld [vmem:[#allocation10 + $0x28] sm:$0xff]
    %v773 = vld [vmem:[#allocation10 + $0x30] sm:$0xff]
    %v774 = vld [vmem:[#allocation10 + $0x38] sm:$0xff]
    %v775 = vld [vmem:[#allocation10 + $0x40] sm:$0xff]
    %v776 = vld [vmem:[#allocation10 + $0x48] sm:$0xff]
    %v777 = vld [vmem:[#allocation10 + $0x50] sm:$0xff]
    %v778 = vld [vmem:[#allocation10 + $0x58] sm:$0xff]
    %v779 = vld [vmem:[#allocation10 + $0x60] sm:$0xff]
    %v780 = vld [vmem:[#allocation10 + $0x68] sm:$0xff]
    %v781 = vld [vmem:[#allocation10 + $0x70] sm:$0xff]
    %v782 = vld [vmem:[#allocation10 + $0x78] sm:$0xff]
    %v783 = vld [vmem:[#allocation12] sm:$0x1]
    %v785 = vlaneseq
    %v786 = vshrl.u32 %v785, 7
    %v787 = vsub.s32 0, %v786
    %v788 = vrot.slane %v783, %v787
    %790 = vmatprep.subr.mxu0 0.0
    %791 = vmatpush1.msra.mxu0 %v782
    %792 = vmatprep.subr.mxu0 0.0
    %793 = vmatpush1.msra.mxu0 %v781
    %794 = vmatprep.subr.mxu0 0.0
    %795 = vmatpush1.msra.mxu0 %v780
    %796 = vmatprep.subr.mxu0 0.0
    %797 = vmatpush1.msra.mxu0 %v779
    %798 = vmatprep.subr.mxu0 0.0
    %799 = vmatpush1.msra.mxu0 %v778
    %800 = vmatprep.subr.mxu0 0.0
    %801 = vmatpush1.msra.mxu0 %v777
    %802 = vmatprep.subr.mxu0 0.0
    %803 = vmatpush1.msra.mxu0 %v776
    %804 = vmatprep.subr.mxu0 0.0
    %805 = vmatpush1.msra.mxu0 %v775
    %806 = vmatprep.subr.mxu0 0.0
    %807 = vmatpush1.msra.mxu0 %v774
    %808 = vmatprep.subr.mxu0 0.0
    %809 = vmatpush1.msra.mxu0 %v773
    %810 = vmatprep.subr.mxu0 0.0
    %811 = vmatpush1.msra.mxu0 %v772
    %812 = vmatprep.subr.mxu0 0.0
    %813 = vmatpush1.msra.mxu0 %v771
    %814 = vmatprep.subr.mxu0 0.0
    %815 = vmatpush1.msra.mxu0 %v770
    %816 = vmatprep.subr.mxu0 0.0
    %817 = vmatpush1.msra.mxu0 %v769
    %818 = vmatprep.subr.mxu0 0.0
    %819 = vmatpush1.msra.mxu0 %v768
    %820 = vmatprep.subr.mxu0 0.0
    %821 = vmatpush1.msra.mxu0 %v767
    %822 = vmatprep.subr.mxu0 0.0
    %823 = vmatpush2.msra.mxu0 0.0
    %824 = vmatprep.subr.mxu0 0.0
    %825 = vmatpush2.msra.mxu0 0.0
    %826 = vmatprep.subr.mxu0 0.0
    %827 = vmatpush2.msra.mxu0 0.0
    %828 = vmatprep.subr.mxu0 0.0
    %829 = vmatpush2.msra.mxu0 0.0
    %830 = vmatprep.subr.mxu0 0.0
    %831 = vmatpush2.msra.mxu0 0.0
    %832 = vmatprep.subr.mxu0 0.0
    %833 = vmatpush2.msra.mxu0 0.0
    %834 = vmatprep.subr.mxu0 0.0
    %835 = vmatpush2.msra.mxu0 0.0
    %836 = vmatprep.subr.mxu0 0.0
    %837 = vmatpush2.msra.mxu0 0.0
    %838 = vmatprep.subr.mxu0 0.0
    %839 = vmatpush2.msra.mxu0 0.0
    %840 = vmatprep.subr.mxu0 0.0
    %841 = vmatpush2.msra.mxu0 0.0
    %842 = vmatprep.subr.mxu0 0.0
    %843 = vmatpush2.msra.mxu0 0.0
    %844 = vmatprep.subr.mxu0 0.0
    %845 = vmatpush2.msra.mxu0 0.0
    %846 = vmatprep.subr.mxu0 0.0
    %847 = vmatpush2.msra.mxu0 0.0
    %848 = vmatprep.subr.mxu0 0.0
    %849 = vmatpush2.msra.mxu0 0.0
    %850 = vmatprep.subr.mxu0 0.0
    %851 = vmatpush2.msra.mxu0 0.0
    %852 = vmatprep.subr.mxu0 0.0
    %853 = vmatpush2.msra.mxu0 0.0
    %854 = vmatprep.mubr.f32.mxu0 0.0
    %855 = vmatmul.mubr.f32.gmra.mxu0 %v765
    %v856 = vpop.f32.mrf.mxu0
    %v857 = vadd.f32 %v788, %v856
    %v858 = vpop.f32.mrf.mxu0
    %859 = vmatprep.mubr.f32.mxu0 0.0
    %860 = vmatmul.mubr.f32.gmra.mxu0 %v766
    %v861 = vpop.f32.mrf.mxu0
    %v862 = vadd.f32 %v788, %v861
    %v863 = vpop.f32.mrf.mxu0
    %864 = vdwg.mxu0
    %v865 = vld [vmem:[#allocation4] sm:$0xff]
    %v866 = vld [vmem:[#allocation4 + $0x8] sm:$0xff]
    %v867 = vld [vmem:[#allocation13] sm:$0xff]
    %v868 = vld [vmem:[#allocation13 + $0x8] sm:$0xff]
    %v869 = vld [vmem:[#allocation13 + $0x10] sm:$0xff]
    %v870 = vld [vmem:[#allocation13 + $0x18] sm:$0xff]
    %v871 = vld [vmem:[#allocation13 + $0x20] sm:$0xff]
    %v872 = vld [vmem:[#allocation13 + $0x28] sm:$0xff]
    %v873 = vld [vmem:[#allocation13 + $0x30] sm:$0xff]
    %v874 = vld [vmem:[#allocation13 + $0x38] sm:$0xff]
    %v875 = vld [vmem:[#allocation13 + $0x40] sm:$0xff]
    %v876 = vld [vmem:[#allocation13 + $0x48] sm:$0xff]
    %v877 = vld [vmem:[#allocation13 + $0x50] sm:$0xff]
    %v878 = vld [vmem:[#allocation13 + $0x58] sm:$0xff]
    %v879 = vld [vmem:[#allocation13 + $0x60] sm:$0xff]
    %v880 = vld [vmem:[#allocation13 + $0x68] sm:$0xff]
    %v881 = vld [vmem:[#allocation13 + $0x70] sm:$0xff]
    %v882 = vld [vmem:[#allocation13 + $0x78] sm:$0xff]
    %v883 = vld [vmem:[#allocation13 + $0x80] sm:$0xff]
    %v884 = vld [vmem:[#allocation13 + $0x88] sm:$0xff]
    %v885 = vld [vmem:[#allocation13 + $0x90] sm:$0xff]
    %v886 = vld [vmem:[#allocation13 + $0x98] sm:$0xff]
    %v887 = vld [vmem:[#allocation13 + $0xa0] sm:$0xff]
    %v888 = vld [vmem:[#allocation13 + $0xa8] sm:$0xff]
    %v889 = vld [vmem:[#allocation13 + $0xb0] sm:$0xff]
    %v890 = vld [vmem:[#allocation13 + $0xb8] sm:$0xff]
    %v891 = vld [vmem:[#allocation13 + $0xc0] sm:$0xff]
    %v892 = vld [vmem:[#allocation13 + $0xc8] sm:$0xff]
    %v893 = vld [vmem:[#allocation13 + $0xd0] sm:$0xff]
    %v894 = vld [vmem:[#allocation13 + $0xd8] sm:$0xff]
    %v895 = vld [vmem:[#allocation13 + $0xe0] sm:$0xff]
    %v896 = vld [vmem:[#allocation13 + $0xe8] sm:$0xff]
    %v897 = vld [vmem:[#allocation13 + $0xf0] sm:$0xff]
    %v898 = vld [vmem:[#allocation13 + $0xf8] sm:$0xff]
    %v899 = vld [vmem:[#allocation13 + $0x100] sm:$0xff]
    %v900 = vld [vmem:[#allocation13 + $0x108] sm:$0xff]
    %v901 = vld [vmem:[#allocation13 + $0x110] sm:$0xff]
    %v902 = vld [vmem:[#allocation13 + $0x118] sm:$0xff]
    %v903 = vld [vmem:[#allocation13 + $0x120] sm:$0xff]
    %v904 = vld [vmem:[#allocation13 + $0x128] sm:$0xff]
    %v905 = vld [vmem:[#allocation13 + $0x130] sm:$0xff]
    %v906 = vld [vmem:[#allocation13 + $0x138] sm:$0xff]
    %v907 = vld [vmem:[#allocation13 + $0x140] sm:$0xff]
    %v908 = vld [vmem:[#allocation13 + $0x148] sm:$0xff]
    %v909 = vld [vmem:[#allocation13 + $0x150] sm:$0xff]
    %v910 = vld [vmem:[#allocation13 + $0x158] sm:$0xff]
    %v911 = vld [vmem:[#allocation13 + $0x160] sm:$0xff]
    %v912 = vld [vmem:[#allocation13 + $0x168] sm:$0xff]
    %v913 = vld [vmem:[#allocation13 + $0x170] sm:$0xff]
    %v914 = vld [vmem:[#allocation13 + $0x178] sm:$0xff]
    %v915 = vld [vmem:[#allocation13 + $0x180] sm:$0xff]
    %v916 = vld [vmem:[#allocation13 + $0x188] sm:$0xff]
    %v917 = vld [vmem:[#allocation13 + $0x190] sm:$0xff]
    %v918 = vld [vmem:[#allocation13 + $0x198] sm:$0xff]
    %v919 = vld [vmem:[#allocation13 + $0x1a0] sm:$0xff]
    %v920 = vld [vmem:[#allocation13 + $0x1a8] sm:$0xff]
    %v921 = vld [vmem:[#allocation13 + $0x1b0] sm:$0xff]
    %v922 = vld [vmem:[#allocation13 + $0x1b8] sm:$0xff]
    %v923 = vld [vmem:[#allocation13 + $0x1c0] sm:$0xff]
    %v924 = vld [vmem:[#allocation13 + $0x1c8] sm:$0xff]
    %v925 = vld [vmem:[#allocation13 + $0x1d0] sm:$0xff]
    %v926 = vld [vmem:[#allocation13 + $0x1d8] sm:$0xff]
    %v927 = vld [vmem:[#allocation13 + $0x1e0] sm:$0xff]
    %v928 = vld [vmem:[#allocation13 + $0x1e8] sm:$0xff]
    %v929 = vld [vmem:[#allocation13 + $0x1f0] sm:$0xff]
    %v930 = vld [vmem:[#allocation13 + $0x1f8] sm:$0xff]
    %v931 = vld [vmem:[#allocation13 + $0x200] sm:$0xff]
    %v932 = vld [vmem:[#allocation13 + $0x208] sm:$0xff]
    %v933 = vld [vmem:[#allocation13 + $0x210] sm:$0xff]
    %v934 = vld [vmem:[#allocation13 + $0x218] sm:$0xff]
    %v935 = vld [vmem:[#allocation13 + $0x220] sm:$0xff]
    %v936 = vld [vmem:[#allocation13 + $0x228] sm:$0xff]
    %v937 = vld [vmem:[#allocation13 + $0x230] sm:$0xff]
    %v938 = vld [vmem:[#allocation13 + $0x238] sm:$0xff]
    %v939 = vld [vmem:[#allocation13 + $0x240] sm:$0xff]
    %v940 = vld [vmem:[#allocation13 + $0x248] sm:$0xff]
    %v941 = vld [vmem:[#allocation13 + $0x250] sm:$0xff]
    %v942 = vld [vmem:[#allocation13 + $0x258] sm:$0xff]
    %v943 = vld [vmem:[#allocation13 + $0x260] sm:$0xff]
    %v944 = vld [vmem:[#allocation13 + $0x268] sm:$0xff]
    %v945 = vld [vmem:[#allocation13 + $0x270] sm:$0xff]
    %v946 = vld [vmem:[#allocation13 + $0x278] sm:$0xff]
    %v947 = vld [vmem:[#allocation13 + $0x280] sm:$0xff]
    %v948 = vld [vmem:[#allocation13 + $0x288] sm:$0xff]
    %v949 = vld [vmem:[#allocation13 + $0x290] sm:$0xff]
    %v950 = vld [vmem:[#allocation13 + $0x298] sm:$0xff]
    %v951 = vld [vmem:[#allocation13 + $0x2a0] sm:$0xff]
    %v952 = vld [vmem:[#allocation13 + $0x2a8] sm:$0xff]
    %v953 = vld [vmem:[#allocation13 + $0x2b0] sm:$0xff]
    %v954 = vld [vmem:[#allocation13 + $0x2b8] sm:$0xff]
    %v955 = vld [vmem:[#allocation13 + $0x2c0] sm:$0xff]
    %v956 = vld [vmem:[#allocation13 + $0x2c8] sm:$0xff]
    %v957 = vld [vmem:[#allocation13 + $0x2d0] sm:$0xff]
    %v958 = vld [vmem:[#allocation13 + $0x2d8] sm:$0xff]
    %v959 = vld [vmem:[#allocation13 + $0x2e0] sm:$0xff]
    %v960 = vld [vmem:[#allocation13 + $0x2e8] sm:$0xff]
    %v961 = vld [vmem:[#allocation13 + $0x2f0] sm:$0xff]
    %v962 = vld [vmem:[#allocation13 + $0x2f8] sm:$0xff]
    %v963 = vld [vmem:[#allocation13 + $0x300] sm:$0xff]
    %v964 = vld [vmem:[#allocation13 + $0x308] sm:$0xff]
    %v965 = vld [vmem:[#allocation13 + $0x310] sm:$0xff]
    %v966 = vld [vmem:[#allocation13 + $0x318] sm:$0xff]
    %v967 = vld [vmem:[#allocation13 + $0x320] sm:$0xff]
    %v968 = vld [vmem:[#allocation13 + $0x328] sm:$0xff]
    %v969 = vld [vmem:[#allocation13 + $0x330] sm:$0xff]
    %v970 = vld [vmem:[#allocation13 + $0x338] sm:$0xff]
    %v971 = vld [vmem:[#allocation13 + $0x340] sm:$0xff]
    %v972 = vld [vmem:[#allocation13 + $0x348] sm:$0xff]
    %v973 = vld [vmem:[#allocation13 + $0x350] sm:$0xff]
    %v974 = vld [vmem:[#allocation13 + $0x358] sm:$0xff]
    %v975 = vld [vmem:[#allocation13 + $0x360] sm:$0xff]
    %v976 = vld [vmem:[#allocation13 + $0x368] sm:$0xff]
    %v977 = vld [vmem:[#allocation13 + $0x370] sm:$0xff]
    %v978 = vld [vmem:[#allocation13 + $0x378] sm:$0xff]
    %v979 = vld [vmem:[#allocation13 + $0x380] sm:$0xff]
    %v980 = vld [vmem:[#allocation13 + $0x388] sm:$0xff]
    %v981 = vld [vmem:[#allocation13 + $0x390] sm:$0xff]
    %v982 = vld [vmem:[#allocation13 + $0x398] sm:$0xff]
    %v983 = vld [vmem:[#allocation13 + $0x3a0] sm:$0xff]
    %v984 = vld [vmem:[#allocation13 + $0x3a8] sm:$0xff]
    %v985 = vld [vmem:[#allocation13 + $0x3b0] sm:$0xff]
    %v986 = vld [vmem:[#allocation13 + $0x3b8] sm:$0xff]
    %v987 = vld [vmem:[#allocation13 + $0x3c0] sm:$0xff]
    %v988 = vld [vmem:[#allocation13 + $0x3c8] sm:$0xff]
    %v989 = vld [vmem:[#allocation13 + $0x3d0] sm:$0xff]
    %v990 = vld [vmem:[#allocation13 + $0x3d8] sm:$0xff]
    %v991 = vld [vmem:[#allocation13 + $0x3e0] sm:$0xff]
    %v992 = vld [vmem:[#allocation13 + $0x3e8] sm:$0xff]
    %v993 = vld [vmem:[#allocation13 + $0x3f0] sm:$0xff]
    %v994 = vld [vmem:[#allocation13 + $0x3f8] sm:$0xff]
    %v995 = vld [vmem:[#allocation15] sm:$0xff]
    %v997 = vlaneseq
    %v998 = vshrl.u32 %v997, 7
    %v999 = vsub.s32 0, %v998
    %v1000 = vrot.slane %v995, %v999
    %v1001 = vlaneseq
    %v1002 = vshrl.u32 %v1001, 7
    %v1003 = vsub.s32 1, %v1002
    %v1004 = vrot.slane %v995, %v1003
    %v1005 = vlaneseq
    %v1006 = vshrl.u32 %v1005, 7
    %v1007 = vsub.s32 2, %v1006
    %v1008 = vrot.slane %v995, %v1007
    %v1009 = vlaneseq
    %v1010 = vshrl.u32 %v1009, 7
    %v1011 = vsub.s32 3, %v1010
    %v1012 = vrot.slane %v995, %v1011
    %v1013 = vlaneseq
    %v1014 = vshrl.u32 %v1013, 7
    %v1015 = vsub.s32 4, %v1014
    %v1016 = vrot.slane %v995, %v1015
    %v1017 = vlaneseq
    %v1018 = vshrl.u32 %v1017, 7
    %v1019 = vsub.s32 5, %v1018
    %v1020 = vrot.slane %v995, %v1019
    %v1021 = vlaneseq
    %v1022 = vshrl.u32 %v1021, 7
    %v1023 = vsub.s32 6, %v1022
    %v1024 = vrot.slane %v995, %v1023
    %v1025 = vlaneseq
    %v1026 = vshrl.u32 %v1025, 7
    %v1027 = vsub.s32 7, %v1026
    %v1028 = vrot.slane %v995, %v1027
    %1037 = vmatprep.subr.mxu0 %v988
    %1038 = vmatpush1.msra.mxu0 %v987
    %1039 = vmatprep.subr.mxu0 %v980
    %1040 = vmatpush1.msra.mxu0 %v979
    %1041 = vmatprep.subr.mxu0 %v972
    %1042 = vmatpush1.msra.mxu0 %v971
    %1043 = vmatprep.subr.mxu0 %v964
    %1044 = vmatpush1.msra.mxu0 %v963
    %1045 = vmatprep.subr.mxu0 %v956
    %1046 = vmatpush1.msra.mxu0 %v955
    %1047 = vmatprep.subr.mxu0 %v948
    %1048 = vmatpush1.msra.mxu0 %v947
    %1049 = vmatprep.subr.mxu0 %v940
    %1050 = vmatpush1.msra.mxu0 %v939
    %1051 = vmatprep.subr.mxu0 %v932
    %1052 = vmatpush1.msra.mxu0 %v931
    %1053 = vmatprep.subr.mxu0 %v924
    %1054 = vmatpush1.msra.mxu0 %v923
    %1055 = vmatprep.subr.mxu0 %v916
    %1056 = vmatpush1.msra.mxu0 %v915
    %1057 = vmatprep.subr.mxu0 %v908
    %1058 = vmatpush1.msra.mxu0 %v907
    %1059 = vmatprep.subr.mxu0 %v900
    %1060 = vmatpush1.msra.mxu0 %v899
    %1061 = vmatprep.subr.mxu0 %v892
    %1062 = vmatpush1.msra.mxu0 %v891
    %1063 = vmatprep.subr.mxu0 %v884
    %1064 = vmatpush1.msra.mxu0 %v883
    %1065 = vmatprep.subr.mxu0 %v876
    %1066 = vmatpush1.msra.mxu0 %v875
    %1067 = vmatprep.subr.mxu0 %v868
    %1068 = vmatpush1.msra.mxu0 %v867
    %1069 = vmatprep.subr.mxu0 0.0
    %1070 = vmatpush2.msra.mxu0 0.0
    %1071 = vmatprep.subr.mxu0 0.0
    %1072 = vmatpush2.msra.mxu0 0.0
    %1073 = vmatprep.subr.mxu0 0.0
    %1074 = vmatpush2.msra.mxu0 0.0
    %1075 = vmatprep.subr.mxu0 0.0
    %1076 = vmatpush2.msra.mxu0 0.0
    %1077 = vmatprep.subr.mxu0 0.0
    %1078 = vmatpush2.msra.mxu0 0.0
    %1079 = vmatprep.subr.mxu0 0.0
    %1080 = vmatpush2.msra.mxu0 0.0
    %1081 = vmatprep.subr.mxu0 0.0
    %1082 = vmatpush2.msra.mxu0 0.0
    %1083 = vmatprep.subr.mxu0 0.0
    %1084 = vmatpush2.msra.mxu0 0.0
    %1085 = vmatprep.subr.mxu0 0.0
    %1086 = vmatpush2.msra.mxu0 0.0
    %1087 = vmatprep.subr.mxu0 0.0
    %1088 = vmatpush2.msra.mxu0 0.0
    %1089 = vmatprep.subr.mxu0 0.0
    %1090 = vmatpush2.msra.mxu0 0.0
    %1091 = vmatprep.subr.mxu0 0.0
    %1092 = vmatpush2.msra.mxu0 0.0
    %1093 = vmatprep.subr.mxu0 0.0
    %1094 = vmatpush2.msra.mxu0 0.0
    %1095 = vmatprep.subr.mxu0 0.0
    %1096 = vmatpush2.msra.mxu0 0.0
    %1097 = vmatprep.subr.mxu0 0.0
    %1098 = vmatpush2.msra.mxu0 0.0
    %1099 = vmatprep.subr.mxu0 0.0
    %1100 = vmatpush2.msra.mxu0 0.0
    %1101 = vmatprep.mubr.f32.mxu0 0.0
    %1102 = vmatmul.mubr.f32.gmra.mxu0 %v865
    %v1103 = vpop.f32.mrf.mxu0
    %v1104 = vadd.f32 %v1000, %v1103
    %v1105 = vpop.f32.mrf.mxu0
    %v1106 = vadd.f32 %v1004, %v1105
    %1107 = vmatprep.mubr.f32.mxu0 0.0
    %1108 = vmatmul.mubr.f32.gmra.mxu0 %v866
    %v1109 = vpop.f32.mrf.mxu0
    %v1110 = vadd.f32 %v1000, %v1109
    %v1111 = vpop.f32.mrf.mxu0
    %v1112 = vadd.f32 %v1004, %v1111
    %1113 = vdwg.mxu0
    %1114 = vmatprep.subr.mxu0 %v990
    %1115 = vmatpush1.msra.mxu0 %v989
    %1116 = vmatprep.subr.mxu0 %v982
    %1117 = vmatpush1.msra.mxu0 %v981
    %1118 = vmatprep.subr.mxu0 %v974
    %1119 = vmatpush1.msra.mxu0 %v973
    %1120 = vmatprep.subr.mxu0 %v966
    %1121 = vmatpush1.msra.mxu0 %v965
    %1122 = vmatprep.subr.mxu0 %v958
    %1123 = vmatpush1.msra.mxu0 %v957
    %1124 = vmatprep.subr.mxu0 %v950
    %1125 = vmatpush1.msra.mxu0 %v949
    %1126 = vmatprep.subr.mxu0 %v942
    %1127 = vmatpush1.msra.mxu0 %v941
    %1128 = vmatprep.subr.mxu0 %v934
    %1129 = vmatpush1.msra.mxu0 %v933
    %1130 = vmatprep.subr.mxu0 %v926
    %1131 = vmatpush1.msra.mxu0 %v925
    %1132 = vmatprep.subr.mxu0 %v918
    %1133 = vmatpush1.msra.mxu0 %v917
    %1134 = vmatprep.subr.mxu0 %v910
    %1135 = vmatpush1.msra.mxu0 %v909
    %1136 = vmatprep.subr.mxu0 %v902
    %1137 = vmatpush1.msra.mxu0 %v901
    %1138 = vmatprep.subr.mxu0 %v894
    %1139 = vmatpush1.msra.mxu0 %v893
    %1140 = vmatprep.subr.mxu0 %v886
    %1141 = vmatpush1.msra.mxu0 %v885
    %1142 = vmatprep.subr.mxu0 %v878
    %1143 = vmatpush1.msra.mxu0 %v877
    %1144 = vmatprep.subr.mxu0 %v870
    %1145 = vmatpush1.msra.mxu0 %v869
    %1146 = vmatprep.subr.mxu0 0.0
    %1147 = vmatpush2.msra.mxu0 0.0
    %1148 = vmatprep.subr.mxu0 0.0
    %1149 = vmatpush2.msra.mxu0 0.0
    %1150 = vmatprep.subr.mxu0 0.0
    %1151 = vmatpush2.msra.mxu0 0.0
    %1152 = vmatprep.subr.mxu0 0.0
    %1153 = vmatpush2.msra.mxu0 0.0
    %1154 = vmatprep.subr.mxu0 0.0
    %1155 = vmatpush2.msra.mxu0 0.0
    %1156 = vmatprep.subr.mxu0 0.0
    %1157 = vmatpush2.msra.mxu0 0.0
    %1158 = vmatprep.subr.mxu0 0.0
    %1159 = vmatpush2.msra.mxu0 0.0
    %1160 = vmatprep.subr.mxu0 0.0
    %1161 = vmatpush2.msra.mxu0 0.0
    %1162 = vmatprep.subr.mxu0 0.0
    %1163 = vmatpush2.msra.mxu0 0.0
    %1164 = vmatprep.subr.mxu0 0.0
    %1165 = vmatpush2.msra.mxu0 0.0
    %1166 = vmatprep.subr.mxu0 0.0
    %1167 = vmatpush2.msra.mxu0 0.0
    %1168 = vmatprep.subr.mxu0 0.0
    %1169 = vmatpush2.msra.mxu0 0.0
    %1170 = vmatprep.subr.mxu0 0.0
    %1171 = vmatpush2.msra.mxu0 0.0
    %1172 = vmatprep.subr.mxu0 0.0
    %1173 = vmatpush2.msra.mxu0 0.0
    %1174 = vmatprep.subr.mxu0 0.0
    %1175 = vmatpush2.msra.mxu0 0.0
    %1176 = vmatprep.subr.mxu0 0.0
    %1177 = vmatpush2.msra.mxu0 0.0
    %1178 = vmatprep.mubr.f32.mxu0 0.0
    %1179 = vmatmul.mubr.f32.gmra.mxu0 %v865
    %v1180 = vpop.f32.mrf.mxu0
    %v1181 = vadd.f32 %v1008, %v1180
    %v1182 = vpop.f32.mrf.mxu0
    %v1183 = vadd.f32 %v1012, %v1182
    %1184 = vmatprep.mubr.f32.mxu0 0.0
    %1185 = vmatmul.mubr.f32.gmra.mxu0 %v866
    %v1186 = vpop.f32.mrf.mxu0
    %v1187 = vadd.f32 %v1008, %v1186
    %v1188 = vpop.f32.mrf.mxu0
    %v1189 = vadd.f32 %v1012, %v1188
    %1190 = vdwg.mxu0
    %1191 = vmatprep.subr.mxu0 %v992
    %1192 = vmatpush1.msra.mxu0 %v991
    %1193 = vmatprep.subr.mxu0 %v984
    %1194 = vmatpush1.msra.mxu0 %v983
    %1195 = vmatprep.subr.mxu0 %v976
    %1196 = vmatpush1.msra.mxu0 %v975
    %1197 = vmatprep.subr.mxu0 %v968
    %1198 = vmatpush1.msra.mxu0 %v967
    %1199 = vmatprep.subr.mxu0 %v960
    %1200 = vmatpush1.msra.mxu0 %v959
    %1201 = vmatprep.subr.mxu0 %v952
    %1202 = vmatpush1.msra.mxu0 %v951
    %1203 = vmatprep.subr.mxu0 %v944
    %1204 = vmatpush1.msra.mxu0 %v943
    %1205 = vmatprep.subr.mxu0 %v936
    %1206 = vmatpush1.msra.mxu0 %v935
    %1207 = vmatprep.subr.mxu0 %v928
    %1208 = vmatpush1.msra.mxu0 %v927
    %1209 = vmatprep.subr.mxu0 %v920
    %1210 = vmatpush1.msra.mxu0 %v919
    %1211 = vmatprep.subr.mxu0 %v912
    %1212 = vmatpush1.msra.mxu0 %v911
    %1213 = vmatprep.subr.mxu0 %v904
    %1214 = vmatpush1.msra.mxu0 %v903
    %1215 = vmatprep.subr.mxu0 %v896
    %1216 = vmatpush1.msra.mxu0 %v895
    %1217 = vmatprep.subr.mxu0 %v888
    %1218 = vmatpush1.msra.mxu0 %v887
    %1219 = vmatprep.subr.mxu0 %v880
    %1220 = vmatpush1.msra.mxu0 %v879
    %1221 = vmatprep.subr.mxu0 %v872
    %1222 = vmatpush1.msra.mxu0 %v871
    %1223 = vmatprep.subr.mxu0 0.0
    %1224 = vmatpush2.msra.mxu0 0.0
    %1225 = vmatprep.subr.mxu0 0.0
    %1226 = vmatpush2.msra.mxu0 0.0
    %1227 = vmatprep.subr.mxu0 0.0
    %1228 = vmatpush2.msra.mxu0 0.0
    %1229 = vmatprep.subr.mxu0 0.0
    %1230 = vmatpush2.msra.mxu0 0.0
    %1231 = vmatprep.subr.mxu0 0.0
    %1232 = vmatpush2.msra.mxu0 0.0
    %1233 = vmatprep.subr.mxu0 0.0
    %1234 = vmatpush2.msra.mxu0 0.0
    %1235 = vmatprep.subr.mxu0 0.0
    %1236 = vmatpush2.msra.mxu0 0.0
    %1237 = vmatprep.subr.mxu0 0.0
    %1238 = vmatpush2.msra.mxu0 0.0
    %1239 = vmatprep.subr.mxu0 0.0
    %1240 = vmatpush2.msra.mxu0 0.0
    %1241 = vmatprep.subr.mxu0 0.0
    %1242 = vmatpush2.msra.mxu0 0.0
    %1243 = vmatprep.subr.mxu0 0.0
    %1244 = vmatpush2.msra.mxu0 0.0
    %1245 = vmatprep.subr.mxu0 0.0
    %1246 = vmatpush2.msra.mxu0 0.0
    %1247 = vmatprep.subr.mxu0 0.0
    %1248 = vmatpush2.msra.mxu0 0.0
    %1249 = vmatprep.subr.mxu0 0.0
    %1250 = vmatpush2.msra.mxu0 0.0
    %1251 = vmatprep.subr.mxu0 0.0
    %1252 = vmatpush2.msra.mxu0 0.0
    %1253 = vmatprep.subr.mxu0 0.0
    %1254 = vmatpush2.msra.mxu0 0.0
    %1255 = vmatprep.mubr.f32.mxu0 0.0
    %1256 = vmatmul.mubr.f32.gmra.mxu0 %v865
    %v1257 = vpop.f32.mrf.mxu0
    %v1258 = vadd.f32 %v1016, %v1257
    %v1259 = vpop.f32.mrf.mxu0
    %v1260 = vadd.f32 %v1020, %v1259
    %1261 = vmatprep.mubr.f32.mxu0 0.0
    %1262 = vmatmul.mubr.f32.gmra.mxu0 %v866
    %v1263 = vpop.f32.mrf.mxu0
    %v1264 = vadd.f32 %v1016, %v1263
    %v1265 = vpop.f32.mrf.mxu0
    %v1266 = vadd.f32 %v1020, %v1265
    %1267 = vdwg.mxu0
    %1268 = vmatprep.subr.mxu0 %v994
    %1269 = vmatpush1.msra.mxu0 %v993
    %1270 = vmatprep.subr.mxu0 %v986
    %1271 = vmatpush1.msra.mxu0 %v985
    %1272 = vmatprep.subr.mxu0 %v978
    %1273 = vmatpush1.msra.mxu0 %v977
    %1274 = vmatprep.subr.mxu0 %v970
    %1275 = vmatpush1.msra.mxu0 %v969
    %1276 = vmatprep.subr.mxu0 %v962
    %1277 = vmatpush1.msra.mxu0 %v961
    %1278 = vmatprep.subr.mxu0 %v954
    %1279 = vmatpush1.msra.mxu0 %v953
    %1280 = vmatprep.subr.mxu0 %v946
    %1281 = vmatpush1.msra.mxu0 %v945
    %1282 = vmatprep.subr.mxu0 %v938
    %1283 = vmatpush1.msra.mxu0 %v937
    %1284 = vmatprep.subr.mxu0 %v930
    %1285 = vmatpush1.msra.mxu0 %v929
    %1286 = vmatprep.subr.mxu0 %v922
    %1287 = vmatpush1.msra.mxu0 %v921
    %1288 = vmatprep.subr.mxu0 %v914
    %1289 = vmatpush1.msra.mxu0 %v913
    %1290 = vmatprep.subr.mxu0 %v906
    %1291 = vmatpush1.msra.mxu0 %v905
    %1292 = vmatprep.subr.mxu0 %v898
    %1293 = vmatpush1.msra.mxu0 %v897
    %1294 = vmatprep.subr.mxu0 %v890
    %1295 = vmatpush1.msra.mxu0 %v889
    %1296 = vmatprep.subr.mxu0 %v882
    %1297 = vmatpush1.msra.mxu0 %v881
    %1298 = vmatprep.subr.mxu0 %v874
    %1299 = vmatpush1.msra.mxu0 %v873
    %1300 = vmatprep.subr.mxu0 0.0
    %1301 = vmatpush2.msra.mxu0 0.0
    %1302 = vmatprep.subr.mxu0 0.0
    %1303 = vmatpush2.msra.mxu0 0.0
    %1304 = vmatprep.subr.mxu0 0.0
    %1305 = vmatpush2.msra.mxu0 0.0
    %1306 = vmatprep.subr.mxu0 0.0
    %1307 = vmatpush2.msra.mxu0 0.0
    %1308 = vmatprep.subr.mxu0 0.0
    %1309 = vmatpush2.msra.mxu0 0.0
    %1310 = vmatprep.subr.mxu0 0.0
    %1311 = vmatpush2.msra.mxu0 0.0
    %1312 = vmatprep.subr.mxu0 0.0
    %1313 = vmatpush2.msra.mxu0 0.0
    %1314 = vmatprep.subr.mxu0 0.0
    %1315 = vmatpush2.msra.mxu0 0.0
    %1316 = vmatprep.subr.mxu0 0.0
    %1317 = vmatpush2.msra.mxu0 0.0
    %1318 = vmatprep.subr.mxu0 0.0
    %1319 = vmatpush2.msra.mxu0 0.0
    %1320 = vmatprep.subr.mxu0 0.0
    %1321 = vmatpush2.msra.mxu0 0.0
    %1322 = vmatprep.subr.mxu0 0.0
    %1323 = vmatpush2.msra.mxu0 0.0
    %1324 = vmatprep.subr.mxu0 0.0
    %1325 = vmatpush2.msra.mxu0 0.0
    %1326 = vmatprep.subr.mxu0 0.0
    %1327 = vmatpush2.msra.mxu0 0.0
    %1328 = vmatprep.subr.mxu0 0.0
    %1329 = vmatpush2.msra.mxu0 0.0
    %1330 = vmatprep.subr.mxu0 0.0
    %1331 = vmatpush2.msra.mxu0 0.0
    %1332 = vmatprep.mubr.f32.mxu0 0.0
    %1333 = vmatmul.mubr.f32.gmra.mxu0 %v865
    %v1334 = vpop.f32.mrf.mxu0
    %v1335 = vadd.f32 %v1024, %v1334
    %v1336 = vpop.f32.mrf.mxu0
    %v1337 = vadd.f32 %v1028, %v1336
    %1338 = vmatprep.mubr.f32.mxu0 0.0
    %1339 = vmatmul.mubr.f32.gmra.mxu0 %v866
    %v1340 = vpop.f32.mrf.mxu0
    %v1341 = vadd.f32 %v1024, %v1340
    %v1342 = vpop.f32.mrf.mxu0
    %v1343 = vadd.f32 %v1028, %v1342
    %1344 = vdwg.mxu0
    %v1345 = vmax.f32 %v1104, 0.0
    %v1346 = vmax.f32 %v1106, 0.0
    %v1347 = vmax.f32 %v1181, 0.0
    %v1348 = vmax.f32 %v1183, 0.0
    %v1349 = vmax.f32 %v1258, 0.0
    %v1350 = vmax.f32 %v1260, 0.0
    %v1351 = vmax.f32 %v1335, 0.0
    %v1352 = vmax.f32 %v1337, 0.0
    %v1353 = vmax.f32 %v1110, 0.0
    %v1354 = vmax.f32 %v1112, 0.0
    %v1355 = vmax.f32 %v1187, 0.0
    %v1356 = vmax.f32 %v1189, 0.0
    %v1357 = vmax.f32 %v1264, 0.0
    %v1358 = vmax.f32 %v1266, 0.0
    %v1359 = vmax.f32 %v1341, 0.0
    %v1360 = vmax.f32 %v1343, 0.0
    %v1361 = vld [vmem:[#allocation16] sm:$0xff]
    %v1362 = vld [vmem:[#allocation16 + $0x8] sm:$0xff]
    %v1363 = vld [vmem:[#allocation16 + $0x10] sm:$0xff]
    %v1364 = vld [vmem:[#allocation16 + $0x18] sm:$0xff]
    %v1365 = vld [vmem:[#allocation16 + $0x20] sm:$0xff]
    %v1366 = vld [vmem:[#allocation16 + $0x28] sm:$0xff]
    %v1367 = vld [vmem:[#allocation16 + $0x30] sm:$0xff]
    %v1368 = vld [vmem:[#allocation16 + $0x38] sm:$0xff]
    %v1369 = vld [vmem:[#allocation16 + $0x40] sm:$0xff]
    %v1370 = vld [vmem:[#allocation16 + $0x48] sm:$0xff]
    %v1371 = vld [vmem:[#allocation16 + $0x50] sm:$0xff]
    %v1372 = vld [vmem:[#allocation16 + $0x58] sm:$0xff]
    %v1373 = vld [vmem:[#allocation16 + $0x60] sm:$0xff]
    %v1374 = vld [vmem:[#allocation16 + $0x68] sm:$0xff]
    %v1375 = vld [vmem:[#allocation16 + $0x70] sm:$0xff]
    %v1376 = vld [vmem:[#allocation16 + $0x78] sm:$0xff]
    %v1377 = vld [vmem:[#allocation16 + $0x80] sm:$0xff]
    %v1378 = vld [vmem:[#allocation16 + $0x88] sm:$0xff]
    %v1379 = vld [vmem:[#allocation16 + $0x90] sm:$0xff]
    %v1380 = vld [vmem:[#allocation16 + $0x98] sm:$0xff]
    %v1381 = vld [vmem:[#allocation16 + $0xa0] sm:$0xff]
    %v1382 = vld [vmem:[#allocation16 + $0xa8] sm:$0xff]
    %v1383 = vld [vmem:[#allocation16 + $0xb0] sm:$0xff]
    %v1384 = vld [vmem:[#allocation16 + $0xb8] sm:$0xff]
    %v1385 = vld [vmem:[#allocation16 + $0xc0] sm:$0xff]
    %v1386 = vld [vmem:[#allocation16 + $0xc8] sm:$0xff]
    %v1387 = vld [vmem:[#allocation16 + $0xd0] sm:$0xff]
    %v1388 = vld [vmem:[#allocation16 + $0xd8] sm:$0xff]
    %v1389 = vld [vmem:[#allocation16 + $0xe0] sm:$0xff]
    %v1390 = vld [vmem:[#allocation16 + $0xe8] sm:$0xff]
    %v1391 = vld [vmem:[#allocation16 + $0xf0] sm:$0xff]
    %v1392 = vld [vmem:[#allocation16 + $0xf8] sm:$0xff]
    %v1393 = vld [vmem:[#allocation16 + $0x100] sm:$0xff]
    %v1394 = vld [vmem:[#allocation16 + $0x108] sm:$0xff]
    %v1395 = vld [vmem:[#allocation16 + $0x110] sm:$0xff]
    %v1396 = vld [vmem:[#allocation16 + $0x118] sm:$0xff]
    %v1397 = vld [vmem:[#allocation16 + $0x120] sm:$0xff]
    %v1398 = vld [vmem:[#allocation16 + $0x128] sm:$0xff]
    %v1399 = vld [vmem:[#allocation16 + $0x130] sm:$0xff]
    %v1400 = vld [vmem:[#allocation16 + $0x138] sm:$0xff]
    %v1401 = vld [vmem:[#allocation16 + $0x140] sm:$0xff]
    %v1402 = vld [vmem:[#allocation16 + $0x148] sm:$0xff]
    %v1403 = vld [vmem:[#allocation16 + $0x150] sm:$0xff]
    %v1404 = vld [vmem:[#allocation16 + $0x158] sm:$0xff]
    %v1405 = vld [vmem:[#allocation16 + $0x160] sm:$0xff]
    %v1406 = vld [vmem:[#allocation16 + $0x168] sm:$0xff]
    %v1407 = vld [vmem:[#allocation16 + $0x170] sm:$0xff]
    %v1408 = vld [vmem:[#allocation16 + $0x178] sm:$0xff]
    %v1409 = vld [vmem:[#allocation16 + $0x180] sm:$0xff]
    %v1410 = vld [vmem:[#allocation16 + $0x188] sm:$0xff]
    %v1411 = vld [vmem:[#allocation16 + $0x190] sm:$0xff]
    %v1412 = vld [vmem:[#allocation16 + $0x198] sm:$0xff]
    %v1413 = vld [vmem:[#allocation16 + $0x1a0] sm:$0xff]
    %v1414 = vld [vmem:[#allocation16 + $0x1a8] sm:$0xff]
    %v1415 = vld [vmem:[#allocation16 + $0x1b0] sm:$0xff]
    %v1416 = vld [vmem:[#allocation16 + $0x1b8] sm:$0xff]
    %v1417 = vld [vmem:[#allocation16 + $0x1c0] sm:$0xff]
    %v1418 = vld [vmem:[#allocation16 + $0x1c8] sm:$0xff]
    %v1419 = vld [vmem:[#allocation16 + $0x1d0] sm:$0xff]
    %v1420 = vld [vmem:[#allocation16 + $0x1d8] sm:$0xff]
    %v1421 = vld [vmem:[#allocation16 + $0x1e0] sm:$0xff]
    %v1422 = vld [vmem:[#allocation16 + $0x1e8] sm:$0xff]
    %v1423 = vld [vmem:[#allocation16 + $0x1f0] sm:$0xff]
    %v1424 = vld [vmem:[#allocation16 + $0x1f8] sm:$0xff]
    %v1425 = vld [vmem:[#allocation16 + $0x200] sm:$0xff]
    %v1426 = vld [vmem:[#allocation16 + $0x208] sm:$0xff]
    %v1427 = vld [vmem:[#allocation16 + $0x210] sm:$0xff]
    %v1428 = vld [vmem:[#allocation16 + $0x218] sm:$0xff]
    %v1429 = vld [vmem:[#allocation16 + $0x220] sm:$0xff]
    %v1430 = vld [vmem:[#allocation16 + $0x228] sm:$0xff]
    %v1431 = vld [vmem:[#allocation16 + $0x230] sm:$0xff]
    %v1432 = vld [vmem:[#allocation16 + $0x238] sm:$0xff]
    %v1433 = vld [vmem:[#allocation16 + $0x240] sm:$0xff]
    %v1434 = vld [vmem:[#allocation16 + $0x248] sm:$0xff]
    %v1435 = vld [vmem:[#allocation16 + $0x250] sm:$0xff]
    %v1436 = vld [vmem:[#allocation16 + $0x258] sm:$0xff]
    %v1437 = vld [vmem:[#allocation16 + $0x260] sm:$0xff]
    %v1438 = vld [vmem:[#allocation16 + $0x268] sm:$0xff]
    %v1439 = vld [vmem:[#allocation16 + $0x270] sm:$0xff]
    %v1440 = vld [vmem:[#allocation16 + $0x278] sm:$0xff]
    %v1441 = vld [vmem:[#allocation16 + $0x280] sm:$0xff]
    %v1442 = vld [vmem:[#allocation16 + $0x288] sm:$0xff]
    %v1443 = vld [vmem:[#allocation16 + $0x290] sm:$0xff]
    %v1444 = vld [vmem:[#allocation16 + $0x298] sm:$0xff]
    %v1445 = vld [vmem:[#allocation16 + $0x2a0] sm:$0xff]
    %v1446 = vld [vmem:[#allocation16 + $0x2a8] sm:$0xff]
    %v1447 = vld [vmem:[#allocation16 + $0x2b0] sm:$0xff]
    %v1448 = vld [vmem:[#allocation16 + $0x2b8] sm:$0xff]
    %v1449 = vld [vmem:[#allocation16 + $0x2c0] sm:$0xff]
    %v1450 = vld [vmem:[#allocation16 + $0x2c8] sm:$0xff]
    %v1451 = vld [vmem:[#allocation16 + $0x2d0] sm:$0xff]
    %v1452 = vld [vmem:[#allocation16 + $0x2d8] sm:$0xff]
    %v1453 = vld [vmem:[#allocation16 + $0x2e0] sm:$0xff]
    %v1454 = vld [vmem:[#allocation16 + $0x2e8] sm:$0xff]
    %v1455 = vld [vmem:[#allocation16 + $0x2f0] sm:$0xff]
    %v1456 = vld [vmem:[#allocation16 + $0x2f8] sm:$0xff]
    %v1457 = vld [vmem:[#allocation16 + $0x300] sm:$0xff]
    %v1458 = vld [vmem:[#allocation16 + $0x308] sm:$0xff]
    %v1459 = vld [vmem:[#allocation16 + $0x310] sm:$0xff]
    %v1460 = vld [vmem:[#allocation16 + $0x318] sm:$0xff]
    %v1461 = vld [vmem:[#allocation16 + $0x320] sm:$0xff]
    %v1462 = vld [vmem:[#allocation16 + $0x328] sm:$0xff]
    %v1463 = vld [vmem:[#allocation16 + $0x330] sm:$0xff]
    %v1464 = vld [vmem:[#allocation16 + $0x338] sm:$0xff]
    %v1465 = vld [vmem:[#allocation16 + $0x340] sm:$0xff]
    %v1466 = vld [vmem:[#allocation16 + $0x348] sm:$0xff]
    %v1467 = vld [vmem:[#allocation16 + $0x350] sm:$0xff]
    %v1468 = vld [vmem:[#allocation16 + $0x358] sm:$0xff]
    %v1469 = vld [vmem:[#allocation16 + $0x360] sm:$0xff]
    %v1470 = vld [vmem:[#allocation16 + $0x368] sm:$0xff]
    %v1471 = vld [vmem:[#allocation16 + $0x370] sm:$0xff]
    %v1472 = vld [vmem:[#allocation16 + $0x378] sm:$0xff]
    %v1473 = vld [vmem:[#allocation16 + $0x380] sm:$0xff]
    %v1474 = vld [vmem:[#allocation16 + $0x388] sm:$0xff]
    %v1475 = vld [vmem:[#allocation16 + $0x390] sm:$0xff]
    %v1476 = vld [vmem:[#allocation16 + $0x398] sm:$0xff]
    %v1477 = vld [vmem:[#allocation16 + $0x3a0] sm:$0xff]
    %v1478 = vld [vmem:[#allocation16 + $0x3a8] sm:$0xff]
    %v1479 = vld [vmem:[#allocation16 + $0x3b0] sm:$0xff]
    %v1480 = vld [vmem:[#allocation16 + $0x3b8] sm:$0xff]
    %v1481 = vld [vmem:[#allocation16 + $0x3c0] sm:$0xff]
    %v1482 = vld [vmem:[#allocation16 + $0x3c8] sm:$0xff]
    %v1483 = vld [vmem:[#allocation16 + $0x3d0] sm:$0xff]
    %v1484 = vld [vmem:[#allocation16 + $0x3d8] sm:$0xff]
    %v1485 = vld [vmem:[#allocation16 + $0x3e0] sm:$0xff]
    %v1486 = vld [vmem:[#allocation16 + $0x3e8] sm:$0xff]
    %v1487 = vld [vmem:[#allocation16 + $0x3f0] sm:$0xff]
    %v1488 = vld [vmem:[#allocation16 + $0x3f8] sm:$0xff]
    %v1489 = vld [vmem:[#allocation18] sm:$0x1]
    %v1491 = vlaneseq
    %v1492 = vshrl.u32 %v1491, 7
    %v1493 = vsub.s32 0, %v1492
    %v1494 = vrot.slane %v1489, %v1493
    %1496 = vmatprep.subr.mxu0 0.0
    %1497 = vmatpush1.msra.mxu0 %v1376
    %1498 = vmatprep.subr.mxu0 0.0
    %1499 = vmatpush1.msra.mxu0 %v1375
    %1500 = vmatprep.subr.mxu0 0.0
    %1501 = vmatpush1.msra.mxu0 %v1374
    %1502 = vmatprep.subr.mxu0 0.0
    %1503 = vmatpush1.msra.mxu0 %v1373
    %1504 = vmatprep.subr.mxu0 0.0
    %1505 = vmatpush1.msra.mxu0 %v1372
    %1506 = vmatprep.subr.mxu0 0.0
    %1507 = vmatpush1.msra.mxu0 %v1371
    %1508 = vmatprep.subr.mxu0 0.0
    %1509 = vmatpush1.msra.mxu0 %v1370
    %1510 = vmatprep.subr.mxu0 0.0
    %1511 = vmatpush1.msra.mxu0 %v1369
    %1512 = vmatprep.subr.mxu0 0.0
    %1513 = vmatpush1.msra.mxu0 %v1368
    %1514 = vmatprep.subr.mxu0 0.0
    %1515 = vmatpush1.msra.mxu0 %v1367
    %1516 = vmatprep.subr.mxu0 0.0
    %1517 = vmatpush1.msra.mxu0 %v1366
    %1518 = vmatprep.subr.mxu0 0.0
    %1519 = vmatpush1.msra.mxu0 %v1365
    %1520 = vmatprep.subr.mxu0 0.0
    %1521 = vmatpush1.msra.mxu0 %v1364
    %1522 = vmatprep.subr.mxu0 0.0
    %1523 = vmatpush1.msra.mxu0 %v1363
    %1524 = vmatprep.subr.mxu0 0.0
    %1525 = vmatpush1.msra.mxu0 %v1362
    %1526 = vmatprep.subr.mxu0 0.0
    %1527 = vmatpush1.msra.mxu0 %v1361
    %1528 = vmatprep.subr.mxu0 0.0
    %1529 = vmatpush2.msra.mxu0 %v1392
    %1530 = vmatprep.subr.mxu0 0.0
    %1531 = vmatpush2.msra.mxu0 %v1391
    %1532 = vmatprep.subr.mxu0 0.0
    %1533 = vmatpush2.msra.mxu0 %v1390
    %1534 = vmatprep.subr.mxu0 0.0
    %1535 = vmatpush2.msra.mxu0 %v1389
    %1536 = vmatprep.subr.mxu0 0.0
    %1537 = vmatpush2.msra.mxu0 %v1388
    %1538 = vmatprep.subr.mxu0 0.0
    %1539 = vmatpush2.msra.mxu0 %v1387
    %1540 = vmatprep.subr.mxu0 0.0
    %1541 = vmatpush2.msra.mxu0 %v1386
    %1542 = vmatprep.subr.mxu0 0.0
    %1543 = vmatpush2.msra.mxu0 %v1385
    %1544 = vmatprep.subr.mxu0 0.0
    %1545 = vmatpush2.msra.mxu0 %v1384
    %1546 = vmatprep.subr.mxu0 0.0
    %1547 = vmatpush2.msra.mxu0 %v1383
    %1548 = vmatprep.subr.mxu0 0.0
    %1549 = vmatpush2.msra.mxu0 %v1382
    %1550 = vmatprep.subr.mxu0 0.0
    %1551 = vmatpush2.msra.mxu0 %v1381
    %1552 = vmatprep.subr.mxu0 0.0
    %1553 = vmatpush2.msra.mxu0 %v1380
    %1554 = vmatprep.subr.mxu0 0.0
    %1555 = vmatpush2.msra.mxu0 %v1379
    %1556 = vmatprep.subr.mxu0 0.0
    %1557 = vmatpush2.msra.mxu0 %v1378
    %1558 = vmatprep.subr.mxu0 0.0
    %1559 = vmatpush2.msra.mxu0 %v1377
    %1560 = vmatprep.mubr.f32.mxu0 %v1346
    %1561 = vmatmul.mubr.f32.gmra.mxu0 %v1345
    %v1562 = vpop.f32.mrf.mxu0
    %v1563 = vadd.f32 %v1494, %v1562
    %v1564 = vpop.f32.mrf.mxu0
    %1565 = vmatprep.mubr.f32.mxu0 %v1354
    %1566 = vmatmul.mubr.f32.gmra.mxu0 %v1353
    %v1567 = vpop.f32.mrf.mxu0
    %v1568 = vadd.f32 %v1494, %v1567
    %v1569 = vpop.f32.mrf.mxu0
    %1570 = vdwg.mxu0
    %1571 = vmatprep.subr.mxu0 0.0
    %1572 = vmatpush1.msra.mxu0 %v1408
    %1573 = vmatprep.subr.mxu0 0.0
    %1574 = vmatpush1.msra.mxu0 %v1407
    %1575 = vmatprep.subr.mxu0 0.0
    %1576 = vmatpush1.msra.mxu0 %v1406
    %1577 = vmatprep.subr.mxu0 0.0
    %1578 = vmatpush1.msra.mxu0 %v1405
    %1579 = vmatprep.subr.mxu0 0.0
    %1580 = vmatpush1.msra.mxu0 %v1404
    %1581 = vmatprep.subr.mxu0 0.0
    %1582 = vmatpush1.msra.mxu0 %v1403
    %1583 = vmatprep.subr.mxu0 0.0
    %1584 = vmatpush1.msra.mxu0 %v1402
    %1585 = vmatprep.subr.mxu0 0.0
    %1586 = vmatpush1.msra.mxu0 %v1401
    %1587 = vmatprep.subr.mxu0 0.0
    %1588 = vmatpush1.msra.mxu0 %v1400
    %1589 = vmatprep.subr.mxu0 0.0
    %1590 = vmatpush1.msra.mxu0 %v1399
    %1591 = vmatprep.subr.mxu0 0.0
    %1592 = vmatpush1.msra.mxu0 %v1398
    %1593 = vmatprep.subr.mxu0 0.0
    %1594 = vmatpush1.msra.mxu0 %v1397
    %1595 = vmatprep.subr.mxu0 0.0
    %1596 = vmatpush1.msra.mxu0 %v1396
    %1597 = vmatprep.subr.mxu0 0.0
    %1598 = vmatpush1.msra.mxu0 %v1395
    %1599 = vmatprep.subr.mxu0 0.0
    %1600 = vmatpush1.msra.mxu0 %v1394
    %1601 = vmatprep.subr.mxu0 0.0
    %1602 = vmatpush1.msra.mxu0 %v1393
    %1603 = vmatprep.subr.mxu0 0.0
    %1604 = vmatpush2.msra.mxu0 %v1424
    %1605 = vmatprep.subr.mxu0 0.0
    %1606 = vmatpush2.msra.mxu0 %v1423
    %1607 = vmatprep.subr.mxu0 0.0
    %1608 = vmatpush2.msra.mxu0 %v1422
    %1609 = vmatprep.subr.mxu0 0.0
    %1610 = vmatpush2.msra.mxu0 %v1421
    %1611 = vmatprep.subr.mxu0 0.0
    %1612 = vmatpush2.msra.mxu0 %v1420
    %1613 = vmatprep.subr.mxu0 0.0
    %1614 = vmatpush2.msra.mxu0 %v1419
    %1615 = vmatprep.subr.mxu0 0.0
    %1616 = vmatpush2.msra.mxu0 %v1418
    %1617 = vmatprep.subr.mxu0 0.0
    %1618 = vmatpush2.msra.mxu0 %v1417
    %1619 = vmatprep.subr.mxu0 0.0
    %1620 = vmatpush2.msra.mxu0 %v1416
    %1621 = vmatprep.subr.mxu0 0.0
    %1622 = vmatpush2.msra.mxu0 %v1415
    %1623 = vmatprep.subr.mxu0 0.0
    %1624 = vmatpush2.msra.mxu0 %v1414
    %1625 = vmatprep.subr.mxu0 0.0
    %1626 = vmatpush2.msra.mxu0 %v1413
    %1627 = vmatprep.subr.mxu0 0.0
    %1628 = vmatpush2.msra.mxu0 %v1412
    %1629 = vmatprep.subr.mxu0 0.0
    %1630 = vmatpush2.msra.mxu0 %v1411
    %1631 = vmatprep.subr.mxu0 0.0
    %1632 = vmatpush2.msra.mxu0 %v1410
    %1633 = vmatprep.subr.mxu0 0.0
    %1634 = vmatpush2.msra.mxu0 %v1409
    %1635 = vmatprep.mubr.f32.mxu0 %v1348
    %1636 = vmatmul.mubr.f32.gmra.mxu0 %v1347
    %v1637 = vpop.f32.mrf.mxu0
    %v1638 = vadd.f32 %v1563, %v1637
    %v1639 = vpop.f32.mrf.mxu0
    %1640 = vmatprep.mubr.f32.mxu0 %v1356
    %1641 = vmatmul.mubr.f32.gmra.mxu0 %v1355
    %v1642 = vpop.f32.mrf.mxu0
    %v1643 = vadd.f32 %v1568, %v1642
    %v1644 = vpop.f32.mrf.mxu0
    %1645 = vdwg.mxu0
    %1646 = vmatprep.subr.mxu0 0.0
    %1647 = vmatpush1.msra.mxu0 %v1440
    %1648 = vmatprep.subr.mxu0 0.0
    %1649 = vmatpush1.msra.mxu0 %v1439
    %1650 = vmatprep.subr.mxu0 0.0
    %1651 = vmatpush1.msra.mxu0 %v1438
    %1652 = vmatprep.subr.mxu0 0.0
    %1653 = vmatpush1.msra.mxu0 %v1437
    %1654 = vmatprep.subr.mxu0 0.0
    %1655 = vmatpush1.msra.mxu0 %v1436
    %1656 = vmatprep.subr.mxu0 0.0
    %1657 = vmatpush1.msra.mxu0 %v1435
    %1658 = vmatprep.subr.mxu0 0.0
    %1659 = vmatpush1.msra.mxu0 %v1434
    %1660 = vmatprep.subr.mxu0 0.0
    %1661 = vmatpush1.msra.mxu0 %v1433
    %1662 = vmatprep.subr.mxu0 0.0
    %1663 = vmatpush1.msra.mxu0 %v1432
    %1664 = vmatprep.subr.mxu0 0.0
    %1665 = vmatpush1.msra.mxu0 %v1431
    %1666 = vmatprep.subr.mxu0 0.0
    %1667 = vmatpush1.msra.mxu0 %v1430
    %1668 = vmatprep.subr.mxu0 0.0
    %1669 = vmatpush1.msra.mxu0 %v1429
    %1670 = vmatprep.subr.mxu0 0.0
    %1671 = vmatpush1.msra.mxu0 %v1428
    %1672 = vmatprep.subr.mxu0 0.0
    %1673 = vmatpush1.msra.mxu0 %v1427
    %1674 = vmatprep.subr.mxu0 0.0
    %1675 = vmatpush1.msra.mxu0 %v1426
    %1676 = vmatprep.subr.mxu0 0.0
    %1677 = vmatpush1.msra.mxu0 %v1425
    %1678 = vmatprep.subr.mxu0 0.0
    %1679 = vmatpush2.msra.mxu0 %v1456
    %1680 = vmatprep.subr.mxu0 0.0
    %1681 = vmatpush2.msra.mxu0 %v1455
    %1682 = vmatprep.subr.mxu0 0.0
    %1683 = vmatpush2.msra.mxu0 %v1454
    %1684 = vmatprep.subr.mxu0 0.0
    %1685 = vmatpush2.msra.mxu0 %v1453
    %1686 = vmatprep.subr.mxu0 0.0
    %1687 = vmatpush2.msra.mxu0 %v1452
    %1688 = vmatprep.subr.mxu0 0.0
    %1689 = vmatpush2.msra.mxu0 %v1451
    %1690 = vmatprep.subr.mxu0 0.0
    %1691 = vmatpush2.msra.mxu0 %v1450
    %1692 = vmatprep.subr.mxu0 0.0
    %1693 = vmatpush2.msra.mxu0 %v1449
    %1694 = vmatprep.subr.mxu0 0.0
    %1695 = vmatpush2.msra.mxu0 %v1448
    %1696 = vmatprep.subr.mxu0 0.0
    %1697 = vmatpush2.msra.mxu0 %v1447
    %1698 = vmatprep.subr.mxu0 0.0
    %1699 = vmatpush2.msra.mxu0 %v1446
    %1700 = vmatprep.subr.mxu0 0.0
    %1701 = vmatpush2.msra.mxu0 %v1445
    %1702 = vmatprep.subr.mxu0 0.0
    %1703 = vmatpush2.msra.mxu0 %v1444
    %1704 = vmatprep.subr.mxu0 0.0
    %1705 = vmatpush2.msra.mxu0 %v1443
    %1706 = vmatprep.subr.mxu0 0.0
    %1707 = vmatpush2.msra.mxu0 %v1442
    %1708 = vmatprep.subr.mxu0 0.0
    %1709 = vmatpush2.msra.mxu0 %v1441
    %1710 = vmatprep.mubr.f32.mxu0 %v1350
    %1711 = vmatmul.mubr.f32.gmra.mxu0 %v1349
    %v1712 = vpop.f32.mrf.mxu0
    %v1713 = vadd.f32 %v1638, %v1712
    %v1714 = vpop.f32.mrf.mxu0
    %1715 = vmatprep.mubr.f32.mxu0 %v1358
    %1716 = vmatmul.mubr.f32.gmra.mxu0 %v1357
    %v1717 = vpop.f32.mrf.mxu0
    %v1718 = vadd.f32 %v1643, %v1717
    %v1719 = vpop.f32.mrf.mxu0
    %1720 = vdwg.mxu0
    %1721 = vmatprep.subr.mxu0 0.0
    %1722 = vmatpush1.msra.mxu0 %v1472
    %1723 = vmatprep.subr.mxu0 0.0
    %1724 = vmatpush1.msra.mxu0 %v1471
    %1725 = vmatprep.subr.mxu0 0.0
    %1726 = vmatpush1.msra.mxu0 %v1470
    %1727 = vmatprep.subr.mxu0 0.0
    %1728 = vmatpush1.msra.mxu0 %v1469
    %1729 = vmatprep.subr.mxu0 0.0
    %1730 = vmatpush1.msra.mxu0 %v1468
    %1731 = vmatprep.subr.mxu0 0.0
    %1732 = vmatpush1.msra.mxu0 %v1467
    %1733 = vmatprep.subr.mxu0 0.0
    %1734 = vmatpush1.msra.mxu0 %v1466
    %1735 = vmatprep.subr.mxu0 0.0
    %1736 = vmatpush1.msra.mxu0 %v1465
    %1737 = vmatprep.subr.mxu0 0.0
    %1738 = vmatpush1.msra.mxu0 %v1464
    %1739 = vmatprep.subr.mxu0 0.0
    %1740 = vmatpush1.msra.mxu0 %v1463
    %1741 = vmatprep.subr.mxu0 0.0
    %1742 = vmatpush1.msra.mxu0 %v1462
    %1743 = vmatprep.subr.mxu0 0.0
    %1744 = vmatpush1.msra.mxu0 %v1461
    %1745 = vmatprep.subr.mxu0 0.0
    %1746 = vmatpush1.msra.mxu0 %v1460
    %1747 = vmatprep.subr.mxu0 0.0
    %1748 = vmatpush1.msra.mxu0 %v1459
    %1749 = vmatprep.subr.mxu0 0.0
    %1750 = vmatpush1.msra.mxu0 %v1458
    %1751 = vmatprep.subr.mxu0 0.0
    %1752 = vmatpush1.msra.mxu0 %v1457
    %1753 = vmatprep.subr.mxu0 0.0
    %1754 = vmatpush2.msra.mxu0 %v1488
    %1755 = vmatprep.subr.mxu0 0.0
    %1756 = vmatpush2.msra.mxu0 %v1487
    %1757 = vmatprep.subr.mxu0 0.0
    %1758 = vmatpush2.msra.mxu0 %v1486
    %1759 = vmatprep.subr.mxu0 0.0
    %1760 = vmatpush2.msra.mxu0 %v1485
    %1761 = vmatprep.subr.mxu0 0.0
    %1762 = vmatpush2.msra.mxu0 %v1484
    %1763 = vmatprep.subr.mxu0 0.0
    %1764 = vmatpush2.msra.mxu0 %v1483
    %1765 = vmatprep.subr.mxu0 0.0
    %1766 = vmatpush2.msra.mxu0 %v1482
    %1767 = vmatprep.subr.mxu0 0.0
    %1768 = vmatpush2.msra.mxu0 %v1481
    %1769 = vmatprep.subr.mxu0 0.0
    %1770 = vmatpush2.msra.mxu0 %v1480
    %1771 = vmatprep.subr.mxu0 0.0
    %1772 = vmatpush2.msra.mxu0 %v1479
    %1773 = vmatprep.subr.mxu0 0.0
    %1774 = vmatpush2.msra.mxu0 %v1478
    %1775 = vmatprep.subr.mxu0 0.0
    %1776 = vmatpush2.msra.mxu0 %v1477
    %1777 = vmatprep.subr.mxu0 0.0
    %1778 = vmatpush2.msra.mxu0 %v1476
    %1779 = vmatprep.subr.mxu0 0.0
    %1780 = vmatpush2.msra.mxu0 %v1475
    %1781 = vmatprep.subr.mxu0 0.0
    %1782 = vmatpush2.msra.mxu0 %v1474
    %1783 = vmatprep.subr.mxu0 0.0
    %1784 = vmatpush2.msra.mxu0 %v1473
    %1785 = vmatprep.mubr.f32.mxu0 %v1352
    %1786 = vmatmul.mubr.f32.gmra.mxu0 %v1351
    %v1787 = vpop.f32.mrf.mxu0
    %v1788 = vadd.f32 %v1713, %v1787
    %v1789 = vpop.f32.mrf.mxu0
    %1790 = vmatprep.mubr.f32.mxu0 %v1360
    %1791 = vmatmul.mubr.f32.gmra.mxu0 %v1359
    %v1792 = vpop.f32.mrf.mxu0
    %v1793 = vadd.f32 %v1718, %v1792
    %v1794 = vpop.f32.mrf.mxu0
    %1795 = vdwg.mxu0
    %1796 = vst [vmem:[%s17] sm:$0xff] %v662
    %1797 = vst [vmem:[%s17 + $0x8] sm:$0xff] %v667
    %1798 = vst [vmem:[%s17 + $0x10] sm:$0xff] %v857
    %1799 = vst [vmem:[%s17 + $0x18] sm:$0xff] %v862
    %1800 = vst [vmem:[%s17 + $0x20] sm:$0xff] %v1788
    %1801 = vst [vmem:[%s17 + $0x28] sm:$0xff] %v1793
    %v1802 = vld [vmem:[#allocation19] sm:$0xff]
    %v1803 = vld [vmem:[#allocation19 + $0x8] sm:$0xff]
    %v1804 = vld [vmem:[#allocation19 + $0x10] sm:$0xff]
    %v1805 = vld [vmem:[#allocation19 + $0x18] sm:$0xff]
    %v1806 = vld [vmem:[#allocation19 + $0x20] sm:$0xff]
    %v1807 = vld [vmem:[#allocation19 + $0x28] sm:$0xff]
    %v1808 = vld [vmem:[#allocation19 + $0x30] sm:$0xff]
    %v1809 = vld [vmem:[#allocation19 + $0x38] sm:$0xff]
    %v1810 = vld [vmem:[#allocation19 + $0x40] sm:$0xff]
    %v1811 = vld [vmem:[#allocation19 + $0x48] sm:$0xff]
    %v1812 = vld [vmem:[#allocation19 + $0x50] sm:$0xff]
    %v1813 = vld [vmem:[#allocation19 + $0x58] sm:$0xff]
    %v1814 = vld [vmem:[#allocation19 + $0x60] sm:$0xff]
    %v1815 = vld [vmem:[#allocation19 + $0x68] sm:$0xff]
    %v1816 = vld [vmem:[#allocation19 + $0x70] sm:$0xff]
    %v1817 = vld [vmem:[#allocation19 + $0x78] sm:$0xff]
    %v1818 = vld [vmem:[#allocation19 + $0x80] sm:$0xff]
    %v1819 = vld [vmem:[#allocation19 + $0x88] sm:$0xff]
    %v1820 = vld [vmem:[#allocation19 + $0x90] sm:$0xff]
    %v1821 = vld [vmem:[#allocation19 + $0x98] sm:$0xff]
    %v1822 = vld [vmem:[#allocation19 + $0xa0] sm:$0xff]
    %v1823 = vld [vmem:[#allocation19 + $0xa8] sm:$0xff]
    %v1824 = vld [vmem:[#allocation19 + $0xb0] sm:$0xff]
    %v1825 = vld [vmem:[#allocation19 + $0xb8] sm:$0xff]
    %v1826 = vld [vmem:[#allocation19 + $0xc0] sm:$0xff]
    %v1827 = vld [vmem:[#allocation19 + $0xc8] sm:$0xff]
    %v1828 = vld [vmem:[#allocation19 + $0xd0] sm:$0xff]
    %v1829 = vld [vmem:[#allocation19 + $0xd8] sm:$0xff]
    %v1830 = vld [vmem:[#allocation19 + $0xe0] sm:$0xff]
    %v1831 = vld [vmem:[#allocation19 + $0xe8] sm:$0xff]
    %v1832 = vld [vmem:[#allocation19 + $0xf0] sm:$0xff]
    %v1833 = vld [vmem:[#allocation19 + $0xf8] sm:$0xff]
    %v1834 = vld [vmem:[#allocation19 + $0x100] sm:$0xff]
    %v1835 = vld [vmem:[#allocation19 + $0x108] sm:$0xff]
    %v1836 = vld [vmem:[#allocation19 + $0x110] sm:$0xff]
    %v1837 = vld [vmem:[#allocation19 + $0x118] sm:$0xff]
    %v1838 = vld [vmem:[#allocation19 + $0x120] sm:$0xff]
    %v1839 = vld [vmem:[#allocation19 + $0x128] sm:$0xff]
    %v1840 = vld [vmem:[#allocation19 + $0x130] sm:$0xff]
    %v1841 = vld [vmem:[#allocation19 + $0x138] sm:$0xff]
    %v1842 = vld [vmem:[#allocation19 + $0x140] sm:$0xff]
    %v1843 = vld [vmem:[#allocation19 + $0x148] sm:$0xff]
    %v1844 = vld [vmem:[#allocation19 + $0x150] sm:$0xff]
    %v1845 = vld [vmem:[#allocation19 + $0x158] sm:$0xff]
    %v1846 = vld [vmem:[#allocation19 + $0x160] sm:$0xff]
    %v1847 = vld [vmem:[#allocation19 + $0x168] sm:$0xff]
    %v1848 = vld [vmem:[#allocation19 + $0x170] sm:$0xff]
    %v1849 = vld [vmem:[#allocation19 + $0x178] sm:$0xff]
    %v1850 = vld [vmem:[#allocation21] sm:$0x7]
    %v1852 = vlaneseq
    %v1853 = vshrl.u32 %v1852, 7
    %v1854 = vsub.s32 0, %v1853
    %v1855 = vrot.slane %v1850, %v1854
    %v1856 = vlaneseq
    %v1857 = vshrl.u32 %v1856, 7
    %v1858 = vsub.s32 1, %v1857
    %v1859 = vrot.slane %v1850, %v1858
    %v1860 = vlaneseq
    %v1861 = vshrl.u32 %v1860, 7
    %v1862 = vsub.s32 2, %v1861
    %v1863 = vrot.slane %v1850, %v1862
    %1867 = vmatprep.subr.mxu0 %v1848
    %1868 = vmatpush1.msra.mxu0 %v1847
    %1869 = vmatprep.subr.mxu0 %v1845
    %1870 = vmatpush1.msra.mxu0 %v1844
    %1871 = vmatprep.subr.mxu0 %v1842
    %1872 = vmatpush1.msra.mxu0 %v1841
    %1873 = vmatprep.subr.mxu0 %v1839
    %1874 = vmatpush1.msra.mxu0 %v1838
    %1875 = vmatprep.subr.mxu0 %v1836
    %1876 = vmatpush1.msra.mxu0 %v1835
    %1877 = vmatprep.subr.mxu0 %v1833
    %1878 = vmatpush1.msra.mxu0 %v1832
    %1879 = vmatprep.subr.mxu0 %v1830
    %1880 = vmatpush1.msra.mxu0 %v1829
    %1881 = vmatprep.subr.mxu0 %v1827
    %1882 = vmatpush1.msra.mxu0 %v1826
    %1883 = vmatprep.subr.mxu0 %v1824
    %1884 = vmatpush1.msra.mxu0 %v1823
    %1885 = vmatprep.subr.mxu0 %v1821
    %1886 = vmatpush1.msra.mxu0 %v1820
    %1887 = vmatprep.subr.mxu0 %v1818
    %1888 = vmatpush1.msra.mxu0 %v1817
    %1889 = vmatprep.subr.mxu0 %v1815
    %1890 = vmatpush1.msra.mxu0 %v1814
    %1891 = vmatprep.subr.mxu0 %v1812
    %1892 = vmatpush1.msra.mxu0 %v1811
    %1893 = vmatprep.subr.mxu0 %v1809
    %1894 = vmatpush1.msra.mxu0 %v1808
    %1895 = vmatprep.subr.mxu0 %v1806
    %1896 = vmatpush1.msra.mxu0 %v1805
    %1897 = vmatprep.subr.mxu0 %v1803
    %1898 = vmatpush1.msra.mxu0 %v1802
    %1899 = vmatprep.subr.mxu0 0.0
    %1900 = vmatpush2.msra.mxu0 0.0
    %1901 = vmatprep.subr.mxu0 0.0
    %1902 = vmatpush2.msra.mxu0 0.0
    %1903 = vmatprep.subr.mxu0 0.0
    %1904 = vmatpush2.msra.mxu0 0.0
    %1905 = vmatprep.subr.mxu0 0.0
    %1906 = vmatpush2.msra.mxu0 0.0
    %1907 = vmatprep.subr.mxu0 0.0
    %1908 = vmatpush2.msra.mxu0 0.0
    %1909 = vmatprep.subr.mxu0 0.0
    %1910 = vmatpush2.msra.mxu0 0.0
    %1911 = vmatprep.subr.mxu0 0.0
    %1912 = vmatpush2.msra.mxu0 0.0
    %1913 = vmatprep.subr.mxu0 0.0
    %1914 = vmatpush2.msra.mxu0 0.0
    %1915 = vmatprep.subr.mxu0 0.0
    %1916 = vmatpush2.msra.mxu0 0.0
    %1917 = vmatprep.subr.mxu0 0.0
    %1918 = vmatpush2.msra.mxu0 0.0
    %1919 = vmatprep.subr.mxu0 0.0
    %1920 = vmatpush2.msra.mxu0 0.0
    %1921 = vmatprep.subr.mxu0 0.0
    %1922 = vmatpush2.msra.mxu0 0.0
    %1923 = vmatprep.subr.mxu0 0.0
    %1924 = vmatpush2.msra.mxu0 0.0
    %1925 = vmatprep.subr.mxu0 0.0
    %1926 = vmatpush2.msra.mxu0 0.0
    %1927 = vmatprep.subr.mxu0 0.0
    %1928 = vmatpush2.msra.mxu0 0.0
    %1929 = vmatprep.subr.mxu0 0.0
    %1930 = vmatpush2.msra.mxu0 0.0
    %1931 = vmatprep.mubr.f32.mxu0 0.0
    %1932 = vmatmul.mubr.f32.gmra.mxu0 %v662
    %v1933 = vpop.f32.mrf.mxu0
    %v1934 = vadd.f32 %v1855, %v1933
    %v1935 = vpop.f32.mrf.mxu0
    %v1936 = vadd.f32 %v1859, %v1935
    %1937 = vmatprep.mubr.f32.mxu0 0.0
    %1938 = vmatmul.mubr.f32.gmra.mxu0 %v667
    %v1939 = vpop.f32.mrf.mxu0
    %v1940 = vadd.f32 %v1855, %v1939
    %v1941 = vpop.f32.mrf.mxu0
    %v1942 = vadd.f32 %v1859, %v1941
    %1943 = vmatprep.mubr.f32.mxu0 0.0
    %1944 = vmatmul.mubr.f32.gmra.mxu0 %v857
    %v1945 = vpop.f32.mrf.mxu0
    %v1946 = vadd.f32 %v1855, %v1945
    %v1947 = vpop.f32.mrf.mxu0
    %v1948 = vadd.f32 %v1859, %v1947
    %1949 = vmatprep.mubr.f32.mxu0 0.0
    %1950 = vmatmul.mubr.f32.gmra.mxu0 %v862
    %v1951 = vpop.f32.mrf.mxu0
    %v1952 = vadd.f32 %v1855, %v1951
    %v1953 = vpop.f32.mrf.mxu0
    %v1954 = vadd.f32 %v1859, %v1953
    %1955 = vmatprep.mubr.f32.mxu0 0.0
    %1956 = vmatmul.mubr.f32.gmra.mxu0 %v1788
    %v1957 = vpop.f32.mrf.mxu0
    %v1958 = vadd.f32 %v1855, %v1957
    %v1959 = vpop.f32.mrf.mxu0
    %v1960 = vadd.f32 %v1859, %v1959
    %1961 = vmatprep.mubr.f32.mxu0 0.0
    %1962 = vmatmul.mubr.f32.gmra.mxu0 %v1793
    %v1963 = vpop.f32.mrf.mxu0
    %v1964 = vadd.f32 %v1855, %v1963
    %v1965 = vpop.f32.mrf.mxu0
    %v1966 = vadd.f32 %v1859, %v1965
    %1967 = vdwg.mxu0
    %1968 = vmatprep.subr.mxu0 0.0
    %1969 = vmatpush1.msra.mxu0 %v1849
    %1970 = vmatprep.subr.mxu0 0.0
    %1971 = vmatpush1.msra.mxu0 %v1846
    %1972 = vmatprep.subr.mxu0 0.0
    %1973 = vmatpush1.msra.mxu0 %v1843
    %1974 = vmatprep.subr.mxu0 0.0
    %1975 = vmatpush1.msra.mxu0 %v1840
    %1976 = vmatprep.subr.mxu0 0.0
    %1977 = vmatpush1.msra.mxu0 %v1837
    %1978 = vmatprep.subr.mxu0 0.0
    %1979 = vmatpush1.msra.mxu0 %v1834
    %1980 = vmatprep.subr.mxu0 0.0
    %1981 = vmatpush1.msra.mxu0 %v1831
    %1982 = vmatprep.subr.mxu0 0.0
    %1983 = vmatpush1.msra.mxu0 %v1828
    %1984 = vmatprep.subr.mxu0 0.0
    %1985 = vmatpush1.msra.mxu0 %v1825
    %1986 = vmatprep.subr.mxu0 0.0
    %1987 = vmatpush1.msra.mxu0 %v1822
    %1988 = vmatprep.subr.mxu0 0.0
    %1989 = vmatpush1.msra.mxu0 %v1819
    %1990 = vmatprep.subr.mxu0 0.0
    %1991 = vmatpush1.msra.mxu0 %v1816
    %1992 = vmatprep.subr.mxu0 0.0
    %1993 = vmatpush1.msra.mxu0 %v1813
    %1994 = vmatprep.subr.mxu0 0.0
    %1995 = vmatpush1.msra.mxu0 %v1810
    %1996 = vmatprep.subr.mxu0 0.0
    %1997 = vmatpush1.msra.mxu0 %v1807
    %1998 = vmatprep.subr.mxu0 0.0
    %1999 = vmatpush1.msra.mxu0 %v1804
    %2000 = vmatprep.subr.mxu0 0.0
    %2001 = vmatpush2.msra.mxu0 0.0
    %2002 = vmatprep.subr.mxu0 0.0
    %2003 = vmatpush2.msra.mxu0 0.0
    %2004 = vmatprep.subr.mxu0 0.0
    %2005 = vmatpush2.msra.mxu0 0.0
    %2006 = vmatprep.subr.mxu0 0.0
    %2007 = vmatpush2.msra.mxu0 0.0
    %2008 = vmatprep.subr.mxu0 0.0
    %2009 = vmatpush2.msra.mxu0 0.0
    %2010 = vmatprep.subr.mxu0 0.0
    %2011 = vmatpush2.msra.mxu0 0.0
    %2012 = vmatprep.subr.mxu0 0.0
    %2013 = vmatpush2.msra.mxu0 0.0
    %2014 = vmatprep.subr.mxu0 0.0
    %2015 = vmatpush2.msra.mxu0 0.0
    %2016 = vmatprep.subr.mxu0 0.0
    %2017 = vmatpush2.msra.mxu0 0.0
    %2018 = vmatprep.subr.mxu0 0.0
    %2019 = vmatpush2.msra.mxu0 0.0
    %2020 = vmatprep.subr.mxu0 0.0
    %2021 = vmatpush2.msra.mxu0 0.0
    %2022 = vmatprep.subr.mxu0 0.0
    %2023 = vmatpush2.msra.mxu0 0.0
    %2024 = vmatprep.subr.mxu0 0.0
    %2025 = vmatpush2.msra.mxu0 0.0
    %2026 = vmatprep.subr.mxu0 0.0
    %2027 = vmatpush2.msra.mxu0 0.0
    %2028 = vmatprep.subr.mxu0 0.0
    %2029 = vmatpush2.msra.mxu0 0.0
    %2030 = vmatprep.subr.mxu0 0.0
    %2031 = vmatpush2.msra.mxu0 0.0
    %2032 = vmatprep.mubr.f32.mxu0 0.0
    %2033 = vmatmul.mubr.f32.gmra.mxu0 %v662
    %v2034 = vpop.f32.mrf.mxu0
    %v2035 = vadd.f32 %v1863, %v2034
    %v2036 = vpop.f32.mrf.mxu0
    %2037 = vmatprep.mubr.f32.mxu0 0.0
    %2038 = vmatmul.mubr.f32.gmra.mxu0 %v667
    %v2039 = vpop.f32.mrf.mxu0
    %v2040 = vadd.f32 %v1863, %v2039
    %v2041 = vpop.f32.mrf.mxu0
    %2042 = vmatprep.mubr.f32.mxu0 0.0
    %2043 = vmatmul.mubr.f32.gmra.mxu0 %v857
    %v2044 = vpop.f32.mrf.mxu0
    %v2045 = vadd.f32 %v1863, %v2044
    %v2046 = vpop.f32.mrf.mxu0
    %2047 = vmatprep.mubr.f32.mxu0 0.0
    %2048 = vmatmul.mubr.f32.gmra.mxu0 %v862
    %v2049 = vpop.f32.mrf.mxu0
    %v2050 = vadd.f32 %v1863, %v2049
    %v2051 = vpop.f32.mrf.mxu0
    %2052 = vmatprep.mubr.f32.mxu0 0.0
    %2053 = vmatmul.mubr.f32.gmra.mxu0 %v1788
    %v2054 = vpop.f32.mrf.mxu0
    %v2055 = vadd.f32 %v1863, %v2054
    %v2056 = vpop.f32.mrf.mxu0
    %2057 = vmatprep.mubr.f32.mxu0 0.0
    %2058 = vmatmul.mubr.f32.gmra.mxu0 %v1793
    %v2059 = vpop.f32.mrf.mxu0
    %v2060 = vadd.f32 %v1863, %v2059
    %v2061 = vpop.f32.mrf.mxu0
    %2062 = vdwg.mxu0
    %2063 = vst [vmem:[%s18] sm:$0xff] %v1934
    %2064 = vst [vmem:[%s18 + $0x8] sm:$0xff] %v1936
    %2065 = vst [vmem:[%s18 + $0x10] sm:$0xff] %v2035
    %2066 = vst [vmem:[%s18 + $0x18] sm:$0xff] %v1940
    %2067 = vst [vmem:[%s18 + $0x20] sm:$0xff] %v1942
    %2068 = vst [vmem:[%s18 + $0x28] sm:$0xff] %v2040
    %2069 = vst [vmem:[%s18 + $0x30] sm:$0xff] %v1946
    %2070 = vst [vmem:[%s18 + $0x38] sm:$0xff] %v1948
    %2071 = vst [vmem:[%s18 + $0x40] sm:$0xff] %v2045
    %2072 = vst [vmem:[%s18 + $0x48] sm:$0xff] %v1952
    %2073 = vst [vmem:[%s18 + $0x50] sm:$0xff] %v1954
    %2074 = vst [vmem:[%s18 + $0x58] sm:$0xff] %v2050
    %2075 = vst [vmem:[%s18 + $0x60] sm:$0xff] %v1958
    %2076 = vst [vmem:[%s18 + $0x68] sm:$0xff] %v1960
    %2077 = vst [vmem:[%s18 + $0x70] sm:$0xff] %v2055
    %2078 = vst [vmem:[%s18 + $0x78] sm:$0xff] %v1964
    %2079 = vst [vmem:[%s18 + $0x80] sm:$0xff] %v1966
    %2080 = vst [vmem:[%s18 + $0x88] sm:$0xff] %v2060
    // Predicated region
    $region122: #{fwd_full.3} parent=1 // pred_check
      _
    $region123: #{fwd_full.3} parent=1 // pred_check_branch
      %2082 = sbr.rel (0) target = $region125
    $region124: #{fwd_full.3} parent=1 // pred_region
      _
    $region125: #{fwd_full.3} parent=1 // pred_fallthru
      _
    // Predicated region
    $region126: #{fwd_full.3} parent=1 // pred_check
      _
    $region127: #{fwd_full.3} parent=1 // pred_check_branch
      %2084 = sbr.rel (0) target = $region129
    $region128: #{fwd_full.3} parent=1 // pred_region
      _
    $region129: #{fwd_full.3} parent=1 // pred_fallthru
      _
    // Predicated region
    $region130: #{fwd_full.3} parent=1 // pred_check
      _
    $region131: #{fwd_full.3} parent=1 // pred_check_branch
      %2086 = sbr.rel (0) target = $region133
    $region132: #{fwd_full.3} parent=1 // pred_region
      _
    $region133: #{fwd_full.3} parent=1 // pred_fallthru
      _
    // Predicated region
    $region134: #{fwd_full.3} parent=1 // pred_check
      _
    $region135: #{fwd_full.3} parent=1 // pred_check_branch
      %2088 = sbr.rel (0) target = $region137
    $region136: #{fwd_full.3} parent=1 // pred_region
      _
    $region137: #{fwd_full.3} parent=1 // pred_fallthru
      _
    %2089 = vsyncpa [#allocation3], 1
    %2090 = vsyncpa [#allocation5], 1
    %2091 = vsyncpa [#allocation8], 1
    %2092 = vsyncpa [#allocation11], 1
    %2093 = vsyncpa [#allocation14], 1
    %2094 = vsyncpa [#allocation17], 1
    %2095 = vsyncpa [#allocation20], 1

// kernel: fwd_full.4
$region0: #{fwd_full.4}
  #allocation0 [shape = 'u32[]', space=smem, size = 0x4, offset = 0x4, fixed_abs, tag = 'smem constant byte address 0x4 - core index']
  #allocation1 [shape = 'u32[144,128]{1,0:T(1,128)}', space=vmem, size = 0x12000, scoped, tag = 'internal scratch']
  #allocation2 [shape = 's32[1]{0}', space=sflag, size = 0x4, scoped, tag = 'scoped memory for fwd_full.4']
  #allocation3 [shape = 'u8[512]{0}', space=smem, size = 0x200, scoped, tag = 'prefetched SMEM operand 0']
  #allocation4 [shape = 'u8[512]{0}', space=smem, size = 0x200, scoped, tag = 'prefetched SMEM operand 1']
  %s0 = inlined_call_operand.vmem [shape: s32[6], index: 0, kind: input, shape index: {}]
  %s1 = inlined_call_operand.vmem [shape: s32[6], index: 1, kind: input, shape index: {}]
  %s2 = inlined_call_operand.vmem [shape: f32[3,2,8,128], index: 2, kind: input, shape index: {}]
  %s3 = inlined_call_operand.vmem [shape: f32[3,2,4,8,32], index: 3, kind: input, shape index: {}]
  %s4 = inlined_call_operand.vmem [shape: f32[3,2,4,8,32], index: 4, kind: input, shape index: {}]
  %s5 = inlined_call_operand.vmem [shape: f32[3,2,4,8,32], index: 5, kind: input, shape index: {}]
  %s6 = inlined_call_operand.vmem [shape: f32[4,32,128], index: 6, kind: input, shape index: {}]
  %s7 = inlined_call_operand.vmem [shape: f32[1,128], index: 7, kind: input, shape index: {}]
  %s8 = inlined_call_operand.vmem [shape: f32[1,128], index: 8, kind: input, shape index: {}]
  %s9 = inlined_call_operand.vmem [shape: f32[1,128], index: 9, kind: input, shape index: {}]
  %s10 = inlined_call_operand.vmem [shape: f32[128,512], index: 10, kind: input, shape index: {}]
  %s11 = inlined_call_operand.vmem [shape: f32[1,512], index: 11, kind: input, shape index: {}]
  %s12 = inlined_call_operand.vmem [shape: f32[512,128], index: 12, kind: input, shape index: {}]
  %s13 = inlined_call_operand.vmem [shape: f32[1,128], index: 13, kind: input, shape index: {}]
  %s14 = inlined_call_operand.vmem [shape: f32[1,128], index: 14, kind: input, shape index: {}]
  %s15 = inlined_call_operand.vmem [shape: f32[1,128], index: 15, kind: input, shape index: {}]
  %s16 = inlined_call_operand.vmem [shape: f32[6,2,1,128], index: 16, kind: output, shape index: {}]
  %s17 = sld [smem:[#allocation0]]
  $region89: #{fwd_full.4} parent=0
    _
  %s19 = ssub.s32 1, %s17
  %s20 = scalar_select 0, %s19, %s17
  %s21 = sshll.u32 %s0, 4
  %s22 = int_to_ptr.vmem [resolvable:$true] %s21
  %24 = dma.vmem_to_smem %s22, 16, [#allocation3], [#allocation2]
  %s25 = sshll.u32 %s1, 4
  %s26 = int_to_ptr.vmem [resolvable:$true] %s25
  %28 = dma.vmem_to_smem %s26, 16, [#allocation4], [#allocation2]
  %29 = dma.done [#allocation2], 32
  %30 = sfence
  loop: start=0, step=1, limit=14
  $region2: #{fwd_full.4} parent=0 // loop_pre_header
    _
  $region3: #{fwd_full.4} parent=0 // loop_header
    %s32 = sphi 0, %s36
    %p33 = scmp.ge.s32.totalorder %s32, 14
    %s39 = sphi 0, %s51
    %s40 = sphi 0, %s47
    %s41 = sphi 0, %s39
    %s42 = sphi 0, %s40
    %s43 = sphi 0, %s41
    %s44 = sphi 0, %s42
    %s58 = sphi 0, %s60
    %s61 = sphi 0, %s58
    %s62 = sphi 0, %s61
    %s78 = sphi 0, %s62
    %s88 = sphi 0, %s90
    %s91 = sphi 0, %s88
    %s92 = sphi 0, %s91
    %s108 = sphi 0, %s92
    %s118 = sphi 0, %s120
    %s121 = sphi 0, %s118
    %s122 = sphi 0, %s121
    %s138 = sphi 0, %s122
    %s148 = sphi 0, %s150
    %s151 = sphi 0, %s148
    %s152 = sphi 0, %s151
    %s168 = sphi 0, %s152
    %s172 = sphi 0, %s172
    %s174 = sphi 0, %s172
    %s175 = sphi 0, %s174
    %s189 = sphi 0, %s175
    %s193 = sphi 0, %s193
    %s195 = sphi 0, %s193
    %s196 = sphi 0, %s195
    %s210 = sphi 0, %s196
    %s214 = sphi 0, %s214
    %s216 = sphi 0, %s214
    %s217 = sphi 0, %s216
    %s231 = sphi 0, %s217
    %s235 = sphi 0, %s235
    %s237 = sphi 0, %s235
    %s238 = sphi 0, %s237
    %s252 = sphi 0, %s238
    %s256 = sphi 0, %s256
    %s258 = sphi 0, %s256
    %s259 = sphi 0, %s258
    %s273 = sphi 0, %s259
    %s277 = sphi 0, %s277
    %s279 = sphi 0, %s277
    %s280 = sphi 0, %s279
    %s294 = sphi 0, %s280
    %s298 = sphi 0, %s298
    %s300 = sphi 0, %s298
    %s301 = sphi 0, %s300
    %s315 = sphi 0, %s301
    %s319 = sphi 0, %s319
    %s321 = sphi 0, %s319
    %s322 = sphi 0, %s321
    %s336 = sphi 0, %s322
    %s340 = sphi 0, %s340
    %s342 = sphi 0, %s340
    %s343 = sphi 0, %s342
    %s357 = sphi 0, %s343
    %s361 = sphi 0, %s361
    %s363 = sphi 0, %s361
    %s364 = sphi 0, %s363
    %s378 = sphi 0, %s364
    %s386 = sphi 0, %s388
    %s389 = sphi 0, %s386
    %s390 = sphi 0, %s389
    %s406 = sphi 0, %s390
  $region4: #{fwd_full.4} parent=0 // loop_header_branch
    %35 = sbr.rel (%p33) target = $region8
  $region5: #{fwd_full.4} parent=0 // loop_body
    %s37 = ssub.s32 %s32, 1
    %s38 = ssub.s32 %s32, 2
    %s45 = sadd.s32 1, %s40
    %p46 = scmp.ge.s32.totalorder %s45, 2
    %s47 = scalar_select %p46, 0, %s45
    %s48 = sadd.s32 1, %s39
    %s49 = scalar_select %p46, %s48, %s39
    %p50 = scmp.ge.s32.totalorder %s49, 6
    %s51 = scalar_select %p50, 0, %s49
    %s52 = sld [smem:[#allocation3 + %s39]]
    %s53 = sld [smem:[#allocation3 + %s51]]
    %s54 = ssub.s32 %s52, %s53
    %s55 = ssub.s32 %s40, %s47
    %s56 = sor.u32 %s54, %s55
    %p57 = scmp.eq.s32.totalorder %s56, 0
    %s59 = sadd.s32 %s58, 1
    %s60 = scalar_select %p57, %s58, %s59
    %p63 = pneg %p57
    %p64 = scmp.eq.s32.totalorder %s32, 11
    %p65 = por %p63, %p64
    %p66 = scmp.ne.s32.totalorder %s58, %s61
    %p67 = scmp.eq.s32.totalorder %s32, 0
    %p68 = por %p66, %p67
    %p69 = scmp.ne.s32.totalorder %s58, %s61
    %p70 = scmp.eq.s32.totalorder %s37, 11
    %p71 = por %p69, %p70
    %p72 = scmp.ne.s32.totalorder %s61, %s62
    %p73 = scmp.eq.s32.totalorder %s37, 0
    %p74 = por %p72, %p73
    %p75 = scmp.ne.s32.totalorder %s61, %s62
    %p76 = scmp.eq.s32.totalorder %s38, 11
    %p77 = por %p75, %p76
    %p79 = scmp.ne.s32.totalorder %s62, %s78
    %p80 = scmp.eq.s32.totalorder %s38, 0
    %p81 = por %p79, %p80
    %s82 = sld [smem:[#allocation3 + %s39]]
    %s83 = sld [smem:[#allocation3 + %s51]]
    %s84 = ssub.s32 %s82, %s83
    %s85 = ssub.s32 %s40, %s47
    %s86 = sor.u32 %s84, %s85
    %p87 = scmp.eq.s32.totalorder %s86, 0
    %s89 = sadd.s32 %s88, 1
    %s90 = scalar_select %p87, %s88, %s89
    %p93 = pneg %p87
    %p94 = scmp.eq.s32.totalorder %s32, 11
    %p95 = por %p93, %p94
    %p96 = scmp.ne.s32.totalorder %s88, %s91
    %p97 = scmp.eq.s32.totalorder %s32, 0
    %p98 = por %p96, %p97
    %p99 = scmp.ne.s32.totalorder %s88, %s91
    %p100 = scmp.eq.s32.totalorder %s37, 11
    %p101 = por %p99, %p100
    %p102 = scmp.ne.s32.totalorder %s91, %s92
    %p103 = scmp.eq.s32.totalorder %s37, 0
    %p104 = por %p102, %p103
    %p105 = scmp.ne.s32.totalorder %s91, %s92
    %p106 = scmp.eq.s32.totalorder %s38, 11
    %p107 = por %p105, %p106
    %p109 = scmp.ne.s32.totalorder %s92, %s108
    %p110 = scmp.eq.s32.totalorder %s38, 0
    %p111 = por %p109, %p110
    %s112 = sld [smem:[#allocation4 + %s39]]
    %s113 = sld [smem:[#allocation4 + %s51]]
    %s114 = ssub.s32 %s112, %s113
    %s115 = ssub.s32 %s40, %s47
    %s116 = sor.u32 %s114, %s115
    %p117 = scmp.eq.s32.totalorder %s116, 0
    %s119 = sadd.s32 %s118, 1
    %s120 = scalar_select %p117, %s118, %s119
    %p123 = pneg %p117
    %p124 = scmp.eq.s32.totalorder %s32, 11
    %p125 = por %p123, %p124
    %p126 = scmp.ne.s32.totalorder %s118, %s121
    %p127 = scmp.eq.s32.totalorder %s32, 0
    %p128 = por %p126, %p127
    %p129 = scmp.ne.s32.totalorder %s118, %s121
    %p130 = scmp.eq.s32.totalorder %s37, 11
    %p131 = por %p129, %p130
    %p132 = scmp.ne.s32.totalorder %s121, %s122
    %p133 = scmp.eq.s32.totalorder %s37, 0
    %p134 = por %p132, %p133
    %p135 = scmp.ne.s32.totalorder %s121, %s122
    %p136 = scmp.eq.s32.totalorder %s38, 11
    %p137 = por %p135, %p136
    %p139 = scmp.ne.s32.totalorder %s122, %s138
    %p140 = scmp.eq.s32.totalorder %s38, 0
    %p141 = por %p139, %p140
    %s142 = sld [smem:[#allocation4 + %s39]]
    %s143 = sld [smem:[#allocation4 + %s51]]
    %s144 = ssub.s32 %s142, %s143
    %s145 = ssub.s32 %s40, %s47
    %s146 = sor.u32 %s144, %s145
    %p147 = scmp.eq.s32.totalorder %s146, 0
    %s149 = sadd.s32 %s148, 1
    %s150 = scalar_select %p147, %s148, %s149
    %p153 = pneg %p147
    %p154 = scmp.eq.s32.totalorder %s32, 11
    %p155 = por %p153, %p154
    %p156 = scmp.ne.s32.totalorder %s148, %s151
    %p157 = scmp.eq.s32.totalorder %s32, 0
    %p158 = por %p156, %p157
    %p159 = scmp.ne.s32.totalorder %s148, %s151
    %p160 = scmp.eq.s32.totalorder %s37, 11
    %p161 = por %p159, %p160
    %p162 = scmp.ne.s32.totalorder %s151, %s152
    %p163 = scmp.eq.s32.totalorder %s37, 0
    %p164 = por %p162, %p163
    %p165 = scmp.ne.s32.totalorder %s151, %s152
    %p166 = scmp.eq.s32.totalorder %s38, 11
    %p167 = por %p165, %p166
    %p169 = scmp.ne.s32.totalorder %s152, %s168
    %p170 = scmp.eq.s32.totalorder %s38, 0
    %p171 = por %p169, %p170
    %s173 = sadd.s32 %s172, 1
    %p176 = scmp.eq.s32.totalorder %s32, 11
    %p177 = scmp.ne.s32.totalorder %s172, %s174
    %p178 = scmp.eq.s32.totalorder %s32, 0
    %p179 = por %p177, %p178
    %p180 = scmp.ne.s32.totalorder %s172, %s174
    %p181 = scmp.eq.s32.totalorder %s37, 11
    %p182 = por %p180, %p181
    %p183 = scmp.ne.s32.totalorder %s174, %s175
    %p184 = scmp.eq.s32.totalorder %s37, 0
    %p185 = por %p183, %p184
    %p186 = scmp.ne.s32.totalorder %s174, %s175
    %p187 = scmp.eq.s32.totalorder %s38, 11
    %p188 = por %p186, %p187
    %p190 = scmp.ne.s32.totalorder %s175, %s189
    %p191 = scmp.eq.s32.totalorder %s38, 0
    %p192 = por %p190, %p191
    %s194 = sadd.s32 %s193, 1
    %p197 = scmp.eq.s32.totalorder %s32, 11
    %p198 = scmp.ne.s32.totalorder %s193, %s195
    %p199 = scmp.eq.s32.totalorder %s32, 0
    %p200 = por %p198, %p199
    %p201 = scmp.ne.s32.totalorder %s193, %s195
    %p202 = scmp.eq.s32.totalorder %s37, 11
    %p203 = por %p201, %p202
    %p204 = scmp.ne.s32.totalorder %s195, %s196
    %p205 = scmp.eq.s32.totalorder %s37, 0
    %p206 = por %p204, %p205
    %p207 = scmp.ne.s32.totalorder %s195, %s196
    %p208 = scmp.eq.s32.totalorder %s38, 11
    %p209 = por %p207, %p208
    %p211 = scmp.ne.s32.totalorder %s196, %s210
    %p212 = scmp.eq.s32.totalorder %s38, 0
    %p213 = por %p211, %p212
    %s215 = sadd.s32 %s214, 1
    %p218 = scmp.eq.s32.totalorder %s32, 11
    %p219 = scmp.ne.s32.totalorder %s214, %s216
    %p220 = scmp.eq.s32.totalorder %s32, 0
    %p221 = por %p219, %p220
    %p222 = scmp.ne.s32.totalorder %s214, %s216
    %p223 = scmp.eq.s32.totalorder %s37, 11
    %p224 = por %p222, %p223
    %p225 = scmp.ne.s32.totalorder %s216, %s217
    %p226 = scmp.eq.s32.totalorder %s37, 0
    %p227 = por %p225, %p226
    %p228 = scmp.ne.s32.totalorder %s216, %s217
    %p229 = scmp.eq.s32.totalorder %s38, 11
    %p230 = por %p228, %p229
    %p232 = scmp.ne.s32.totalorder %s217, %s231
    %p233 = scmp.eq.s32.totalorder %s38, 0
    %p234 = por %p232, %p233
    %s236 = sadd.s32 %s235, 1
    %p239 = scmp.eq.s32.totalorder %s32, 11
    %p240 = scmp.ne.s32.totalorder %s235, %s237
    %p241 = scmp.eq.s32.totalorder %s32, 0
    %p242 = por %p240, %p241
    %p243 = scmp.ne.s32.totalorder %s235, %s237
    %p244 = scmp.eq.s32.totalorder %s37, 11
    %p245 = por %p243, %p244
    %p246 = scmp.ne.s32.totalorder %s237, %s238
    %p247 = scmp.eq.s32.totalorder %s37, 0
    %p248 = por %p246, %p247
    %p249 = scmp.ne.s32.totalorder %s237, %s238
    %p250 = scmp.eq.s32.totalorder %s38, 11
    %p251 = por %p249, %p250
    %p253 = scmp.ne.s32.totalorder %s238, %s252
    %p254 = scmp.eq.s32.totalorder %s38, 0
    %p255 = por %p253, %p254
    %s257 = sadd.s32 %s256, 1
    %p260 = scmp.eq.s32.totalorder %s32, 11
    %p261 = scmp.ne.s32.totalorder %s256, %s258
    %p262 = scmp.eq.s32.totalorder %s32, 0
    %p263 = por %p261, %p262
    %p264 = scmp.ne.s32.totalorder %s256, %s258
    %p265 = scmp.eq.s32.totalorder %s37, 11
    %p266 = por %p264, %p265
    %p267 = scmp.ne.s32.totalorder %s258, %s259
    %p268 = scmp.eq.s32.totalorder %s37, 0
    %p269 = por %p267, %p268
    %p270 = scmp.ne.s32.totalorder %s258, %s259
    %p271 = scmp.eq.s32.totalorder %s38, 11
    %p272 = por %p270, %p271
    %p274 = scmp.ne.s32.totalorder %s259, %s273
    %p275 = scmp.eq.s32.totalorder %s38, 0
    %p276 = por %p274, %p275
    %s278 = sadd.s32 %s277, 1
    %p281 = scmp.eq.s32.totalorder %s32, 11
    %p282 = scmp.ne.s32.totalorder %s277, %s279
    %p283 = scmp.eq.s32.totalorder %s32, 0
    %p284 = por %p282, %p283
    %p285 = scmp.ne.s32.totalorder %s277, %s279
    %p286 = scmp.eq.s32.totalorder %s37, 11
    %p287 = por %p285, %p286
    %p288 = scmp.ne.s32.totalorder %s279, %s280
    %p289 = scmp.eq.s32.totalorder %s37, 0
    %p290 = por %p288, %p289
    %p291 = scmp.ne.s32.totalorder %s279, %s280
    %p292 = scmp.eq.s32.totalorder %s38, 11
    %p293 = por %p291, %p292
    %p295 = scmp.ne.s32.totalorder %s280, %s294
    %p296 = scmp.eq.s32.totalorder %s38, 0
    %p297 = por %p295, %p296
    %s299 = sadd.s32 %s298, 1
    %p302 = scmp.eq.s32.totalorder %s32, 11
    %p303 = scmp.ne.s32.totalorder %s298, %s300
    %p304 = scmp.eq.s32.totalorder %s32, 0
    %p305 = por %p303, %p304
    %p306 = scmp.ne.s32.totalorder %s298, %s300
    %p307 = scmp.eq.s32.totalorder %s37, 11
    %p308 = por %p306, %p307
    %p309 = scmp.ne.s32.totalorder %s300, %s301
    %p310 = scmp.eq.s32.totalorder %s37, 0
    %p311 = por %p309, %p310
    %p312 = scmp.ne.s32.totalorder %s300, %s301
    %p313 = scmp.eq.s32.totalorder %s38, 11
    %p314 = por %p312, %p313
    %p316 = scmp.ne.s32.totalorder %s301, %s315
    %p317 = scmp.eq.s32.totalorder %s38, 0
    %p318 = por %p316, %p317
    %s320 = sadd.s32 %s319, 1
    %p323 = scmp.eq.s32.totalorder %s32, 11
    %p324 = scmp.ne.s32.totalorder %s319, %s321
    %p325 = scmp.eq.s32.totalorder %s32, 0
    %p326 = por %p324, %p325
    %p327 = scmp.ne.s32.totalorder %s319, %s321
    %p328 = scmp.eq.s32.totalorder %s37, 11
    %p329 = por %p327, %p328
    %p330 = scmp.ne.s32.totalorder %s321, %s322
    %p331 = scmp.eq.s32.totalorder %s37, 0
    %p332 = por %p330, %p331
    %p333 = scmp.ne.s32.totalorder %s321, %s322
    %p334 = scmp.eq.s32.totalorder %s38, 11
    %p335 = por %p333, %p334
    %p337 = scmp.ne.s32.totalorder %s322, %s336
    %p338 = scmp.eq.s32.totalorder %s38, 0
    %p339 = por %p337, %p338
    %s341 = sadd.s32 %s340, 1
    %p344 = scmp.eq.s32.totalorder %s32, 11
    %p345 = scmp.ne.s32.totalorder %s340, %s342
    %p346 = scmp.eq.s32.totalorder %s32, 0
    %p347 = por %p345, %p346
    %p348 = scmp.ne.s32.totalorder %s340, %s342
    %p349 = scmp.eq.s32.totalorder %s37, 11
    %p350 = por %p348, %p349
    %p351 = scmp.ne.s32.totalorder %s342, %s343
    %p352 = scmp.eq.s32.totalorder %s37, 0
    %p353 = por %p351, %p352
    %p354 = scmp.ne.s32.totalorder %s342, %s343
    %p355 = scmp.eq.s32.totalorder %s38, 11
    %p356 = por %p354, %p355
    %p358 = scmp.ne.s32.totalorder %s343, %s357
    %p359 = scmp.eq.s32.totalorder %s38, 0
    %p360 = por %p358, %p359
    %s362 = sadd.s32 %s361, 1
    %p365 = scmp.eq.s32.totalorder %s32, 11
    %p366 = scmp.ne.s32.totalorder %s361, %s363
    %p367 = scmp.eq.s32.totalorder %s32, 0
    %p368 = por %p366, %p367
    %p369 = scmp.ne.s32.totalorder %s361, %s363
    %p370 = scmp.eq.s32.totalorder %s37, 11
    %p371 = por %p369, %p370
    %p372 = scmp.ne.s32.totalorder %s363, %s364
    %p373 = scmp.eq.s32.totalorder %s37, 0
    %p374 = por %p372, %p373
    %p375 = scmp.ne.s32.totalorder %s363, %s364
    %p376 = scmp.eq.s32.totalorder %s38, 11
    %p377 = por %p375, %p376
    %p379 = scmp.ne.s32.totalorder %s364, %s378
    %p380 = scmp.eq.s32.totalorder %s38, 0
    %p381 = por %p379, %p380
    %s382 = ssub.s32 %s39, %s51
    %s383 = ssub.s32 %s40, %s47
    %s384 = sor.u32 %s382, %s383
    %p385 = scmp.eq.s32.totalorder %s384, 0
    %s387 = sadd.s32 %s386, 1
    %s388 = scalar_select %p385, %s386, %s387
    %p391 = pneg %p385
    %p392 = scmp.eq.s32.totalorder %s32, 11
    %p393 = por %p391, %p392
    %p394 = scmp.ne.s32.totalorder %s386, %s389
    %p395 = scmp.eq.s32.totalorder %s32, 0
    %p396 = por %p394, %p395
    %p397 = scmp.ne.s32.totalorder %s386, %s389
    %p398 = scmp.eq.s32.totalorder %s37, 11
    %p399 = por %p397, %p398
    %p400 = scmp.ne.s32.totalorder %s389, %s390
    %p401 = scmp.eq.s32.totalorder %s37, 0
    %p402 = por %p400, %p401
    %p403 = scmp.ne.s32.totalorder %s389, %s390
    %p404 = scmp.eq.s32.totalorder %s38, 11
    %p405 = por %p403, %p404
    %p407 = scmp.ne.s32.totalorder %s390, %s406
    %p408 = scmp.eq.s32.totalorder %s38, 0
    %p409 = por %p407, %p408
    %p410 = scmp.le.s32.totalorder 1, %s32
    %p411 = scmp.lt.s32.totalorder %s32, 13
    %p412 = pnand %p410, %p411
    %p413 = pneg %p412
    // Predicated region
    $region9: #{fwd_full.4} parent=5 // pred_check
      _
    $region10: #{fwd_full.4} parent=5 // pred_check_branch
      %415 = sbr.rel (%p412) target = $region12
    $region11: #{fwd_full.4} parent=5 // pred_region
      %s416 = ssub.s32 %s32, 1
      // Predicated region
      $region13: #{fwd_full.4} parent=11 // pred_check
        %p417 = pneg %p185
      $region14: #{fwd_full.4} parent=11 // pred_check_branch
        %419 = sbr.rel (%p417) target = $region16
      $region15: #{fwd_full.4} parent=11 // pred_region
        _
      $region16: #{fwd_full.4} parent=11 // pred_fallthru
        _
      // Predicated region
      $region17: #{fwd_full.4} parent=11 // pred_check
        %p420 = pneg %p206
      $region18: #{fwd_full.4} parent=11 // pred_check_branch
        %422 = sbr.rel (%p420) target = $region20
      $region19: #{fwd_full.4} parent=11 // pred_region
        _
      $region20: #{fwd_full.4} parent=11 // pred_fallthru
        _
      // Predicated region
      $region21: #{fwd_full.4} parent=11 // pred_check
        %p423 = pneg %p227
      $region22: #{fwd_full.4} parent=11 // pred_check_branch
        %425 = sbr.rel (%p423) target = $region24
      $region23: #{fwd_full.4} parent=11 // pred_region
        _
      $region24: #{fwd_full.4} parent=11 // pred_fallthru
        _
      // Predicated region
      $region25: #{fwd_full.4} parent=11 // pred_check
        %p426 = pneg %p248
      $region26: #{fwd_full.4} parent=11 // pred_check_branch
        %428 = sbr.rel (%p426) target = $region28
      $region27: #{fwd_full.4} parent=11 // pred_region
        _
      $region28: #{fwd_full.4} parent=11 // pred_fallthru
        _
      // Predicated region
      $region29: #{fwd_full.4} parent=11 // pred_check
        %p429 = pneg %p269
      $region30: #{fwd_full.4} parent=11 // pred_check_branch
        %431 = sbr.rel (%p429) target = $region32
      $region31: #{fwd_full.4} parent=11 // pred_region
        _
      $region32: #{fwd_full.4} parent=11 // pred_fallthru
        _
      // Predicated region
      $region33: #{fwd_full.4} parent=11 // pred_check
        %p432 = pneg %p290
      $region34: #{fwd_full.4} parent=11 // pred_check_branch
        %434 = sbr.rel (%p432) target = $region36
      $region35: #{fwd_full.4} parent=11 // pred_region
        _
      $region36: #{fwd_full.4} parent=11 // pred_fallthru
        _
      // Predicated region
      $region37: #{fwd_full.4} parent=11 // pred_check
        %p435 = pneg %p311
      $region38: #{fwd_full.4} parent=11 // pred_check_branch
        %437 = sbr.rel (%p435) target = $region40
      $region39: #{fwd_full.4} parent=11 // pred_region
        _
      $region40: #{fwd_full.4} parent=11 // pred_fallthru
        _
      // Predicated region
      $region41: #{fwd_full.4} parent=11 // pred_check
        %p438 = pneg %p332
      $region42: #{fwd_full.4} parent=11 // pred_check_branch
        %440 = sbr.rel (%p438) target = $region44
      $region43: #{fwd_full.4} parent=11 // pred_region
        _
      $region44: #{fwd_full.4} parent=11 // pred_fallthru
        _
      // Predicated region
      $region45: #{fwd_full.4} parent=11 // pred_check
        %p441 = pneg %p353
      $region46: #{fwd_full.4} parent=11 // pred_check_branch
        %443 = sbr.rel (%p441) target = $region48
      $region47: #{fwd_full.4} parent=11 // pred_region
        _
      $region48: #{fwd_full.4} parent=11 // pred_fallthru
        _
      // Predicated region
      $region49: #{fwd_full.4} parent=11 // pred_check
        %p444 = pneg %p374
      $region50: #{fwd_full.4} parent=11 // pred_check_branch
        %446 = sbr.rel (%p444) target = $region52
      $region51: #{fwd_full.4} parent=11 // pred_region
        _
      $region52: #{fwd_full.4} parent=11 // pred_fallthru
        _
    $region12: #{fwd_full.4} parent=5 // pred_fallthru
      _
    %p447 = scmp.lt.s32.totalorder %s32, 12
    // Predicated region
    $region53: #{fwd_full.4} parent=5 // pred_check
      %p448 = pneg %p447
    $region54: #{fwd_full.4} parent=5 // pred_check_branch
      %450 = sbr.rel (%p448) target = $region56
    $region55: #{fwd_full.4} parent=5 // pred_region
      // Predicated region
      $region57: #{fwd_full.4} parent=55 // pred_check
        %p451 = pneg %p68
      $region58: #{fwd_full.4} parent=55 // pred_check_branch
        %453 = sbr.rel (%p451) target = $region60
      $region59: #{fwd_full.4} parent=55 // pred_region
        %s454 = sld [smem:[#allocation3 + %s39]]
        %p455 = scmp.lt.s32.totalorder %s454, 2
        %s456 = scalar_select %p455, %s454, 2
        %p457 = scmp.lt.s32.totalorder %s40, 1
        %s458 = scalar_select %p457, %s40, 1
        %s459 = smul.addr %s456, 2
        %s460 = sadd.s32 %s458, %s459
        %s461 = smul.addr %s460, 8
        %s462 = scalar_lea.vmem %s2, %s461
        %s463 = sld [smem:[#allocation3 + %s39]]
      $region60: #{fwd_full.4} parent=55 // pred_fallthru
        _
      // Predicated region
      $region61: #{fwd_full.4} parent=55 // pred_check
        %p464 = pneg %p98
      $region62: #{fwd_full.4} parent=55 // pred_check_branch
        %466 = sbr.rel (%p464) target = $region64
      $region63: #{fwd_full.4} parent=55 // pred_region
        %s467 = sld [smem:[#allocation3 + %s39]]
        %p468 = scmp.lt.s32.totalorder %s467, 2
        %s469 = scalar_select %p468, %s467, 2
        %p470 = scmp.lt.s32.totalorder %s40, 1
        %s471 = scalar_select %p470, %s40, 1
        %s472 = smul.addr %s471, 4
        %s473 = smul.addr %s469, 8
        %s474 = sadd.s32 %s472, %s473
        %s475 = smul.addr %s474, 8
        %s476 = scalar_lea.vmem %s3, %s475
        %s477 = sld [smem:[#allocation3 + %s39]]
      $region64: #{fwd_full.4} parent=55 // pred_fallthru
        _
      // Predicated region
      $region65: #{fwd_full.4} parent=55 // pred_check
        %p478 = pneg %p128
      $region66: #{fwd_full.4} parent=55 // pred_check_branch
        %480 = sbr.rel (%p478) target = $region68
      $region67: #{fwd_full.4} parent=55 // pred_region
        %s481 = sld [smem:[#allocation4 + %s39]]
        %p482 = scmp.lt.s32.totalorder %s481, 2
        %s483 = scalar_select %p482, %s481, 2
        %p484 = scmp.lt.s32.totalorder %s40, 1
        %s485 = scalar_select %p484, %s40, 1
        %s486 = smul.addr %s485, 4
        %s487 = smul.addr %s483, 8
        %s488 = sadd.s32 %s486, %s487
        %s489 = smul.addr %s488, 8
        %s490 = scalar_lea.vmem %s4, %s489
        %s491 = sld [smem:[#allocation4 + %s39]]
      $region68: #{fwd_full.4} parent=55 // pred_fallthru
        _
      // Predicated region
      $region69: #{fwd_full.4} parent=55 // pred_check
        %p492 = pneg %p158
      $region70: #{fwd_full.4} parent=55 // pred_check_branch
        %494 = sbr.rel (%p492) target = $region72
      $region71: #{fwd_full.4} parent=55 // pred_region
        %s495 = sld [smem:[#allocation4 + %s39]]
        %p496 = scmp.lt.s32.totalorder %s495, 2
        %s497 = scalar_select %p496, %s495, 2
        %p498 = scmp.lt.s32.totalorder %s40, 1
        %s499 = scalar_select %p498, %s40, 1
        %s500 = smul.addr %s499, 4
        %s501 = smul.addr %s497, 8
        %s502 = sadd.s32 %s500, %s501
        %s503 = smul.addr %s502, 8
        %s504 = scalar_lea.vmem %s5, %s503
        %s505 = sld [smem:[#allocation4 + %s39]]
      $region72: #{fwd_full.4} parent=55 // pred_fallthru
        _
    $region56: #{fwd_full.4} parent=5 // pred_fallthru
      _
    %p506 = scmp.le.s32.totalorder 1, %s32
    %p507 = scmp.lt.s32.totalorder %s32, 13
    %p508 = pnand %p506, %p507
    %p509 = pneg %p508
    // Predicated region
    $region73: #{fwd_full.4} parent=5 // pred_check
      _
    $region74: #{fwd_full.4} parent=5 // pred_check_branch
      %511 = sbr.rel (%p508) target = $region76
    $region75: #{fwd_full.4} parent=5 // pred_region
      %s512 = ssub.s32 %s32, 1
      %s513 = sld [smem:[#allocation3 + %s41]]
      %p514 = scmp.lt.s32.totalorder %s513, 2
      %s515 = scalar_select %p514, %s513, 2
      %p516 = scmp.lt.s32.totalorder %s42, 1
      %s517 = scalar_select %p516, %s42, 1
      %s518 = smul.addr %s515, 2
      %s519 = sadd.s32 %s517, %s518
      %s520 = smul.addr %s519, 8
      %s521 = scalar_lea.vmem %s2, %s520
      %p522 = pneg %p74
      %p523 = pneg %p71
      %s524 = sld [smem:[#allocation3 + %s41]]
      %p525 = scmp.lt.s32.totalorder %s524, 2
      %s526 = scalar_select %p525, %s524, 2
      %p527 = scmp.lt.s32.totalorder %s42, 1
      %s528 = scalar_select %p527, %s42, 1
      %s529 = smul.addr %s528, 4
      %s530 = smul.addr %s526, 8
      %s531 = sadd.s32 %s529, %s530
      %s532 = smul.addr %s531, 8
      %s533 = scalar_lea.vmem %s3, %s532
      %p534 = pneg %p104
      %p535 = pneg %p101
      %s536 = sld [smem:[#allocation4 + %s41]]
      %p537 = scmp.lt.s32.totalorder %s536, 2
      %s538 = scalar_select %p537, %s536, 2
      %p539 = scmp.lt.s32.totalorder %s42, 1
      %s540 = scalar_select %p539, %s42, 1
      %s541 = smul.addr %s540, 4
      %s542 = smul.addr %s538, 8
      %s543 = sadd.s32 %s541, %s542
      %s544 = smul.addr %s543, 8
      %s545 = scalar_lea.vmem %s4, %s544
      %p546 = pneg %p134
      %p547 = pneg %p131
      %s548 = sld [smem:[#allocation4 + %s41]]
      %p549 = scmp.lt.s32.totalorder %s548, 2
      %s550 = scalar_select %p549, %s548, 2
      %p551 = scmp.lt.s32.totalorder %s42, 1
      %s552 = scalar_select %p551, %s42, 1
      %s553 = smul.addr %s552, 4
      %s554 = smul.addr %s550, 8
      %s555 = sadd.s32 %s553, %s554
      %s556 = smul.addr %s555, 8
      %s557 = scalar_lea.vmem %s5, %s556
      %p558 = pneg %p164
      %p559 = pneg %p161
      %p560 = pneg %p185
      %p561 = pneg %p182
      %p562 = pneg %p206
      %p563 = pneg %p203
      %p564 = pneg %p227
      %p565 = pneg %p224
      %p566 = pneg %p248
      %p567 = pneg %p245
      %p568 = pneg %p269
      %p569 = pneg %p266
      %p570 = pneg %p290
      %p571 = pneg %p287
      %p572 = pneg %p311
      %p573 = pneg %p308
      %p574 = pneg %p332
      %p575 = pneg %p329
      %p576 = pneg %p353
      %p577 = pneg %p350
      %p578 = pneg %p374
      %p579 = pneg %p371
      %p580 = pneg %p402
      %p581 = pneg %p399
      %p582 = scmp.lt.s32.totalorder %s41, 5
      %s583 = scalar_select %p582, %s41, 5
      %p584 = scmp.lt.s32.totalorder %s42, 1
      %s585 = scalar_select %p584, %s42, 1
      %s586 = smul.addr %s583, 2
      %s587 = sadd.s32 %s585, %s586
      %s588 = scalar_lea.vmem %s16, %s587
      %s589 = sld [smem:[#allocation3 + %s41]]
      %p590 = scmp.lt.s32.totalorder %s589, 2
      %s591 = scalar_select %p590, %s589, 2
      %p592 = scmp.lt.s32.totalorder %s42, 1
      %s593 = scalar_select %p592, %s42, 1
      %s594 = smul.addr %s591, 2
      %s595 = sadd.s32 %s593, %s594
      %s596 = smul.addr %s595, 8
      %s597 = scalar_lea.vmem %s2, %s596
      %s598 = sld [smem:[#allocation3 + %s41]]
      %s599 = sld [smem:[#allocation3 + %s41]]
      %p600 = scmp.lt.s32.totalorder %s599, 2
      %s601 = scalar_select %p600, %s599, 2
      %p602 = scmp.lt.s32.totalorder %s42, 1
      %s603 = scalar_select %p602, %s42, 1
      %s604 = smul.addr %s603, 4
      %s605 = smul.addr %s601, 8
      %s606 = sadd.s32 %s604, %s605
      %s607 = smul.addr %s606, 8
      %s608 = scalar_lea.vmem %s3, %s607
      %s609 = sld [smem:[#allocation3 + %s41]]
      %s610 = sld [smem:[#allocation4 + %s41]]
      %p611 = scmp.lt.s32.totalorder %s610, 2
      %s612 = scalar_select %p611, %s610, 2
      %p613 = scmp.lt.s32.totalorder %s42, 1
      %s614 = scalar_select %p613, %s42, 1
      %s615 = smul.addr %s614, 4
      %s616 = smul.addr %s612, 8
      %s617 = sadd.s32 %s615, %s616
      %s618 = smul.addr %s617, 8
      %s619 = scalar_lea.vmem %s4, %s618
      %s620 = sld [smem:[#allocation4 + %s41]]
      %s621 = sld [smem:[#allocation4 + %s41]]
      %p622 = scmp.lt.s32.totalorder %s621, 2
      %s623 = scalar_select %p622, %s621, 2
      %p624 = scmp.lt.s32.totalorder %s42, 1
      %s625 = scalar_select %p624, %s42, 1
      %s626 = smul.addr %s625, 4
      %s627 = smul.addr %s623, 8
      %s628 = sadd.s32 %s626, %s627
      %s629 = smul.addr %s628, 8
      %s630 = scalar_lea.vmem %s5, %s629
      %s631 = sld [smem:[#allocation4 + %s41]]
      %p632 = scmp.lt.s32.totalorder %s41, 5
      %s633 = scalar_select %p632, %s41, 5
      %p634 = scmp.lt.s32.totalorder %s42, 1
      %s635 = scalar_select %p634, %s42, 1
      %s636 = smul.addr %s633, 2
      %s637 = sadd.s32 %s635, %s636
      %s638 = scalar_lea.vmem %s16, %s637
      %v639 = vld [vmem:[%s597] sm:$0xff]
      %v640 = vld [vmem:[%s608] sm:$0xff]
      %v641 = vld [vmem:[%s608 + $0x8] sm:$0xff]
      %v642 = vld [vmem:[%s608 + $0x10] sm:$0xff]
      %v643 = vld [vmem:[%s608 + $0x18] sm:$0xff]
      %v644 = vld [vmem:[%s619] sm:$0xff]
      %v645 = vld [vmem:[%s619 + $0x8] sm:$0xff]
      %v646 = vld [vmem:[%s619 + $0x10] sm:$0xff]
      %v647 = vld [vmem:[%s619 + $0x18] sm:$0xff]
      %v648 = vld [vmem:[%s630] sm:$0xff]
      %v649 = vld [vmem:[%s630 + $0x8] sm:$0xff]
      %v650 = vld [vmem:[%s630 + $0x10] sm:$0xff]
      %v651 = vld [vmem:[%s630 + $0x18] sm:$0xff]
      %vm652 = vcmask 261120
      %v654 = vsel %vm652, %v640, 0
      %v657 = vsel %vm652, %v644, 0
      %659 = vmatprep.subr.mxu0 0.0
      %660 = vmatpush1.xpose.msra.mxu0 0.0
      %661 = vmatprep.subr.mxu0 0.0
      %662 = vmatpush1.xpose.msra.mxu0 0.0
      %663 = vmatprep.subr.mxu0 0.0
      %664 = vmatpush1.xpose.msra.mxu0 0.0
      %665 = vmatprep.subr.mxu0 0.0
      %666 = vmatpush1.xpose.msra.mxu0 0.0
      %667 = vmatprep.subr.mxu0 0.0
      %668 = vmatpush1.xpose.msra.mxu0 0.0
      %669 = vmatprep.subr.mxu0 0.0
      %670 = vmatpush1.xpose.msra.mxu0 0.0
      %671 = vmatprep.subr.mxu0 0.0
      %672 = vmatpush1.xpose.msra.mxu0 0.0
      %673 = vmatprep.subr.mxu0 0.0
      %674 = vmatpush1.xpose.msra.mxu0 0.0
      %675 = vmatprep.subr.mxu0 0.0
      %676 = vmatpush1.xpose.msra.mxu0 0.0
      %677 = vmatprep.subr.mxu0 0.0
      %678 = vmatpush1.xpose.msra.mxu0 0.0
      %679 = vmatprep.subr.mxu0 0.0
      %680 = vmatpush1.xpose.msra.mxu0 0.0
      %681 = vmatprep.subr.mxu0 0.0
      %682 = vmatpush1.xpose.msra.mxu0 0.0
      %683 = vmatprep.subr.mxu0 0.0
      %684 = vmatpush1.xpose.msra.mxu0 0.0
      %685 = vmatprep.subr.mxu0 0.0
      %686 = vmatpush1.xpose.msra.mxu0 0.0
      %687 = vmatprep.subr.mxu0 0.0
      %688 = vmatpush1.xpose.msra.mxu0 0.0
      %689 = vmatprep.subr.mxu0 0.0
      %690 = vmatpush1.xpose.msra.mxu0 %v657
      %691 = vmatprep.subr.mxu0 0.0
      %692 = vmatpush2.xpose.msra.mxu0 0.0
      %693 = vmatprep.subr.mxu0 0.0
      %694 = vmatpush2.xpose.msra.mxu0 0.0
      %695 = vmatprep.subr.mxu0 0.0
      %696 = vmatpush2.xpose.msra.mxu0 0.0
      %697 = vmatprep.subr.mxu0 0.0
      %698 = vmatpush2.xpose.msra.mxu0 0.0
      %699 = vmatprep.subr.mxu0 0.0
      %700 = vmatpush2.xpose.msra.mxu0 0.0
      %701 = vmatprep.subr.mxu0 0.0
      %702 = vmatpush2.xpose.msra.mxu0 0.0
      %703 = vmatprep.subr.mxu0 0.0
      %704 = vmatpush2.xpose.msra.mxu0 0.0
      %705 = vmatprep.subr.mxu0 0.0
      %706 = vmatpush2.xpose.msra.mxu0 0.0
      %707 = vmatprep.subr.mxu0 0.0
      %708 = vmatpush2.xpose.msra.mxu0 0.0
      %709 = vmatprep.subr.mxu0 0.0
      %710 = vmatpush2.xpose.msra.mxu0 0.0
      %711 = vmatprep.subr.mxu0 0.0
      %712 = vmatpush2.xpose.msra.mxu0 0.0
      %713 = vmatprep.subr.mxu0 0.0
      %714 = vmatpush2.xpose.msra.mxu0 0.0
      %715 = vmatprep.subr.mxu0 0.0
      %716 = vmatpush2.xpose.msra.mxu0 0.0
      %717 = vmatprep.subr.mxu0 0.0
      %718 = vmatpush2.xpose.msra.mxu0 0.0
      %719 = vmatprep.subr.mxu0 0.0
      %720 = vmatpush2.xpose.msra.mxu0 0.0
      %721 = vmatprep.subr.mxu0 0.0
      %722 = vmatpush2.xpose.msra.mxu0 0.0
      %723 = vmatprep.mubr.f32.mxu0 0.0
      %724 = vmatmul.mubr.f32.gmra.mxu0 %v654
      %v725 = vpop.f32.mrf.mxu0
      %v726 = vadd.f32 0.0, %v725
      %v727 = vpop.f32.mrf.mxu0
      %728 = vdwg.mxu0
      %v730 = vsel %vm652, %v641, 0
      %v733 = vsel %vm652, %v645, 0
      %735 = vmatprep.subr.mxu0 0.0
      %736 = vmatpush1.xpose.msra.mxu0 0.0
      %737 = vmatprep.subr.mxu0 0.0
      %738 = vmatpush1.xpose.msra.mxu0 0.0
      %739 = vmatprep.subr.mxu0 0.0
      %740 = vmatpush1.xpose.msra.mxu0 0.0
      %741 = vmatprep.subr.mxu0 0.0
      %742 = vmatpush1.xpose.msra.mxu0 0.0
      %743 = vmatprep.subr.mxu0 0.0
      %744 = vmatpush1.xpose.msra.mxu0 0.0
      %745 = vmatprep.subr.mxu0 0.0
      %746 = vmatpush1.xpose.msra.mxu0 0.0
      %747 = vmatprep.subr.mxu0 0.0
      %748 = vmatpush1.xpose.msra.mxu0 0.0
      %749 = vmatprep.subr.mxu0 0.0
      %750 = vmatpush1.xpose.msra.mxu0 0.0
      %751 = vmatprep.subr.mxu0 0.0
      %752 = vmatpush1.xpose.msra.mxu0 0.0
      %753 = vmatprep.subr.mxu0 0.0
      %754 = vmatpush1.xpose.msra.mxu0 0.0
      %755 = vmatprep.subr.mxu0 0.0
      %756 = vmatpush1.xpose.msra.mxu0 0.0
      %757 = vmatprep.subr.mxu0 0.0
      %758 = vmatpush1.xpose.msra.mxu0 0.0
      %759 = vmatprep.subr.mxu0 0.0
      %760 = vmatpush1.xpose.msra.mxu0 0.0
      %761 = vmatprep.subr.mxu0 0.0
      %762 = vmatpush1.xpose.msra.mxu0 0.0
      %763 = vmatprep.subr.mxu0 0.0
      %764 = vmatpush1.xpose.msra.mxu0 0.0
      %765 = vmatprep.subr.mxu0 0.0
      %766 = vmatpush1.xpose.msra.mxu0 %v733
      %767 = vmatprep.subr.mxu0 0.0
      %768 = vmatpush2.xpose.msra.mxu0 0.0
      %769 = vmatprep.subr.mxu0 0.0
      %770 = vmatpush2.xpose.msra.mxu0 0.0
      %771 = vmatprep.subr.mxu0 0.0
      %772 = vmatpush2.xpose.msra.mxu0 0.0
      %773 = vmatprep.subr.mxu0 0.0
      %774 = vmatpush2.xpose.msra.mxu0 0.0
      %775 = vmatprep.subr.mxu0 0.0
      %776 = vmatpush2.xpose.msra.mxu0 0.0
      %777 = vmatprep.subr.mxu0 0.0
      %778 = vmatpush2.xpose.msra.mxu0 0.0
      %779 = vmatprep.subr.mxu0 0.0
      %780 = vmatpush2.xpose.msra.mxu0 0.0
      %781 = vmatprep.subr.mxu0 0.0
      %782 = vmatpush2.xpose.msra.mxu0 0.0
      %783 = vmatprep.subr.mxu0 0.0
      %784 = vmatpush2.xpose.msra.mxu0 0.0
      %785 = vmatprep.subr.mxu0 0.0
      %786 = vmatpush2.xpose.msra.mxu0 0.0
      %787 = vmatprep.subr.mxu0 0.0
      %788 = vmatpush2.xpose.msra.mxu0 0.0
      %789 = vmatprep.subr.mxu0 0.0
      %790 = vmatpush2.xpose.msra.mxu0 0.0
      %791 = vmatprep.subr.mxu0 0.0
      %792 = vmatpush2.xpose.msra.mxu0 0.0
      %793 = vmatprep.subr.mxu0 0.0
      %794 = vmatpush2.xpose.msra.mxu0 0.0
      %795 = vmatprep.subr.mxu0 0.0
      %796 = vmatpush2.xpose.msra.mxu0 0.0
      %797 = vmatprep.subr.mxu0 0.0
      %798 = vmatpush2.xpose.msra.mxu0 0.0
      %799 = vmatprep.mubr.f32.mxu0 0.0
      %800 = vmatmul.mubr.f32.gmra.mxu0 %v730
      %v801 = vpop.f32.mrf.mxu0
      %v802 = vadd.f32 0.0, %v801
      %v803 = vpop.f32.mrf.mxu0
      %804 = vdwg.mxu0
      %v806 = vsel %vm652, %v642, 0
      %v809 = vsel %vm652, %v646, 0
      %811 = vmatprep.subr.mxu0 0.0
      %812 = vmatpush1.xpose.msra.mxu0 0.0
      %813 = vmatprep.subr.mxu0 0.0
      %814 = vmatpush1.xpose.msra.mxu0 0.0
      %815 = vmatprep.subr.mxu0 0.0
      %816 = vmatpush1.xpose.msra.mxu0 0.0
      %817 = vmatprep.subr.mxu0 0.0
      %818 = vmatpush1.xpose.msra.mxu0 0.0
      %819 = vmatprep.subr.mxu0 0.0
      %820 = vmatpush1.xpose.msra.mxu0 0.0
      %821 = vmatprep.subr.mxu0 0.0
      %822 = vmatpush1.xpose.msra.mxu0 0.0
      %823 = vmatprep.subr.mxu0 0.0
      %824 = vmatpush1.xpose.msra.mxu0 0.0
      %825 = vmatprep.subr.mxu0 0.0
      %826 = vmatpush1.xpose.msra.mxu0 0.0
      %827 = vmatprep.subr.mxu0 0.0
      %828 = vmatpush1.xpose.msra.mxu0 0.0
      %829 = vmatprep.subr.mxu0 0.0
      %830 = vmatpush1.xpose.msra.mxu0 0.0
      %831 = vmatprep.subr.mxu0 0.0
      %832 = vmatpush1.xpose.msra.mxu0 0.0
      %833 = vmatprep.subr.mxu0 0.0
      %834 = vmatpush1.xpose.msra.mxu0 0.0
      %835 = vmatprep.subr.mxu0 0.0
      %836 = vmatpush1.xpose.msra.mxu0 0.0
      %837 = vmatprep.subr.mxu0 0.0
      %838 = vmatpush1.xpose.msra.mxu0 0.0
      %839 = vmatprep.subr.mxu0 0.0
      %840 = vmatpush1.xpose.msra.mxu0 0.0
      %841 = vmatprep.subr.mxu0 0.0
      %842 = vmatpush1.xpose.msra.mxu0 %v809
      %843 = vmatprep.subr.mxu0 0.0
      %844 = vmatpush2.xpose.msra.mxu0 0.0
      %845 = vmatprep.subr.mxu0 0.0
      %846 = vmatpush2.xpose.msra.mxu0 0.0
      %847 = vmatprep.subr.mxu0 0.0
      %848 = vmatpush2.xpose.msra.mxu0 0.0
      %849 = vmatprep.subr.mxu0 0.0
      %850 = vmatpush2.xpose.msra.mxu0 0.0
      %851 = vmatprep.subr.mxu0 0.0
      %852 = vmatpush2.xpose.msra.mxu0 0.0
      %853 = vmatprep.subr.mxu0 0.0
      %854 = vmatpush2.xpose.msra.mxu0 0.0
      %855 = vmatprep.subr.mxu0 0.0
      %856 = vmatpush2.xpose.msra.mxu0 0.0
      %857 = vmatprep.subr.mxu0 0.0
      %858 = vmatpush2.xpose.msra.mxu0 0.0
      %859 = vmatprep.subr.mxu0 0.0
      %860 = vmatpush2.xpose.msra.mxu0 0.0
      %861 = vmatprep.subr.mxu0 0.0
      %862 = vmatpush2.xpose.msra.mxu0 0.0
      %863 = vmatprep.subr.mxu0 0.0
      %864 = vmatpush2.xpose.msra.mxu0 0.0
      %865 = vmatprep.subr.mxu0 0.0
      %866 = vmatpush2.xpose.msra.mxu0 0.0
      %867 = vmatprep.subr.mxu0 0.0
      %868 = vmatpush2.xpose.msra.mxu0 0.0
      %869 = vmatprep.subr.mxu0 0.0
      %870 = vmatpush2.xpose.msra.mxu0 0.0
      %871 = vmatprep.subr.mxu0 0.0
      %872 = vmatpush2.xpose.msra.mxu0 0.0
      %873 = vmatprep.subr.mxu0 0.0
      %874 = vmatpush2.xpose.msra.mxu0 0.0
      %875 = vmatprep.mubr.f32.mxu0 0.0
      %876 = vmatmul.mubr.f32.gmra.mxu0 %v806
      %v877 = vpop.f32.mrf.mxu0
      %v878 = vadd.f32 0.0, %v877
      %v879 = vpop.f32.mrf.mxu0
      %880 = vdwg.mxu0
      %v882 = vsel %vm652, %v643, 0
      %v885 = vsel %vm652, %v647, 0
      %887 = vmatprep.subr.mxu0 0.0
      %888 = vmatpush1.xpose.msra.mxu0 0.0
      %889 = vmatprep.subr.mxu0 0.0
      %890 = vmatpush1.xpose.msra.mxu0 0.0
      %891 = vmatprep.subr.mxu0 0.0
      %892 = vmatpush1.xpose.msra.mxu0 0.0
      %893 = vmatprep.subr.mxu0 0.0
      %894 = vmatpush1.xpose.msra.mxu0 0.0
      %895 = vmatprep.subr.mxu0 0.0
      %896 = vmatpush1.xpose.msra.mxu0 0.0
      %897 = vmatprep.subr.mxu0 0.0
      %898 = vmatpush1.xpose.msra.mxu0 0.0
      %899 = vmatprep.subr.mxu0 0.0
      %900 = vmatpush1.xpose.msra.mxu0 0.0
      %901 = vmatprep.subr.mxu0 0.0
      %902 = vmatpush1.xpose.msra.mxu0 0.0
      %903 = vmatprep.subr.mxu0 0.0
      %904 = vmatpush1.xpose.msra.mxu0 0.0
      %905 = vmatprep.subr.mxu0 0.0
      %906 = vmatpush1.xpose.msra.mxu0 0.0
      %907 = vmatprep.subr.mxu0 0.0
      %908 = vmatpush1.xpose.msra.mxu0 0.0
      %909 = vmatprep.subr.mxu0 0.0
      %910 = vmatpush1.xpose.msra.mxu0 0.0
      %911 = vmatprep.subr.mxu0 0.0
      %912 = vmatpush1.xpose.msra.mxu0 0.0
      %913 = vmatprep.subr.mxu0 0.0
      %914 = vmatpush1.xpose.msra.mxu0 0.0
      %915 = vmatprep.subr.mxu0 0.0
      %916 = vmatpush1.xpose.msra.mxu0 0.0
      %917 = vmatprep.subr.mxu0 0.0
      %918 = vmatpush1.xpose.msra.mxu0 %v885
      %919 = vmatprep.subr.mxu0 0.0
      %920 = vmatpush2.xpose.msra.mxu0 0.0
      %921 = vmatprep.subr.mxu0 0.0
      %922 = vmatpush2.xpose.msra.mxu0 0.0
      %923 = vmatprep.subr.mxu0 0.0
      %924 = vmatpush2.xpose.msra.mxu0 0.0
      %925 = vmatprep.subr.mxu0 0.0
      %926 = vmatpush2.xpose.msra.mxu0 0.0
      %927 = vmatprep.subr.mxu0 0.0
      %928 = vmatpush2.xpose.msra.mxu0 0.0
      %929 = vmatprep.subr.mxu0 0.0
      %930 = vmatpush2.xpose.msra.mxu0 0.0
      %931 = vmatprep.subr.mxu0 0.0
      %932 = vmatpush2.xpose.msra.mxu0 0.0
      %933 = vmatprep.subr.mxu0 0.0
      %934 = vmatpush2.xpose.msra.mxu0 0.0
      %935 = vmatprep.subr.mxu0 0.0
      %936 = vmatpush2.xpose.msra.mxu0 0.0
      %937 = vmatprep.subr.mxu0 0.0
      %938 = vmatpush2.xpose.msra.mxu0 0.0
      %939 = vmatprep.subr.mxu0 0.0
      %940 = vmatpush2.xpose.msra.mxu0 0.0
      %941 = vmatprep.subr.mxu0 0.0
      %942 = vmatpush2.xpose.msra.mxu0 0.0
      %943 = vmatprep.subr.mxu0 0.0
      %944 = vmatpush2.xpose.msra.mxu0 0.0
      %945 = vmatprep.subr.mxu0 0.0
      %946 = vmatpush2.xpose.msra.mxu0 0.0
      %947 = vmatprep.subr.mxu0 0.0
      %948 = vmatpush2.xpose.msra.mxu0 0.0
      %949 = vmatprep.subr.mxu0 0.0
      %950 = vmatpush2.xpose.msra.mxu0 0.0
      %951 = vmatprep.mubr.f32.mxu0 0.0
      %952 = vmatmul.mubr.f32.gmra.mxu0 %v882
      %v953 = vpop.f32.mrf.mxu0
      %v954 = vadd.f32 0.0, %v953
      %v955 = vpop.f32.mrf.mxu0
      %956 = vdwg.mxu0
      %v957 = vmul.f32 %v726, 0.17677669
      %v958 = vmul.f32 %v802, 0.17677669
      %v959 = vmul.f32 %v878, 0.17677669
      %v960 = vmul.f32 %v954, 0.17677669
      %vm961 = vcmask 64512
      %v962 = vsel %vm961, %v957, -inf
      %963 = vmax.xlane.f32.xlu0 %v962
      %v964 = vpop.xlane.xlu0 %963
      %v965 = vsel %vm961, %v958, -inf
      %966 = vmax.xlane.f32.xlu0 %v965
      %v967 = vpop.xlane.xlu0 %966
      %v968 = vsel %vm961, %v959, -inf
      %969 = vmax.xlane.f32.xlu0 %v968
      %v970 = vpop.xlane.xlu0 %969
      %v971 = vsel %vm961, %v960, -inf
      %972 = vmax.xlane.f32.xlu0 %v971
      %v973 = vpop.xlane.xlu0 %972
      %v974 = vsub.f32 %v957, %v964
      %v975 = vsub.f32 %v958, %v967
      %v976 = vsub.f32 %v959, %v970
      %v977 = vsub.f32 %v960, %v973
      %v978 = vmul.f32 %v974, 1.442695
      %v979 = vpow.pop %v978
      %v980 = vmul.f32 %v975, 1.442695
      %v981 = vpow.pop %v980
      %v982 = vmul.f32 %v976, 1.442695
      %v983 = vpow.pop %v982
      %v984 = vmul.f32 %v977, 1.442695
      %v985 = vpow.pop %v984
      %v986 = vsel %vm961, %v979, 0.0
      %987 = vadd.xlane.f32.xlu0 %v986
      %v988 = vpop.xlane.xlu0 %987
      %v989 = vsel %vm961, %v981, 0.0
      %990 = vadd.xlane.f32.xlu0 %v989
      %v991 = vpop.xlane.xlu0 %990
      %v992 = vsel %vm961, %v983, 0.0
      %993 = vadd.xlane.f32.xlu0 %v992
      %v994 = vpop.xlane.xlu0 %993
      %v995 = vsel %vm961, %v985, 0.0
      %996 = vadd.xlane.f32.xlu0 %v995
      %v997 = vpop.xlane.xlu0 %996
      %v998 = vrcp.pop %v988
      %v999 = vrcp.pop %v991
      %v1000 = vrcp.pop %v994
      %v1001 = vrcp.pop %v997
      %v1002 = vmul.f32 %v979, %v998
      %v1003 = vmul.f32 %v981, %v999
      %v1004 = vmul.f32 %v983, %v1000
      %v1005 = vmul.f32 %v985, %v1001
      %v1007 = vsel %vm961, %v1002, 0
      %1009 = vmatprep.subr.mxu0 0.0
      %1010 = vmatpush1.msra.mxu0 0.0
      %1011 = vmatprep.subr.mxu0 0.0
      %1012 = vmatpush1.msra.mxu0 0.0
      %1013 = vmatprep.subr.mxu0 0.0
      %1014 = vmatpush1.msra.mxu0 0.0
      %1015 = vmatprep.subr.mxu0 0.0
      %1016 = vmatpush1.msra.mxu0 0.0
      %1017 = vmatprep.subr.mxu0 0.0
      %1018 = vmatpush1.msra.mxu0 0.0
      %1019 = vmatprep.subr.mxu0 0.0
      %1020 = vmatpush1.msra.mxu0 0.0
      %1021 = vmatprep.subr.mxu0 0.0
      %1022 = vmatpush1.msra.mxu0 0.0
      %1023 = vmatprep.subr.mxu0 0.0
      %1024 = vmatpush1.msra.mxu0 0.0
      %1025 = vmatprep.subr.mxu0 0.0
      %1026 = vmatpush1.msra.mxu0 0.0
      %1027 = vmatprep.subr.mxu0 0.0
      %1028 = vmatpush1.msra.mxu0 0.0
      %1029 = vmatprep.subr.mxu0 0.0
      %1030 = vmatpush1.msra.mxu0 0.0
      %1031 = vmatprep.subr.mxu0 0.0
      %1032 = vmatpush1.msra.mxu0 0.0
      %1033 = vmatprep.subr.mxu0 0.0
      %1034 = vmatpush1.msra.mxu0 0.0
      %1035 = vmatprep.subr.mxu0 0.0
      %1036 = vmatpush1.msra.mxu0 0.0
      %1037 = vmatprep.subr.mxu0 0.0
      %1038 = vmatpush1.msra.mxu0 0.0
      %1039 = vmatprep.subr.mxu0 0.0
      %1040 = vmatpush1.msra.mxu0 %v648
      %1041 = vmatprep.subr.mxu0 0.0
      %1042 = vmatpush2.msra.mxu0 0.0
      %1043 = vmatprep.subr.mxu0 0.0
      %1044 = vmatpush2.msra.mxu0 0.0
      %1045 = vmatprep.subr.mxu0 0.0
      %1046 = vmatpush2.msra.mxu0 0.0
      %1047 = vmatprep.subr.mxu0 0.0
      %1048 = vmatpush2.msra.mxu0 0.0
      %1049 = vmatprep.subr.mxu0 0.0
      %1050 = vmatpush2.msra.mxu0 0.0
      %1051 = vmatprep.subr.mxu0 0.0
      %1052 = vmatpush2.msra.mxu0 0.0
      %1053 = vmatprep.subr.mxu0 0.0
      %1054 = vmatpush2.msra.mxu0 0.0
      %1055 = vmatprep.subr.mxu0 0.0
      %1056 = vmatpush2.msra.mxu0 0.0
      %1057 = vmatprep.subr.mxu0 0.0
      %1058 = vmatpush2.msra.mxu0 0.0
      %1059 = vmatprep.subr.mxu0 0.0
      %1060 = vmatpush2.msra.mxu0 0.0
      %1061 = vmatprep.subr.mxu0 0.0
      %1062 = vmatpush2.msra.mxu0 0.0
      %1063 = vmatprep.subr.mxu0 0.0
      %1064 = vmatpush2.msra.mxu0 0.0
      %1065 = vmatprep.subr.mxu0 0.0
      %1066 = vmatpush2.msra.mxu0 0.0
      %1067 = vmatprep.subr.mxu0 0.0
      %1068 = vmatpush2.msra.mxu0 0.0
      %1069 = vmatprep.subr.mxu0 0.0
      %1070 = vmatpush2.msra.mxu0 0.0
      %1071 = vmatprep.subr.mxu0 0.0
      %1072 = vmatpush2.msra.mxu0 0.0
      %1073 = vmatprep.mubr.f32.mxu0 0.0
      %1074 = vmatmul.mubr.f32.gmra.mxu0 %v1007
      %v1075 = vpop.f32.mrf.mxu0
      %v1076 = vadd.f32 0.0, %v1075
      %v1077 = vpop.f32.mrf.mxu0
      %1078 = vdwg.mxu0
      %v1080 = vsel %vm961, %v1003, 0
      %1082 = vmatprep.subr.mxu0 0.0
      %1083 = vmatpush1.msra.mxu0 0.0
      %1084 = vmatprep.subr.mxu0 0.0
      %1085 = vmatpush1.msra.mxu0 0.0
      %1086 = vmatprep.subr.mxu0 0.0
      %1087 = vmatpush1.msra.mxu0 0.0
      %1088 = vmatprep.subr.mxu0 0.0
      %1089 = vmatpush1.msra.mxu0 0.0
      %1090 = vmatprep.subr.mxu0 0.0
      %1091 = vmatpush1.msra.mxu0 0.0
      %1092 = vmatprep.subr.mxu0 0.0
      %1093 = vmatpush1.msra.mxu0 0.0
      %1094 = vmatprep.subr.mxu0 0.0
      %1095 = vmatpush1.msra.mxu0 0.0
      %1096 = vmatprep.subr.mxu0 0.0
      %1097 = vmatpush1.msra.mxu0 0.0
      %1098 = vmatprep.subr.mxu0 0.0
      %1099 = vmatpush1.msra.mxu0 0.0
      %1100 = vmatprep.subr.mxu0 0.0
      %1101 = vmatpush1.msra.mxu0 0.0
      %1102 = vmatprep.subr.mxu0 0.0
      %1103 = vmatpush1.msra.mxu0 0.0
      %1104 = vmatprep.subr.mxu0 0.0
      %1105 = vmatpush1.msra.mxu0 0.0
      %1106 = vmatprep.subr.mxu0 0.0
      %1107 = vmatpush1.msra.mxu0 0.0
      %1108 = vmatprep.subr.mxu0 0.0
      %1109 = vmatpush1.msra.mxu0 0.0
      %1110 = vmatprep.subr.mxu0 0.0
      %1111 = vmatpush1.msra.mxu0 0.0
      %1112 = vmatprep.subr.mxu0 0.0
      %1113 = vmatpush1.msra.mxu0 %v649
      %1114 = vmatprep.subr.mxu0 0.0
      %1115 = vmatpush2.msra.mxu0 0.0
      %1116 = vmatprep.subr.mxu0 0.0
      %1117 = vmatpush2.msra.mxu0 0.0
      %1118 = vmatprep.subr.mxu0 0.0
      %1119 = vmatpush2.msra.mxu0 0.0
      %1120 = vmatprep.subr.mxu0 0.0
      %1121 = vmatpush2.msra.mxu0 0.0
      %1122 = vmatprep.subr.mxu0 0.0
      %1123 = vmatpush2.msra.mxu0 0.0
      %1124 = vmatprep.subr.mxu0 0.0
      %1125 = vmatpush2.msra.mxu0 0.0
      %1126 = vmatprep.subr.mxu0 0.0
      %1127 = vmatpush2.msra.mxu0 0.0
      %1128 = vmatprep.subr.mxu0 0.0
      %1129 = vmatpush2.msra.mxu0 0.0
      %1130 = vmatprep.subr.mxu0 0.0
      %1131 = vmatpush2.msra.mxu0 0.0
      %1132 = vmatprep.subr.mxu0 0.0
      %1133 = vmatpush2.msra.mxu0 0.0
      %1134 = vmatprep.subr.mxu0 0.0
      %1135 = vmatpush2.msra.mxu0 0.0
      %1136 = vmatprep.subr.mxu0 0.0
      %1137 = vmatpush2.msra.mxu0 0.0
      %1138 = vmatprep.subr.mxu0 0.0
      %1139 = vmatpush2.msra.mxu0 0.0
      %1140 = vmatprep.subr.mxu0 0.0
      %1141 = vmatpush2.msra.mxu0 0.0
      %1142 = vmatprep.subr.mxu0 0.0
      %1143 = vmatpush2.msra.mxu0 0.0
      %1144 = vmatprep.subr.mxu0 0.0
      %1145 = vmatpush2.msra.mxu0 0.0
      %1146 = vmatprep.mubr.f32.mxu0 0.0
      %1147 = vmatmul.mubr.f32.gmra.mxu0 %v1080
      %v1148 = vpop.f32.mrf.mxu0
      %v1149 = vadd.f32 0.0, %v1148
      %v1150 = vpop.f32.mrf.mxu0
      %1151 = vdwg.mxu0
      %v1153 = vsel %vm961, %v1004, 0
      %1155 = vmatprep.subr.mxu0 0.0
      %1156 = vmatpush1.msra.mxu0 0.0
      %1157 = vmatprep.subr.mxu0 0.0
      %1158 = vmatpush1.msra.mxu0 0.0
      %1159 = vmatprep.subr.mxu0 0.0
      %1160 = vmatpush1.msra.mxu0 0.0
      %1161 = vmatprep.subr.mxu0 0.0
      %1162 = vmatpush1.msra.mxu0 0.0
      %1163 = vmatprep.subr.mxu0 0.0
      %1164 = vmatpush1.msra.mxu0 0.0
      %1165 = vmatprep.subr.mxu0 0.0
      %1166 = vmatpush1.msra.mxu0 0.0
      %1167 = vmatprep.subr.mxu0 0.0
      %1168 = vmatpush1.msra.mxu0 0.0
      %1169 = vmatprep.subr.mxu0 0.0
      %1170 = vmatpush1.msra.mxu0 0.0
      %1171 = vmatprep.subr.mxu0 0.0
      %1172 = vmatpush1.msra.mxu0 0.0
      %1173 = vmatprep.subr.mxu0 0.0
      %1174 = vmatpush1.msra.mxu0 0.0
      %1175 = vmatprep.subr.mxu0 0.0
      %1176 = vmatpush1.msra.mxu0 0.0
      %1177 = vmatprep.subr.mxu0 0.0
      %1178 = vmatpush1.msra.mxu0 0.0
      %1179 = vmatprep.subr.mxu0 0.0
      %1180 = vmatpush1.msra.mxu0 0.0
      %1181 = vmatprep.subr.mxu0 0.0
      %1182 = vmatpush1.msra.mxu0 0.0
      %1183 = vmatprep.subr.mxu0 0.0
      %1184 = vmatpush1.msra.mxu0 0.0
      %1185 = vmatprep.subr.mxu0 0.0
      %1186 = vmatpush1.msra.mxu0 %v650
      %1187 = vmatprep.subr.mxu0 0.0
      %1188 = vmatpush2.msra.mxu0 0.0
      %1189 = vmatprep.subr.mxu0 0.0
      %1190 = vmatpush2.msra.mxu0 0.0
      %1191 = vmatprep.subr.mxu0 0.0
      %1192 = vmatpush2.msra.mxu0 0.0
      %1193 = vmatprep.subr.mxu0 0.0
      %1194 = vmatpush2.msra.mxu0 0.0
      %1195 = vmatprep.subr.mxu0 0.0
      %1196 = vmatpush2.msra.mxu0 0.0
      %1197 = vmatprep.subr.mxu0 0.0
      %1198 = vmatpush2.msra.mxu0 0.0
      %1199 = vmatprep.subr.mxu0 0.0
      %1200 = vmatpush2.msra.mxu0 0.0
      %1201 = vmatprep.subr.mxu0 0.0
      %1202 = vmatpush2.msra.mxu0 0.0
      %1203 = vmatprep.subr.mxu0 0.0
      %1204 = vmatpush2.msra.mxu0 0.0
      %1205 = vmatprep.subr.mxu0 0.0
      %1206 = vmatpush2.msra.mxu0 0.0
      %1207 = vmatprep.subr.mxu0 0.0
      %1208 = vmatpush2.msra.mxu0 0.0
      %1209 = vmatprep.subr.mxu0 0.0
      %1210 = vmatpush2.msra.mxu0 0.0
      %1211 = vmatprep.subr.mxu0 0.0
      %1212 = vmatpush2.msra.mxu0 0.0
      %1213 = vmatprep.subr.mxu0 0.0
      %1214 = vmatpush2.msra.mxu0 0.0
      %1215 = vmatprep.subr.mxu0 0.0
      %1216 = vmatpush2.msra.mxu0 0.0
      %1217 = vmatprep.subr.mxu0 0.0
      %1218 = vmatpush2.msra.mxu0 0.0
      %1219 = vmatprep.mubr.f32.mxu0 0.0
      %1220 = vmatmul.mubr.f32.gmra.mxu0 %v1153
      %v1221 = vpop.f32.mrf.mxu0
      %v1222 = vadd.f32 0.0, %v1221
      %v1223 = vpop.f32.mrf.mxu0
      %1224 = vdwg.mxu0
      %v1226 = vsel %vm961, %v1005, 0
      %1228 = vmatprep.subr.mxu0 0.0
      %1229 = vmatpush1.msra.mxu0 0.0
      %1230 = vmatprep.subr.mxu0 0.0
      %1231 = vmatpush1.msra.mxu0 0.0
      %1232 = vmatprep.subr.mxu0 0.0
      %1233 = vmatpush1.msra.mxu0 0.0
      %1234 = vmatprep.subr.mxu0 0.0
      %1235 = vmatpush1.msra.mxu0 0.0
      %1236 = vmatprep.subr.mxu0 0.0
      %1237 = vmatpush1.msra.mxu0 0.0
      %1238 = vmatprep.subr.mxu0 0.0
      %1239 = vmatpush1.msra.mxu0 0.0
      %1240 = vmatprep.subr.mxu0 0.0
      %1241 = vmatpush1.msra.mxu0 0.0
      %1242 = vmatprep.subr.mxu0 0.0
      %1243 = vmatpush1.msra.mxu0 0.0
      %1244 = vmatprep.subr.mxu0 0.0
      %1245 = vmatpush1.msra.mxu0 0.0
      %1246 = vmatprep.subr.mxu0 0.0
      %1247 = vmatpush1.msra.mxu0 0.0
      %1248 = vmatprep.subr.mxu0 0.0
      %1249 = vmatpush1.msra.mxu0 0.0
      %1250 = vmatprep.subr.mxu0 0.0
      %1251 = vmatpush1.msra.mxu0 0.0
      %1252 = vmatprep.subr.mxu0 0.0
      %1253 = vmatpush1.msra.mxu0 0.0
      %1254 = vmatprep.subr.mxu0 0.0
      %1255 = vmatpush1.msra.mxu0 0.0
      %1256 = vmatprep.subr.mxu0 0.0
      %1257 = vmatpush1.msra.mxu0 0.0
      %1258 = vmatprep.subr.mxu0 0.0
      %1259 = vmatpush1.msra.mxu0 %v651
      %1260 = vmatprep.subr.mxu0 0.0
      %1261 = vmatpush2.msra.mxu0 0.0
      %1262 = vmatprep.subr.mxu0 0.0
      %1263 = vmatpush2.msra.mxu0 0.0
      %1264 = vmatprep.subr.mxu0 0.0
      %1265 = vmatpush2.msra.mxu0 0.0
      %1266 = vmatprep.subr.mxu0 0.0
      %1267 = vmatpush2.msra.mxu0 0.0
      %1268 = vmatprep.subr.mxu0 0.0
      %1269 = vmatpush2.msra.mxu0 0.0
      %1270 = vmatprep.subr.mxu0 0.0
      %1271 = vmatpush2.msra.mxu0 0.0
      %1272 = vmatprep.subr.mxu0 0.0
      %1273 = vmatpush2.msra.mxu0 0.0
      %1274 = vmatprep.subr.mxu0 0.0
      %1275 = vmatpush2.msra.mxu0 0.0
      %1276 = vmatprep.subr.mxu0 0.0
      %1277 = vmatpush2.msra.mxu0 0.0
      %1278 = vmatprep.subr.mxu0 0.0
      %1279 = vmatpush2.msra.mxu0 0.0
      %1280 = vmatprep.subr.mxu0 0.0
      %1281 = vmatpush2.msra.mxu0 0.0
      %1282 = vmatprep.subr.mxu0 0.0
      %1283 = vmatpush2.msra.mxu0 0.0
      %1284 = vmatprep.subr.mxu0 0.0
      %1285 = vmatpush2.msra.mxu0 0.0
      %1286 = vmatprep.subr.mxu0 0.0
      %1287 = vmatpush2.msra.mxu0 0.0
      %1288 = vmatprep.subr.mxu0 0.0
      %1289 = vmatpush2.msra.mxu0 0.0
      %1290 = vmatprep.subr.mxu0 0.0
      %1291 = vmatpush2.msra.mxu0 0.0
      %1292 = vmatprep.mubr.f32.mxu0 0.0
      %1293 = vmatmul.mubr.f32.gmra.mxu0 %v1226
      %v1294 = vpop.f32.mrf.mxu0
      %v1295 = vadd.f32 0.0, %v1294
      %v1296 = vpop.f32.mrf.mxu0
      %1297 = vdwg.mxu0
      %v1298 = vld [vmem:[%s6] sm:$0xff]
      %v1299 = vld [vmem:[%s6 + $0x8] sm:$0xff]
      %v1300 = vld [vmem:[%s6 + $0x10] sm:$0xff]
      %v1301 = vld [vmem:[%s6 + $0x18] sm:$0xff]
      %v1302 = vld [vmem:[%s6 + $0x20] sm:$0xff]
      %v1303 = vld [vmem:[%s6 + $0x28] sm:$0xff]
      %v1304 = vld [vmem:[%s6 + $0x30] sm:$0xff]
      %v1305 = vld [vmem:[%s6 + $0x38] sm:$0xff]
      %v1306 = vld [vmem:[%s6 + $0x40] sm:$0xff]
      %v1307 = vld [vmem:[%s6 + $0x48] sm:$0xff]
      %v1308 = vld [vmem:[%s6 + $0x50] sm:$0xff]
      %v1309 = vld [vmem:[%s6 + $0x58] sm:$0xff]
      %v1310 = vld [vmem:[%s6 + $0x60] sm:$0xff]
      %v1311 = vld [vmem:[%s6 + $0x68] sm:$0xff]
      %v1312 = vld [vmem:[%s6 + $0x70] sm:$0xff]
      %v1313 = vld [vmem:[%s6 + $0x78] sm:$0xff]
      %v1315 = vsel %vm652, %v1076, 0
      %1317 = vmatprep.subr.mxu0 0.0
      %1318 = vmatpush1.msra.mxu0 0.0
      %1319 = vmatprep.subr.mxu0 0.0
      %1320 = vmatpush1.msra.mxu0 0.0
      %1321 = vmatprep.subr.mxu0 0.0
      %1322 = vmatpush1.msra.mxu0 0.0
      %1323 = vmatprep.subr.mxu0 0.0
      %1324 = vmatpush1.msra.mxu0 0.0
      %1325 = vmatprep.subr.mxu0 0.0
      %1326 = vmatpush1.msra.mxu0 0.0
      %1327 = vmatprep.subr.mxu0 0.0
      %1328 = vmatpush1.msra.mxu0 0.0
      %1329 = vmatprep.subr.mxu0 0.0
      %1330 = vmatpush1.msra.mxu0 0.0
      %1331 = vmatprep.subr.mxu0 0.0
      %1332 = vmatpush1.msra.mxu0 0.0
      %1333 = vmatprep.subr.mxu0 0.0
      %1334 = vmatpush1.msra.mxu0 0.0
      %1335 = vmatprep.subr.mxu0 0.0
      %1336 = vmatpush1.msra.mxu0 0.0
      %1337 = vmatprep.subr.mxu0 0.0
      %1338 = vmatpush1.msra.mxu0 0.0
      %1339 = vmatprep.subr.mxu0 0.0
      %1340 = vmatpush1.msra.mxu0 0.0
      %1341 = vmatprep.subr.mxu0 0.0
      %1342 = vmatpush1.msra.mxu0 %v1301
      %1343 = vmatprep.subr.mxu0 0.0
      %1344 = vmatpush1.msra.mxu0 %v1300
      %1345 = vmatprep.subr.mxu0 0.0
      %1346 = vmatpush1.msra.mxu0 %v1299
      %1347 = vmatprep.subr.mxu0 0.0
      %1348 = vmatpush1.msra.mxu0 %v1298
      %1349 = vmatprep.subr.mxu0 0.0
      %1350 = vmatpush2.msra.mxu0 0.0
      %1351 = vmatprep.subr.mxu0 0.0
      %1352 = vmatpush2.msra.mxu0 0.0
      %1353 = vmatprep.subr.mxu0 0.0
      %1354 = vmatpush2.msra.mxu0 0.0
      %1355 = vmatprep.subr.mxu0 0.0
      %1356 = vmatpush2.msra.mxu0 0.0
      %1357 = vmatprep.subr.mxu0 0.0
      %1358 = vmatpush2.msra.mxu0 0.0
      %1359 = vmatprep.subr.mxu0 0.0
      %1360 = vmatpush2.msra.mxu0 0.0
      %1361 = vmatprep.subr.mxu0 0.0
      %1362 = vmatpush2.msra.mxu0 0.0
      %1363 = vmatprep.subr.mxu0 0.0
      %1364 = vmatpush2.msra.mxu0 0.0
      %1365 = vmatprep.subr.mxu0 0.0
      %1366 = vmatpush2.msra.mxu0 0.0
      %1367 = vmatprep.subr.mxu0 0.0
      %1368 = vmatpush2.msra.mxu0 0.0
      %1369 = vmatprep.subr.mxu0 0.0
      %1370 = vmatpush2.msra.mxu0 0.0
      %1371 = vmatprep.subr.mxu0 0.0
      %1372 = vmatpush2.msra.mxu0 0.0
      %1373 = vmatprep.subr.mxu0 0.0
      %1374 = vmatpush2.msra.mxu0 0.0
      %1375 = vmatprep.subr.mxu0 0.0
      %1376 = vmatpush2.msra.mxu0 0.0
      %1377 = vmatprep.subr.mxu0 0.0
      %1378 = vmatpush2.msra.mxu0 0.0
      %1379 = vmatprep.subr.mxu0 0.0
      %1380 = vmatpush2.msra.mxu0 0.0
      %1381 = vmatprep.mubr.f32.mxu0 0.0
      %1382 = vmatmul.mubr.f32.gmra.mxu0 %v1315
      %v1383 = vpop.f32.mrf.mxu0
      %v1384 = vadd.f32 0.0, %v1383
      %v1385 = vpop.f32.mrf.mxu0
      %1386 = vdwg.mxu0
      %v1388 = vsel %vm652, %v1149, 0
      %1390 = vmatprep.subr.mxu0 0.0
      %1391 = vmatpush1.msra.mxu0 0.0
      %1392 = vmatprep.subr.mxu0 0.0
      %1393 = vmatpush1.msra.mxu0 0.0
      %1394 = vmatprep.subr.mxu0 0.0
      %1395 = vmatpush1.msra.mxu0 0.0
      %1396 = vmatprep.subr.mxu0 0.0
      %1397 = vmatpush1.msra.mxu0 0.0
      %1398 = vmatprep.subr.mxu0 0.0
      %1399 = vmatpush1.msra.mxu0 0.0
      %1400 = vmatprep.subr.mxu0 0.0
      %1401 = vmatpush1.msra.mxu0 0.0
      %1402 = vmatprep.subr.mxu0 0.0
      %1403 = vmatpush1.msra.mxu0 0.0
      %1404 = vmatprep.subr.mxu0 0.0
      %1405 = vmatpush1.msra.mxu0 0.0
      %1406 = vmatprep.subr.mxu0 0.0
      %1407 = vmatpush1.msra.mxu0 0.0
      %1408 = vmatprep.subr.mxu0 0.0
      %1409 = vmatpush1.msra.mxu0 0.0
      %1410 = vmatprep.subr.mxu0 0.0
      %1411 = vmatpush1.msra.mxu0 0.0
      %1412 = vmatprep.subr.mxu0 0.0
      %1413 = vmatpush1.msra.mxu0 0.0
      %1414 = vmatprep.subr.mxu0 0.0
      %1415 = vmatpush1.msra.mxu0 %v1305
      %1416 = vmatprep.subr.mxu0 0.0
      %1417 = vmatpush1.msra.mxu0 %v1304
      %1418 = vmatprep.subr.mxu0 0.0
      %1419 = vmatpush1.msra.mxu0 %v1303
      %1420 = vmatprep.subr.mxu0 0.0
      %1421 = vmatpush1.msra.mxu0 %v1302
      %1422 = vmatprep.subr.mxu0 0.0
      %1423 = vmatpush2.msra.mxu0 0.0
      %1424 = vmatprep.subr.mxu0 0.0
      %1425 = vmatpush2.msra.mxu0 0.0
      %1426 = vmatprep.subr.mxu0 0.0
      %1427 = vmatpush2.msra.mxu0 0.0
      %1428 = vmatprep.subr.mxu0 0.0
      %1429 = vmatpush2.msra.mxu0 0.0
      %1430 = vmatprep.subr.mxu0 0.0
      %1431 = vmatpush2.msra.mxu0 0.0
      %1432 = vmatprep.subr.mxu0 0.0
      %1433 = vmatpush2.msra.mxu0 0.0
      %1434 = vmatprep.subr.mxu0 0.0
      %1435 = vmatpush2.msra.mxu0 0.0
      %1436 = vmatprep.subr.mxu0 0.0
      %1437 = vmatpush2.msra.mxu0 0.0
      %1438 = vmatprep.subr.mxu0 0.0
      %1439 = vmatpush2.msra.mxu0 0.0
      %1440 = vmatprep.subr.mxu0 0.0
      %1441 = vmatpush2.msra.mxu0 0.0
      %1442 = vmatprep.subr.mxu0 0.0
      %1443 = vmatpush2.msra.mxu0 0.0
      %1444 = vmatprep.subr.mxu0 0.0
      %1445 = vmatpush2.msra.mxu0 0.0
      %1446 = vmatprep.subr.mxu0 0.0
      %1447 = vmatpush2.msra.mxu0 0.0
      %1448 = vmatprep.subr.mxu0 0.0
      %1449 = vmatpush2.msra.mxu0 0.0
      %1450 = vmatprep.subr.mxu0 0.0
      %1451 = vmatpush2.msra.mxu0 0.0
      %1452 = vmatprep.subr.mxu0 0.0
      %1453 = vmatpush2.msra.mxu0 0.0
      %1454 = vmatprep.mubr.f32.mxu0 0.0
      %1455 = vmatmul.mubr.f32.gmra.mxu0 %v1388
      %v1456 = vpop.f32.mrf.mxu0
      %v1457 = vadd.f32 0.0, %v1456
      %v1458 = vpop.f32.mrf.mxu0
      %1459 = vdwg.mxu0
      %v1461 = vsel %vm652, %v1222, 0
      %1463 = vmatprep.subr.mxu0 0.0
      %1464 = vmatpush1.msra.mxu0 0.0
      %1465 = vmatprep.subr.mxu0 0.0
      %1466 = vmatpush1.msra.mxu0 0.0
      %1467 = vmatprep.subr.mxu0 0.0
      %1468 = vmatpush1.msra.mxu0 0.0
      %1469 = vmatprep.subr.mxu0 0.0
      %1470 = vmatpush1.msra.mxu0 0.0
      %1471 = vmatprep.subr.mxu0 0.0
      %1472 = vmatpush1.msra.mxu0 0.0
      %1473 = vmatprep.subr.mxu0 0.0
      %1474 = vmatpush1.msra.mxu0 0.0
      %1475 = vmatprep.subr.mxu0 0.0
      %1476 = vmatpush1.msra.mxu0 0.0
      %1477 = vmatprep.subr.mxu0 0.0
      %1478 = vmatpush1.msra.mxu0 0.0
      %1479 = vmatprep.subr.mxu0 0.0
      %1480 = vmatpush1.msra.mxu0 0.0
      %1481 = vmatprep.subr.mxu0 0.0
      %1482 = vmatpush1.msra.mxu0 0.0
      %1483 = vmatprep.subr.mxu0 0.0
      %1484 = vmatpush1.msra.mxu0 0.0
      %1485 = vmatprep.subr.mxu0 0.0
      %1486 = vmatpush1.msra.mxu0 0.0
      %1487 = vmatprep.subr.mxu0 0.0
      %1488 = vmatpush1.msra.mxu0 %v1309
      %1489 = vmatprep.subr.mxu0 0.0
      %1490 = vmatpush1.msra.mxu0 %v1308
      %1491 = vmatprep.subr.mxu0 0.0
      %1492 = vmatpush1.msra.mxu0 %v1307
      %1493 = vmatprep.subr.mxu0 0.0
      %1494 = vmatpush1.msra.mxu0 %v1306
      %1495 = vmatprep.subr.mxu0 0.0
      %1496 = vmatpush2.msra.mxu0 0.0
      %1497 = vmatprep.subr.mxu0 0.0
      %1498 = vmatpush2.msra.mxu0 0.0
      %1499 = vmatprep.subr.mxu0 0.0
      %1500 = vmatpush2.msra.mxu0 0.0
      %1501 = vmatprep.subr.mxu0 0.0
      %1502 = vmatpush2.msra.mxu0 0.0
      %1503 = vmatprep.subr.mxu0 0.0
      %1504 = vmatpush2.msra.mxu0 0.0
      %1505 = vmatprep.subr.mxu0 0.0
      %1506 = vmatpush2.msra.mxu0 0.0
      %1507 = vmatprep.subr.mxu0 0.0
      %1508 = vmatpush2.msra.mxu0 0.0
      %1509 = vmatprep.subr.mxu0 0.0
      %1510 = vmatpush2.msra.mxu0 0.0
      %1511 = vmatprep.subr.mxu0 0.0
      %1512 = vmatpush2.msra.mxu0 0.0
      %1513 = vmatprep.subr.mxu0 0.0
      %1514 = vmatpush2.msra.mxu0 0.0
      %1515 = vmatprep.subr.mxu0 0.0
      %1516 = vmatpush2.msra.mxu0 0.0
      %1517 = vmatprep.subr.mxu0 0.0
      %1518 = vmatpush2.msra.mxu0 0.0
      %1519 = vmatprep.subr.mxu0 0.0
      %1520 = vmatpush2.msra.mxu0 0.0
      %1521 = vmatprep.subr.mxu0 0.0
      %1522 = vmatpush2.msra.mxu0 0.0
      %1523 = vmatprep.subr.mxu0 0.0
      %1524 = vmatpush2.msra.mxu0 0.0
      %1525 = vmatprep.subr.mxu0 0.0
      %1526 = vmatpush2.msra.mxu0 0.0
      %1527 = vmatprep.mubr.f32.mxu0 0.0
      %1528 = vmatmul.mubr.f32.gmra.mxu0 %v1461
      %v1529 = vpop.f32.mrf.mxu0
      %v1530 = vadd.f32 0.0, %v1529
      %v1531 = vpop.f32.mrf.mxu0
      %1532 = vdwg.mxu0
      %v1534 = vsel %vm652, %v1295, 0
      %1536 = vmatprep.subr.mxu0 0.0
      %1537 = vmatpush1.msra.mxu0 0.0
      %1538 = vmatprep.subr.mxu0 0.0
      %1539 = vmatpush1.msra.mxu0 0.0
      %1540 = vmatprep.subr.mxu0 0.0
      %1541 = vmatpush1.msra.mxu0 0.0
      %1542 = vmatprep.subr.mxu0 0.0
      %1543 = vmatpush1.msra.mxu0 0.0
      %1544 = vmatprep.subr.mxu0 0.0
      %1545 = vmatpush1.msra.mxu0 0.0
      %1546 = vmatprep.subr.mxu0 0.0
      %1547 = vmatpush1.msra.mxu0 0.0
      %1548 = vmatprep.subr.mxu0 0.0
      %1549 = vmatpush1.msra.mxu0 0.0
      %1550 = vmatprep.subr.mxu0 0.0
      %1551 = vmatpush1.msra.mxu0 0.0
      %1552 = vmatprep.subr.mxu0 0.0
      %1553 = vmatpush1.msra.mxu0 0.0
      %1554 = vmatprep.subr.mxu0 0.0
      %1555 = vmatpush1.msra.mxu0 0.0
      %1556 = vmatprep.subr.mxu0 0.0
      %1557 = vmatpush1.msra.mxu0 0.0
      %1558 = vmatprep.subr.mxu0 0.0
      %1559 = vmatpush1.msra.mxu0 0.0
      %1560 = vmatprep.subr.mxu0 0.0
      %1561 = vmatpush1.msra.mxu0 %v1313
      %1562 = vmatprep.subr.mxu0 0.0
      %1563 = vmatpush1.msra.mxu0 %v1312
      %1564 = vmatprep.subr.mxu0 0.0
      %1565 = vmatpush1.msra.mxu0 %v1311
      %1566 = vmatprep.subr.mxu0 0.0
      %1567 = vmatpush1.msra.mxu0 %v1310
      %1568 = vmatprep.subr.mxu0 0.0
      %1569 = vmatpush2.msra.mxu0 0.0
      %1570 = vmatprep.subr.mxu0 0.0
      %1571 = vmatpush2.msra.mxu0 0.0
      %1572 = vmatprep.subr.mxu0 0.0
      %1573 = vmatpush2.msra.mxu0 0.0
      %1574 = vmatprep.subr.mxu0 0.0
      %1575 = vmatpush2.msra.mxu0 0.0
      %1576 = vmatprep.subr.mxu0 0.0
      %1577 = vmatpush2.msra.mxu0 0.0
      %1578 = vmatprep.subr.mxu0 0.0
      %1579 = vmatpush2.msra.mxu0 0.0
      %1580 = vmatprep.subr.mxu0 0.0
      %1581 = vmatpush2.msra.mxu0 0.0
      %1582 = vmatprep.subr.mxu0 0.0
      %1583 = vmatpush2.msra.mxu0 0.0
      %1584 = vmatprep.subr.mxu0 0.0
      %1585 = vmatpush2.msra.mxu0 0.0
      %1586 = vmatprep.subr.mxu0 0.0
      %1587 = vmatpush2.msra.mxu0 0.0
      %1588 = vmatprep.subr.mxu0 0.0
      %1589 = vmatpush2.msra.mxu0 0.0
      %1590 = vmatprep.subr.mxu0 0.0
      %1591 = vmatpush2.msra.mxu0 0.0
      %1592 = vmatprep.subr.mxu0 0.0
      %1593 = vmatpush2.msra.mxu0 0.0
      %1594 = vmatprep.subr.mxu0 0.0
      %1595 = vmatpush2.msra.mxu0 0.0
      %1596 = vmatprep.subr.mxu0 0.0
      %1597 = vmatpush2.msra.mxu0 0.0
      %1598 = vmatprep.subr.mxu0 0.0
      %1599 = vmatpush2.msra.mxu0 0.0
      %1600 = vmatprep.mubr.f32.mxu0 0.0
      %1601 = vmatmul.mubr.f32.gmra.mxu0 %v1534
      %v1602 = vpop.f32.mrf.mxu0
      %v1603 = vadd.f32 0.0, %v1602
      %v1604 = vpop.f32.mrf.mxu0
      %1605 = vdwg.mxu0
      %v1606 = vadd.f32 %v1384, %v1457
      %v1607 = vadd.f32 %v1606, %v1530
      %v1608 = vadd.f32 %v1607, %v1603
      %v1609 = vld [vmem:[%s7] sm:$0x1]
      %v1611 = vlaneseq
      %v1612 = vshrl.u32 %v1611, 7
      %v1613 = vsub.s32 0, %v1612
      %v1614 = vrot.slane %v1609, %v1613
      %v1616 = vadd.f32 %v1608, %v1614
      %v1617 = vadd.f32 %v639, %v1616
      %v1618 = vld [vmem:[%s8] sm:$0x1]
      %v1619 = vld [vmem:[%s9] sm:$0x1]
      %1620 = vadd.xlane.f32.xlu0 %v1617
      %v1621 = vpop.xlane.xlu0 %1620
      %v1622 = vrcp.pop 128.0
      %v1623 = vmul.f32 %v1621, %v1622
      %v1624 = vsub.f32 %v1617, %v1623
      %v1625 = vmul.f32 %v1624, %v1624
      %1626 = vadd.xlane.f32.xlu0 %v1625
      %v1627 = vpop.xlane.xlu0 %1626
      %v1628 = vmul.f32 %v1627, %v1622
      %v1629 = vadd.f32 %v1628, 1e-05
      %v1630 = vrsqrt.pop %v1629
      %v1631 = vmul.f32 %v1624, %v1630
      %v1633 = vlaneseq
      %v1634 = vshrl.u32 %v1633, 7
      %v1635 = vsub.s32 0, %v1634
      %v1636 = vrot.slane %v1618, %v1635
      %v1638 = vmul.f32 %v1631, %v1636
      %v1640 = vlaneseq
      %v1641 = vshrl.u32 %v1640, 7
      %v1642 = vsub.s32 0, %v1641
      %v1643 = vrot.slane %v1619, %v1642
      %v1645 = vadd.f32 %v1638, %v1643
      %v1646 = vld [vmem:[%s10] sm:$0xff]
      %v1647 = vld [vmem:[%s10 + $0x8] sm:$0xff]
      %v1648 = vld [vmem:[%s10 + $0x10] sm:$0xff]
      %v1649 = vld [vmem:[%s10 + $0x18] sm:$0xff]
      %v1650 = vld [vmem:[%s10 + $0x20] sm:$0xff]
      %v1651 = vld [vmem:[%s10 + $0x28] sm:$0xff]
      %v1652 = vld [vmem:[%s10 + $0x30] sm:$0xff]
      %v1653 = vld [vmem:[%s10 + $0x38] sm:$0xff]
      %v1654 = vld [vmem:[%s10 + $0x40] sm:$0xff]
      %v1655 = vld [vmem:[%s10 + $0x48] sm:$0xff]
      %v1656 = vld [vmem:[%s10 + $0x50] sm:$0xff]
      %v1657 = vld [vmem:[%s10 + $0x58] sm:$0xff]
      %v1658 = vld [vmem:[%s10 + $0x60] sm:$0xff]
      %v1659 = vld [vmem:[%s10 + $0x68] sm:$0xff]
      %v1660 = vld [vmem:[%s10 + $0x70] sm:$0xff]
      %v1661 = vld [vmem:[%s10 + $0x78] sm:$0xff]
      %v1662 = vld [vmem:[%s10 + $0x80] sm:$0xff]
      %v1663 = vld [vmem:[%s10 + $0x88] sm:$0xff]
      %v1664 = vld [vmem:[%s10 + $0x90] sm:$0xff]
      %v1665 = vld [vmem:[%s10 + $0x98] sm:$0xff]
      %v1666 = vld [vmem:[%s10 + $0xa0] sm:$0xff]
      %v1667 = vld [vmem:[%s10 + $0xa8] sm:$0xff]
      %v1668 = vld [vmem:[%s10 + $0xb0] sm:$0xff]
      %v1669 = vld [vmem:[%s10 + $0xb8] sm:$0xff]
      %v1670 = vld [vmem:[%s10 + $0xc0] sm:$0xff]
      %v1671 = vld [vmem:[%s10 + $0xc8] sm:$0xff]
      %v1672 = vld [vmem:[%s10 + $0xd0] sm:$0xff]
      %v1673 = vld [vmem:[%s10 + $0xd8] sm:$0xff]
      %v1674 = vld [vmem:[%s10 + $0xe0] sm:$0xff]
      %v1675 = vld [vmem:[%s10 + $0xe8] sm:$0xff]
      %v1676 = vld [vmem:[%s10 + $0xf0] sm:$0xff]
      %v1677 = vld [vmem:[%s10 + $0xf8] sm:$0xff]
      %v1678 = vld [vmem:[%s10 + $0x100] sm:$0xff]
      %v1679 = vld [vmem:[%s10 + $0x108] sm:$0xff]
      %v1680 = vld [vmem:[%s10 + $0x110] sm:$0xff]
      %v1681 = vld [vmem:[%s10 + $0x118] sm:$0xff]
      %v1682 = vld [vmem:[%s10 + $0x120] sm:$0xff]
      %v1683 = vld [vmem:[%s10 + $0x128] sm:$0xff]
      %v1684 = vld [vmem:[%s10 + $0x130] sm:$0xff]
      %v1685 = vld [vmem:[%s10 + $0x138] sm:$0xff]
      %v1686 = vld [vmem:[%s10 + $0x140] sm:$0xff]
      %v1687 = vld [vmem:[%s10 + $0x148] sm:$0xff]
      %v1688 = vld [vmem:[%s10 + $0x150] sm:$0xff]
      %v1689 = vld [vmem:[%s10 + $0x158] sm:$0xff]
      %v1690 = vld [vmem:[%s10 + $0x160] sm:$0xff]
      %v1691 = vld [vmem:[%s10 + $0x168] sm:$0xff]
      %v1692 = vld [vmem:[%s10 + $0x170] sm:$0xff]
      %v1693 = vld [vmem:[%s10 + $0x178] sm:$0xff]
      %v1694 = vld [vmem:[%s10 + $0x180] sm:$0xff]
      %v1695 = vld [vmem:[%s10 + $0x188] sm:$0xff]
      %v1696 = vld [vmem:[%s10 + $0x190] sm:$0xff]
      %v1697 = vld [vmem:[%s10 + $0x198] sm:$0xff]
      %v1698 = vld [vmem:[%s10 + $0x1a0] sm:$0xff]
      %v1699 = vld [vmem:[%s10 + $0x1a8] sm:$0xff]
      %v1700 = vld [vmem:[%s10 + $0x1b0] sm:$0xff]
      %v1701 = vld [vmem:[%s10 + $0x1b8] sm:$0xff]
      %v1702 = vld [vmem:[%s10 + $0x1c0] sm:$0xff]
      %v1703 = vld [vmem:[%s10 + $0x1c8] sm:$0xff]
      %v1704 = vld [vmem:[%s10 + $0x1d0] sm:$0xff]
      %v1705 = vld [vmem:[%s10 + $0x1d8] sm:$0xff]
      %v1706 = vld [vmem:[%s10 + $0x1e0] sm:$0xff]
      %v1707 = vld [vmem:[%s10 + $0x1e8] sm:$0xff]
      %v1708 = vld [vmem:[%s10 + $0x1f0] sm:$0xff]
      %v1709 = vld [vmem:[%s10 + $0x1f8] sm:$0xff]
      %v1710 = vld [vmem:[%s11] sm:$0xf]
      %v1712 = vlaneseq
      %v1713 = vshrl.u32 %v1712, 7
      %v1714 = vsub.s32 0, %v1713
      %v1715 = vrot.slane %v1710, %v1714
      %v1716 = vlaneseq
      %v1717 = vshrl.u32 %v1716, 7
      %v1718 = vsub.s32 1, %v1717
      %v1719 = vrot.slane %v1710, %v1718
      %v1720 = vlaneseq
      %v1721 = vshrl.u32 %v1720, 7
      %v1722 = vsub.s32 2, %v1721
      %v1723 = vrot.slane %v1710, %v1722
      %v1724 = vlaneseq
      %v1725 = vshrl.u32 %v1724, 7
      %v1726 = vsub.s32 3, %v1725
      %v1727 = vrot.slane %v1710, %v1726
      %1732 = vmatprep.subr.mxu0 %v1707
      %1733 = vmatpush1.msra.mxu0 %v1706
      %1734 = vmatprep.subr.mxu0 %v1703
      %1735 = vmatpush1.msra.mxu0 %v1702
      %1736 = vmatprep.subr.mxu0 %v1699
      %1737 = vmatpush1.msra.mxu0 %v1698
      %1738 = vmatprep.subr.mxu0 %v1695
      %1739 = vmatpush1.msra.mxu0 %v1694
      %1740 = vmatprep.subr.mxu0 %v1691
      %1741 = vmatpush1.msra.mxu0 %v1690
      %1742 = vmatprep.subr.mxu0 %v1687
      %1743 = vmatpush1.msra.mxu0 %v1686
      %1744 = vmatprep.subr.mxu0 %v1683
      %1745 = vmatpush1.msra.mxu0 %v1682
      %1746 = vmatprep.subr.mxu0 %v1679
      %1747 = vmatpush1.msra.mxu0 %v1678
      %1748 = vmatprep.subr.mxu0 %v1675
      %1749 = vmatpush1.msra.mxu0 %v1674
      %1750 = vmatprep.subr.mxu0 %v1671
      %1751 = vmatpush1.msra.mxu0 %v1670
      %1752 = vmatprep.subr.mxu0 %v1667
      %1753 = vmatpush1.msra.mxu0 %v1666
      %1754 = vmatprep.subr.mxu0 %v1663
      %1755 = vmatpush1.msra.mxu0 %v1662
      %1756 = vmatprep.subr.mxu0 %v1659
      %1757 = vmatpush1.msra.mxu0 %v1658
      %1758 = vmatprep.subr.mxu0 %v1655
      %1759 = vmatpush1.msra.mxu0 %v1654
      %1760 = vmatprep.subr.mxu0 %v1651
      %1761 = vmatpush1.msra.mxu0 %v1650
      %1762 = vmatprep.subr.mxu0 %v1647
      %1763 = vmatpush1.msra.mxu0 %v1646
      %1764 = vmatprep.subr.mxu0 0.0
      %1765 = vmatpush2.msra.mxu0 0.0
      %1766 = vmatprep.subr.mxu0 0.0
      %1767 = vmatpush2.msra.mxu0 0.0
      %1768 = vmatprep.subr.mxu0 0.0
      %1769 = vmatpush2.msra.mxu0 0.0
      %1770 = vmatprep.subr.mxu0 0.0
      %1771 = vmatpush2.msra.mxu0 0.0
      %1772 = vmatprep.subr.mxu0 0.0
      %1773 = vmatpush2.msra.mxu0 0.0
      %1774 = vmatprep.subr.mxu0 0.0
      %1775 = vmatpush2.msra.mxu0 0.0
      %1776 = vmatprep.subr.mxu0 0.0
      %1777 = vmatpush2.msra.mxu0 0.0
      %1778 = vmatprep.subr.mxu0 0.0
      %1779 = vmatpush2.msra.mxu0 0.0
      %1780 = vmatprep.subr.mxu0 0.0
      %1781 = vmatpush2.msra.mxu0 0.0
      %1782 = vmatprep.subr.mxu0 0.0
      %1783 = vmatpush2.msra.mxu0 0.0
      %1784 = vmatprep.subr.mxu0 0.0
      %1785 = vmatpush2.msra.mxu0 0.0
      %1786 = vmatprep.subr.mxu0 0.0
      %1787 = vmatpush2.msra.mxu0 0.0
      %1788 = vmatprep.subr.mxu0 0.0
      %1789 = vmatpush2.msra.mxu0 0.0
      %1790 = vmatprep.subr.mxu0 0.0
      %1791 = vmatpush2.msra.mxu0 0.0
      %1792 = vmatprep.subr.mxu0 0.0
      %1793 = vmatpush2.msra.mxu0 0.0
      %1794 = vmatprep.subr.mxu0 0.0
      %1795 = vmatpush2.msra.mxu0 0.0
      %1796 = vmatprep.mubr.f32.mxu0 0.0
      %1797 = vmatmul.mubr.f32.gmra.mxu0 %v1645
      %v1798 = vpop.f32.mrf.mxu0
      %v1799 = vadd.f32 %v1715, %v1798
      %v1800 = vpop.f32.mrf.mxu0
      %v1801 = vadd.f32 %v1719, %v1800
      %1802 = vdwg.mxu0
      %1803 = vmatprep.subr.mxu0 %v1709
      %1804 = vmatpush1.msra.mxu0 %v1708
      %1805 = vmatprep.subr.mxu0 %v1705
      %1806 = vmatpush1.msra.mxu0 %v1704
      %1807 = vmatprep.subr.mxu0 %v1701
      %1808 = vmatpush1.msra.mxu0 %v1700
      %1809 = vmatprep.subr.mxu0 %v1697
      %1810 = vmatpush1.msra.mxu0 %v1696
      %1811 = vmatprep.subr.mxu0 %v1693
      %1812 = vmatpush1.msra.mxu0 %v1692
      %1813 = vmatprep.subr.mxu0 %v1689
      %1814 = vmatpush1.msra.mxu0 %v1688
      %1815 = vmatprep.subr.mxu0 %v1685
      %1816 = vmatpush1.msra.mxu0 %v1684
      %1817 = vmatprep.subr.mxu0 %v1681
      %1818 = vmatpush1.msra.mxu0 %v1680
      %1819 = vmatprep.subr.mxu0 %v1677
      %1820 = vmatpush1.msra.mxu0 %v1676
      %1821 = vmatprep.subr.mxu0 %v1673
      %1822 = vmatpush1.msra.mxu0 %v1672
      %1823 = vmatprep.subr.mxu0 %v1669
      %1824 = vmatpush1.msra.mxu0 %v1668
      %1825 = vmatprep.subr.mxu0 %v1665
      %1826 = vmatpush1.msra.mxu0 %v1664
      %1827 = vmatprep.subr.mxu0 %v1661
      %1828 = vmatpush1.msra.mxu0 %v1660
      %1829 = vmatprep.subr.mxu0 %v1657
      %1830 = vmatpush1.msra.mxu0 %v1656
      %1831 = vmatprep.subr.mxu0 %v1653
      %1832 = vmatpush1.msra.mxu0 %v1652
      %1833 = vmatprep.subr.mxu0 %v1649
      %1834 = vmatpush1.msra.mxu0 %v1648
      %1835 = vmatprep.subr.mxu0 0.0
      %1836 = vmatpush2.msra.mxu0 0.0
      %1837 = vmatprep.subr.mxu0 0.0
      %1838 = vmatpush2.msra.mxu0 0.0
      %1839 = vmatprep.subr.mxu0 0.0
      %1840 = vmatpush2.msra.mxu0 0.0
      %1841 = vmatprep.subr.mxu0 0.0
      %1842 = vmatpush2.msra.mxu0 0.0
      %1843 = vmatprep.subr.mxu0 0.0
      %1844 = vmatpush2.msra.mxu0 0.0
      %1845 = vmatprep.subr.mxu0 0.0
      %1846 = vmatpush2.msra.mxu0 0.0
      %1847 = vmatprep.subr.mxu0 0.0
      %1848 = vmatpush2.msra.mxu0 0.0
      %1849 = vmatprep.subr.mxu0 0.0
      %1850 = vmatpush2.msra.mxu0 0.0
      %1851 = vmatprep.subr.mxu0 0.0
      %1852 = vmatpush2.msra.mxu0 0.0
      %1853 = vmatprep.subr.mxu0 0.0
      %1854 = vmatpush2.msra.mxu0 0.0
      %1855 = vmatprep.subr.mxu0 0.0
      %1856 = vmatpush2.msra.mxu0 0.0
      %1857 = vmatprep.subr.mxu0 0.0
      %1858 = vmatpush2.msra.mxu0 0.0
      %1859 = vmatprep.subr.mxu0 0.0
      %1860 = vmatpush2.msra.mxu0 0.0
      %1861 = vmatprep.subr.mxu0 0.0
      %1862 = vmatpush2.msra.mxu0 0.0
      %1863 = vmatprep.subr.mxu0 0.0
      %1864 = vmatpush2.msra.mxu0 0.0
      %1865 = vmatprep.subr.mxu0 0.0
      %1866 = vmatpush2.msra.mxu0 0.0
      %1867 = vmatprep.mubr.f32.mxu0 0.0
      %1868 = vmatmul.mubr.f32.gmra.mxu0 %v1645
      %v1869 = vpop.f32.mrf.mxu0
      %v1870 = vadd.f32 %v1723, %v1869
      %v1871 = vpop.f32.mrf.mxu0
      %v1872 = vadd.f32 %v1727, %v1871
      %1873 = vdwg.mxu0
      %v1874 = vmax.f32 %v1799, 0.0
      %v1875 = vmax.f32 %v1801, 0.0
      %v1876 = vmax.f32 %v1870, 0.0
      %v1877 = vmax.f32 %v1872, 0.0
      %v1878 = vld [vmem:[%s12] sm:$0xff]
      %v1879 = vld [vmem:[%s12 + $0x8] sm:$0xff]
      %v1880 = vld [vmem:[%s12 + $0x10] sm:$0xff]
      %v1881 = vld [vmem:[%s12 + $0x18] sm:$0xff]
      %v1882 = vld [vmem:[%s12 + $0x20] sm:$0xff]
      %v1883 = vld [vmem:[%s12 + $0x28] sm:$0xff]
      %v1884 = vld [vmem:[%s12 + $0x30] sm:$0xff]
      %v1885 = vld [vmem:[%s12 + $0x38] sm:$0xff]
      %v1886 = vld [vmem:[%s12 + $0x40] sm:$0xff]
      %v1887 = vld [vmem:[%s12 + $0x48] sm:$0xff]
      %v1888 = vld [vmem:[%s12 + $0x50] sm:$0xff]
      %v1889 = vld [vmem:[%s12 + $0x58] sm:$0xff]
      %v1890 = vld [vmem:[%s12 + $0x60] sm:$0xff]
      %v1891 = vld [vmem:[%s12 + $0x68] sm:$0xff]
      %v1892 = vld [vmem:[%s12 + $0x70] sm:$0xff]
      %v1893 = vld [vmem:[%s12 + $0x78] sm:$0xff]
      %v1894 = vld [vmem:[%s12 + $0x80] sm:$0xff]
      %v1895 = vld [vmem:[%s12 + $0x88] sm:$0xff]
      %v1896 = vld [vmem:[%s12 + $0x90] sm:$0xff]
      %v1897 = vld [vmem:[%s12 + $0x98] sm:$0xff]
      %v1898 = vld [vmem:[%s12 + $0xa0] sm:$0xff]
      %v1899 = vld [vmem:[%s12 + $0xa8] sm:$0xff]
      %v1900 = vld [vmem:[%s12 + $0xb0] sm:$0xff]
      %v1901 = vld [vmem:[%s12 + $0xb8] sm:$0xff]
      %v1902 = vld [vmem:[%s12 + $0xc0] sm:$0xff]
      %v1903 = vld [vmem:[%s12 + $0xc8] sm:$0xff]
      %v1904 = vld [vmem:[%s12 + $0xd0] sm:$0xff]
      %v1905 = vld [vmem:[%s12 + $0xd8] sm:$0xff]
      %v1906 = vld [vmem:[%s12 + $0xe0] sm:$0xff]
      %v1907 = vld [vmem:[%s12 + $0xe8] sm:$0xff]
      %v1908 = vld [vmem:[%s12 + $0xf0] sm:$0xff]
      %v1909 = vld [vmem:[%s12 + $0xf8] sm:$0xff]
      %v1910 = vld [vmem:[%s12 + $0x100] sm:$0xff]
      %v1911 = vld [vmem:[%s12 + $0x108] sm:$0xff]
      %v1912 = vld [vmem:[%s12 + $0x110] sm:$0xff]
      %v1913 = vld [vmem:[%s12 + $0x118] sm:$0xff]
      %v1914 = vld [vmem:[%s12 + $0x120] sm:$0xff]
      %v1915 = vld [vmem:[%s12 + $0x128] sm:$0xff]
      %v1916 = vld [vmem:[%s12 + $0x130] sm:$0xff]
      %v1917 = vld [vmem:[%s12 + $0x138] sm:$0xff]
      %v1918 = vld [vmem:[%s12 + $0x140] sm:$0xff]
      %v1919 = vld [vmem:[%s12 + $0x148] sm:$0xff]
      %v1920 = vld [vmem:[%s12 + $0x150] sm:$0xff]
      %v1921 = vld [vmem:[%s12 + $0x158] sm:$0xff]
      %v1922 = vld [vmem:[%s12 + $0x160] sm:$0xff]
      %v1923 = vld [vmem:[%s12 + $0x168] sm:$0xff]
      %v1924 = vld [vmem:[%s12 + $0x170] sm:$0xff]
      %v1925 = vld [vmem:[%s12 + $0x178] sm:$0xff]
      %v1926 = vld [vmem:[%s12 + $0x180] sm:$0xff]
      %v1927 = vld [vmem:[%s12 + $0x188] sm:$0xff]
      %v1928 = vld [vmem:[%s12 + $0x190] sm:$0xff]
      %v1929 = vld [vmem:[%s12 + $0x198] sm:$0xff]
      %v1930 = vld [vmem:[%s12 + $0x1a0] sm:$0xff]
      %v1931 = vld [vmem:[%s12 + $0x1a8] sm:$0xff]
      %v1932 = vld [vmem:[%s12 + $0x1b0] sm:$0xff]
      %v1933 = vld [vmem:[%s12 + $0x1b8] sm:$0xff]
      %v1934 = vld [vmem:[%s12 + $0x1c0] sm:$0xff]
      %v1935 = vld [vmem:[%s12 + $0x1c8] sm:$0xff]
      %v1936 = vld [vmem:[%s12 + $0x1d0] sm:$0xff]
      %v1937 = vld [vmem:[%s12 + $0x1d8] sm:$0xff]
      %v1938 = vld [vmem:[%s12 + $0x1e0] sm:$0xff]
      %v1939 = vld [vmem:[%s12 + $0x1e8] sm:$0xff]
      %v1940 = vld [vmem:[%s12 + $0x1f0] sm:$0xff]
      %v1941 = vld [vmem:[%s12 + $0x1f8] sm:$0xff]
      %v1942 = vld [vmem:[%s13] sm:$0x1]
      %v1944 = vlaneseq
      %v1945 = vshrl.u32 %v1944, 7
      %v1946 = vsub.s32 0, %v1945
      %v1947 = vrot.slane %v1942, %v1946
      %1949 = vmatprep.subr.mxu0 0.0
      %1950 = vmatpush1.msra.mxu0 %v1893
      %1951 = vmatprep.subr.mxu0 0.0
      %1952 = vmatpush1.msra.mxu0 %v1892
      %1953 = vmatprep.subr.mxu0 0.0
      %1954 = vmatpush1.msra.mxu0 %v1891
      %1955 = vmatprep.subr.mxu0 0.0
      %1956 = vmatpush1.msra.mxu0 %v1890
      %1957 = vmatprep.subr.mxu0 0.0
      %1958 = vmatpush1.msra.mxu0 %v1889
      %1959 = vmatprep.subr.mxu0 0.0
      %1960 = vmatpush1.msra.mxu0 %v1888
      %1961 = vmatprep.subr.mxu0 0.0
      %1962 = vmatpush1.msra.mxu0 %v1887
      %1963 = vmatprep.subr.mxu0 0.0
      %1964 = vmatpush1.msra.mxu0 %v1886
      %1965 = vmatprep.subr.mxu0 0.0
      %1966 = vmatpush1.msra.mxu0 %v1885
      %1967 = vmatprep.subr.mxu0 0.0
      %1968 = vmatpush1.msra.mxu0 %v1884
      %1969 = vmatprep.subr.mxu0 0.0
      %1970 = vmatpush1.msra.mxu0 %v1883
      %1971 = vmatprep.subr.mxu0 0.0
      %1972 = vmatpush1.msra.mxu0 %v1882
      %1973 = vmatprep.subr.mxu0 0.0
      %1974 = vmatpush1.msra.mxu0 %v1881
      %1975 = vmatprep.subr.mxu0 0.0
      %1976 = vmatpush1.msra.mxu0 %v1880
      %1977 = vmatprep.subr.mxu0 0.0
      %1978 = vmatpush1.msra.mxu0 %v1879
      %1979 = vmatprep.subr.mxu0 0.0
      %1980 = vmatpush1.msra.mxu0 %v1878
      %1981 = vmatprep.subr.mxu0 0.0
      %1982 = vmatpush2.msra.mxu0 %v1909
      %1983 = vmatprep.subr.mxu0 0.0
      %1984 = vmatpush2.msra.mxu0 %v1908
      %1985 = vmatprep.subr.mxu0 0.0
      %1986 = vmatpush2.msra.mxu0 %v1907
      %1987 = vmatprep.subr.mxu0 0.0
      %1988 = vmatpush2.msra.mxu0 %v1906
      %1989 = vmatprep.subr.mxu0 0.0
      %1990 = vmatpush2.msra.mxu0 %v1905
      %1991 = vmatprep.subr.mxu0 0.0
      %1992 = vmatpush2.msra.mxu0 %v1904
      %1993 = vmatprep.subr.mxu0 0.0
      %1994 = vmatpush2.msra.mxu0 %v1903
      %1995 = vmatprep.subr.mxu0 0.0
      %1996 = vmatpush2.msra.mxu0 %v1902
      %1997 = vmatprep.subr.mxu0 0.0
      %1998 = vmatpush2.msra.mxu0 %v1901
      %1999 = vmatprep.subr.mxu0 0.0
      %2000 = vmatpush2.msra.mxu0 %v1900
      %2001 = vmatprep.subr.mxu0 0.0
      %2002 = vmatpush2.msra.mxu0 %v1899
      %2003 = vmatprep.subr.mxu0 0.0
      %2004 = vmatpush2.msra.mxu0 %v1898
      %2005 = vmatprep.subr.mxu0 0.0
      %2006 = vmatpush2.msra.mxu0 %v1897
      %2007 = vmatprep.subr.mxu0 0.0
      %2008 = vmatpush2.msra.mxu0 %v1896
      %2009 = vmatprep.subr.mxu0 0.0
      %2010 = vmatpush2.msra.mxu0 %v1895
      %2011 = vmatprep.subr.mxu0 0.0
      %2012 = vmatpush2.msra.mxu0 %v1894
      %2013 = vmatprep.mubr.f32.mxu0 %v1875
      %2014 = vmatmul.mubr.f32.gmra.mxu0 %v1874
      %v2015 = vpop.f32.mrf.mxu0
      %v2016 = vadd.f32 %v1947, %v2015
      %v2017 = vpop.f32.mrf.mxu0
      %2018 = vdwg.mxu0
      %2019 = vmatprep.subr.mxu0 0.0
      %2020 = vmatpush1.msra.mxu0 %v1925
      %2021 = vmatprep.subr.mxu0 0.0
      %2022 = vmatpush1.msra.mxu0 %v1924
      %2023 = vmatprep.subr.mxu0 0.0
      %2024 = vmatpush1.msra.mxu0 %v1923
      %2025 = vmatprep.subr.mxu0 0.0
      %2026 = vmatpush1.msra.mxu0 %v1922
      %2027 = vmatprep.subr.mxu0 0.0
      %2028 = vmatpush1.msra.mxu0 %v1921
      %2029 = vmatprep.subr.mxu0 0.0
      %2030 = vmatpush1.msra.mxu0 %v1920
      %2031 = vmatprep.subr.mxu0 0.0
      %2032 = vmatpush1.msra.mxu0 %v1919
      %2033 = vmatprep.subr.mxu0 0.0
      %2034 = vmatpush1.msra.mxu0 %v1918
      %2035 = vmatprep.subr.mxu0 0.0
      %2036 = vmatpush1.msra.mxu0 %v1917
      %2037 = vmatprep.subr.mxu0 0.0
      %2038 = vmatpush1.msra.mxu0 %v1916
      %2039 = vmatprep.subr.mxu0 0.0
      %2040 = vmatpush1.msra.mxu0 %v1915
      %2041 = vmatprep.subr.mxu0 0.0
      %2042 = vmatpush1.msra.mxu0 %v1914
      %2043 = vmatprep.subr.mxu0 0.0
      %2044 = vmatpush1.msra.mxu0 %v1913
      %2045 = vmatprep.subr.mxu0 0.0
      %2046 = vmatpush1.msra.mxu0 %v1912
      %2047 = vmatprep.subr.mxu0 0.0
      %2048 = vmatpush1.msra.mxu0 %v1911
      %2049 = vmatprep.subr.mxu0 0.0
      %2050 = vmatpush1.msra.mxu0 %v1910
      %2051 = vmatprep.subr.mxu0 0.0
      %2052 = vmatpush2.msra.mxu0 %v1941
      %2053 = vmatprep.subr.mxu0 0.0
      %2054 = vmatpush2.msra.mxu0 %v1940
      %2055 = vmatprep.subr.mxu0 0.0
      %2056 = vmatpush2.msra.mxu0 %v1939
      %2057 = vmatprep.subr.mxu0 0.0
      %2058 = vmatpush2.msra.mxu0 %v1938
      %2059 = vmatprep.subr.mxu0 0.0
      %2060 = vmatpush2.msra.mxu0 %v1937
      %2061 = vmatprep.subr.mxu0 0.0
      %2062 = vmatpush2.msra.mxu0 %v1936
      %2063 = vmatprep.subr.mxu0 0.0
      %2064 = vmatpush2.msra.mxu0 %v1935
      %2065 = vmatprep.subr.mxu0 0.0
      %2066 = vmatpush2.msra.mxu0 %v1934
      %2067 = vmatprep.subr.mxu0 0.0
      %2068 = vmatpush2.msra.mxu0 %v1933
      %2069 = vmatprep.subr.mxu0 0.0
      %2070 = vmatpush2.msra.mxu0 %v1932
      %2071 = vmatprep.subr.mxu0 0.0
      %2072 = vmatpush2.msra.mxu0 %v1931
      %2073 = vmatprep.subr.mxu0 0.0
      %2074 = vmatpush2.msra.mxu0 %v1930
      %2075 = vmatprep.subr.mxu0 0.0
      %2076 = vmatpush2.msra.mxu0 %v1929
      %2077 = vmatprep.subr.mxu0 0.0
      %2078 = vmatpush2.msra.mxu0 %v1928
      %2079 = vmatprep.subr.mxu0 0.0
      %2080 = vmatpush2.msra.mxu0 %v1927
      %2081 = vmatprep.subr.mxu0 0.0
      %2082 = vmatpush2.msra.mxu0 %v1926
      %2083 = vmatprep.mubr.f32.mxu0 %v1877
      %2084 = vmatmul.mubr.f32.gmra.mxu0 %v1876
      %v2085 = vpop.f32.mrf.mxu0
      %v2086 = vadd.f32 %v2016, %v2085
      %v2087 = vpop.f32.mrf.mxu0
      %2088 = vdwg.mxu0
      %v2089 = vadd.f32 %v1645, %v2086
      %v2090 = vld [vmem:[%s14] sm:$0x1]
      %v2091 = vld [vmem:[%s15] sm:$0x1]
      %2092 = vadd.xlane.f32.xlu0 %v2089
      %v2093 = vpop.xlane.xlu0 %2092
      %v2094 = vmul.f32 %v2093, %v1622
      %v2095 = vsub.f32 %v2089, %v2094
      %v2096 = vmul.f32 %v2095, %v2095
      %2097 = vadd.xlane.f32.xlu0 %v2096
      %v2098 = vpop.xlane.xlu0 %2097
      %v2099 = vmul.f32 %v2098, %v1622
      %v2100 = vadd.f32 %v2099, 1e-05
      %v2101 = vrsqrt.pop %v2100
      %v2102 = vmul.f32 %v2095, %v2101
      %v2104 = vlaneseq
      %v2105 = vshrl.u32 %v2104, 7
      %v2106 = vsub.s32 0, %v2105
      %v2107 = vrot.slane %v2090, %v2106
      %v2109 = vmul.f32 %v2102, %v2107
      %v2111 = vlaneseq
      %v2112 = vshrl.u32 %v2111, 7
      %v2113 = vsub.s32 0, %v2112
      %v2114 = vrot.slane %v2091, %v2113
      %v2116 = vadd.f32 %v2109, %v2114
      %v2117 = vrot.slane %v2116, 4
      %v2118 = vadd.f32 %v2116, %v2117
      %v2119 = vrot.slane %v2118, 2
      %v2120 = vadd.f32 %v2118, %v2119
      %v2121 = vrot.slane %v2120, 1
      %v2122 = vadd.f32 %v2120, %v2121
      %v2123 = vrcp.pop 8.0
      %v2124 = vmul.f32 %v2122, %v2123
      %2125 = vst [vmem:[%s638] sm:$0x1] %v2124
      %p2126 = scmp.lt.s32.totalorder %s41, 5
      %s2127 = scalar_select %p2126, %s41, 5
      %p2128 = scmp.lt.s32.totalorder %s42, 1
      %s2129 = scalar_select %p2128, %s42, 1
      %s2130 = smul.addr %s2127, 2
      %s2131 = sadd.s32 %s2129, %s2130
      %s2132 = scalar_lea.vmem %s16, %s2131
      // Predicated region
      $region77: #{fwd_full.4} parent=75 // pred_check
        %p2133 = pneg %p399
      $region78: #{fwd_full.4} parent=75 // pred_check_branch
        %2135 = sbr.rel (%p2133) target = $region80
      $region79: #{fwd_full.4} parent=75 // pred_region
        _
      $region80: #{fwd_full.4} parent=75 // pred_fallthru
        _
    $region76: #{fwd_full.4} parent=5 // pred_fallthru
      _
    %p2136 = scmp.le.s32.totalorder 2, %s32
    // Predicated region
    $region81: #{fwd_full.4} parent=5 // pred_check
      %p2137 = pneg %p2136
    $region82: #{fwd_full.4} parent=5 // pred_check_branch
      %2139 = sbr.rel (%p2137) target = $region84
    $region83: #{fwd_full.4} parent=5 // pred_region
      %s2140 = ssub.s32 %s32, 2
      // Predicated region
      $region85: #{fwd_full.4} parent=83 // pred_check
        %p2141 = pneg %p405
      $region86: #{fwd_full.4} parent=83 // pred_check_branch
        %2143 = sbr.rel (%p2141) target = $region88
      $region87: #{fwd_full.4} parent=83 // pred_region
        %p2144 = scmp.lt.s32.totalorder %s43, 5
        %s2145 = scalar_select %p2144, %s43, 5
        %p2146 = scmp.lt.s32.totalorder %s44, 1
        %s2147 = scalar_select %p2146, %s44, 1
        %s2148 = smul.addr %s2145, 2
        %s2149 = sadd.s32 %s2147, %s2148
        %s2150 = scalar_lea.vmem %s16, %s2149
      $region88: #{fwd_full.4} parent=83 // pred_fallthru
        _
    $region84: #{fwd_full.4} parent=5 // pred_fallthru
      _
  $region6: #{fwd_full.4} parent=0 // loop_footer
    %s36 = sadd.s32 1, %s32
  $region7: #{fwd_full.4} parent=0 // loop_footer_branch
    %31 = sbr.rel target = $region3
  $region8: #{fwd_full.4} parent=0 // loop_exit
    _

</llo_original>
